<compile_context>
chip_gen: v7x
topology: tpu7x:2x2x1
jax: 0.10.0
libtpu: 0.0.40
codegen_flags: <defaults>
</compile_context>

<pallas_src>
import functools

import jax
import jax.numpy as jnp
from jax.experimental import pallas as pl
from jax.experimental.pallas import tpu as pltpu


def _head_kernel(x_ref, w_ref, b_ref, o_ref, *, eps, inv_c, with_sigmoid):
    # x_ref: (1, C, TM)  channel-major token tile (C on sublanes, tokens on lanes)
    # w_ref: (F, C)      fused (final ∘ reverse_window ∘ expand) weight, gamma folded,
    #                    already in the matmul dtype (bf16 by default)
    # b_ref: (F, 1)      fused bias (LN beta + final bias folded in), f32
    # o_ref: (1, F, TM)  channel-major output tile
    x = x_ref[0].astype(jnp.float32)                        # (C, TM)

    # Single-pass LayerNorm statistics over the channel (sublane) axis.
    m = jnp.sum(x, axis=0, keepdims=True) * inv_c           # (1, TM)
    m2 = jnp.sum(x * x, axis=0, keepdims=True) * inv_c      # (1, TM)
    var = jnp.maximum(m2 - m * m, 0.0)                      # guard f32 cancellation
    xn = (x - m) * jax.lax.rsqrt(var + eps)                 # (C, TM)

    w = w_ref[...]                                          # grid-invariant, no per-step cast
    if w.dtype != jnp.float32:
        xn = xn.astype(w.dtype)                             # bf16 MXU operands, f32 acc

    acc = jnp.dot(w, xn, preferred_element_type=jnp.float32)    # (F, TM) on MXU
    acc = acc + b_ref[...]                                       # bias along sublanes
    if with_sigmoid:
        # Numerically-stable sigmoid: exp argument is always <= 0, so no inf shows up.
        pos = acc >= 0.0
        z = jnp.exp(jnp.where(pos, -acc, acc))                  # EUP exp, z in (0, 1]
        acc = jnp.where(pos, 1.0, z) / (1.0 + z)
    o_ref[0] = acc.astype(o_ref.dtype)


def _fuse_params(gamma, beta, w_expand, w_final, b_final, patch_size):
    """Fold LN affine + expand Linear + final Linear into one (F, C) weight / (F,1) bias.

    w_expand: (P*P*C, C) torch layout (rows ordered (s1, s2, c)); w_final: (O, C);
    b_final: (O,). Fused feature index f = o*P*P + s1*P + s2.
    """
    P = patch_size
    C = gamma.shape[0]
    O = w_final.shape[0]
    we = w_expand.reshape(P, P, C, C).astype(jnp.float32)        # (s1, s2, c, k)
    # M[o, s1, s2, k] = sum_c w_final[o, c] * we[s1, s2, c, k]
    M = jnp.einsum("oc,pqck->opqk", w_final.astype(jnp.float32), we)
    w_fused = (M * gamma.astype(jnp.float32)[None, None, None, :]).reshape(O * P * P, C)
    b_fused = (b_final.astype(jnp.float32)[:, None, None]
               + jnp.einsum("opqk,k->opq", M, beta.astype(jnp.float32)))
    return w_fused, b_fused.reshape(O * P * P, 1)


def _vmem_capacity_bytes():
    """Per-TensorCore VMEM capacity; conservative fallback is v7x's 64 MiB."""
    try:
        return int(pltpu.get_tpu_info().vmem_capacity_bytes)
    except Exception:
        return 64 * 1024 * 1024


def _pick_token_tile(hw, batch, C, F, in_itemsize, out_itemsize, vmem_cap):
    """Largest lane-dense token tile whose double-buffered activation footprint fits
    ~1/4 of physical VMEM (headroom for weights + Mosaic scratch).  No divisibility
    requirement: the token count is padded up to a multiple of the tile and the junk
    tokens are cropped after the pixel-shuffle."""
    budget = vmem_cap // 4
    per_token = 2 * (C * in_itemsize + F * out_itemsize)     # double-buffered in+out
    tm = 128
    for cand in (4096, 2048, 1024, 512, 256, 128):
        if cand * per_token <= budget:
            tm = cand
            break
    # Never over-pad tiny inputs (keeps tm a multiple of 128).
    tm = min(tm, ((hw + 127) // 128) * 128)
    # Guarantee >= 2 grid steps so both v7x TensorCores get work (both axes "parallel").
    while batch * ((hw + tm - 1) // tm) < 2 and tm > 128:
        tm = max(128, ((tm // 2) // 128) * 128)
    return tm


def head_forward(x, gamma, beta, w_expand, w_final, b_final, *,
                 patch_size, img_size, eps=1e-5, with_sigmoid=True,
                 matmul_dtype=jnp.bfloat16, out_dtype=None):
    """x: (B, C, H, W) float32.  gamma/beta: (C,).  w_expand: (P*P*C, C) torch layout.
    w_final: (out_chans, C), b_final: (out_chans,).  Returns (B, out_chans, H1, W1).

    matmul_dtype=None gives exact f32 MXU operands; out_dtype=jnp.bfloat16 halves the
    output HBM traffic if downstream tolerates it."""
    B, C, H, W = x.shape
    P = patch_size
    O = w_final.shape[0]
    F = O * P * P
    out_dtype = x.dtype if out_dtype is None else out_dtype

    w_fused, b_fused = _fuse_params(gamma, beta, w_expand, w_final, b_final, P)
    if matmul_dtype is not None:
        w_fused = w_fused.astype(matmul_dtype)      # cast once on host, not per grid step

    # Tokens stay in NCHW order: (B, C, H*W) is a free reshape (no transpose, no copy).
    HW = H * W
    in_itemsize = x.dtype.itemsize
    out_itemsize = jnp.dtype(out_dtype).itemsize
    vmem_cap = _vmem_capacity_bytes()
    tm = _pick_token_tile(HW, B, C, F, in_itemsize, out_itemsize, vmem_cap)
    hw_pad = ((HW + tm - 1) // tm) * tm
    x_flat = x.reshape(B, C, HW)
    if hw_pad != HW:
        # Zero tokens are harmless: LN(0)=0 (var clamped), output = sigmoid(bias),
        # and they are cropped after the pixel-shuffle.
        x_flat = jnp.pad(x_flat, ((0, 0), (0, 0), (0, hw_pad - HW)))
    grid = (B, hw_pad // tm)

    # Generation-aware VMEM limit (v7x has only 64 MiB per TensorCore).
    act_bytes = 2 * tm * (C * in_itemsize + F * out_itemsize)
    w_bytes = w_fused.dtype.itemsize * F * max(C, 128)
    b_bytes = 4 * F * 128                                   # (F,1) block lane-padded
    vmem_limit = int(min(max(2 * (act_bytes + w_bytes + b_bytes), 32 * 1024 * 1024),
                         int(0.75 * vmem_cap)))

    n_tokens = B * hw_pad
    cost = pl.CostEstimate(
        flops=2 * n_tokens * C * F,
        transcendentals=n_tokens * F if with_sigmoid else 0,
        bytes_accessed=(n_tokens * C * in_itemsize
                        + F * C * w_fused.dtype.itemsize + F * 4
                        + n_tokens * F * out_itemsize),
    )

    kernel = functools.partial(
        _head_kernel, eps=float(eps), inv_c=1.0 / C, with_sigmoid=with_sigmoid)

    def run(single_buffer_params):
        w_kw = {}
        if single_buffer_params and hasattr(pl, "Buffered"):
            # Grid-invariant weight/bias are never re-fetched; single-buffer them to
            # halve their VMEM footprint (matters most on v7x's 64 MiB VMEM).
            w_kw = dict(pipeline_mode=pl.Buffered(1))
        return pl.pallas_call(
            kernel,
            out_shape=jax.ShapeDtypeStruct((B, F, hw_pad), out_dtype),
            grid_spec=pltpu.PrefetchScalarGridSpec(
                num_scalar_prefetch=0,
                grid=grid,
                in_specs=[
                    pl.BlockSpec((1, C, tm), lambda b, j: (b, 0, j)),
                    pl.BlockSpec((F, C), lambda b, j: (0, 0), **w_kw),
                    pl.BlockSpec((F, 1), lambda b, j: (0, 0), **w_kw),
                ],
                out_specs=pl.BlockSpec((1, F, tm), lambda b, j: (b, 0, j)),
            ),
            compiler_params=pltpu.CompilerParams(
                dimension_semantics=("parallel", "parallel"),
                vmem_limit_bytes=vmem_limit),
            cost_estimate=cost,
        )(x_flat, w_fused, b_fused)

    try:
        out_cm = run(True)
    except Exception:
        # Fallback for jax versions where pipeline_mode=pl.Buffered(1) is rejected.
        out_cm = run(False)

    # Semantically-required pixel-shuffle back to NCHW:
    # (B, O*P*P, H*W) -> (B, O, H*P, W*P).  Cropping commutes with the per-pixel
    # final Linear+Sigmoid, so cropping after the kernel is exact.
    # TODO(synk): the s2 lane interleave of this shuffle is left in XLA.
    out = out_cm[:, :, :HW].reshape(B, O, P, P, H, W)
    out = jnp.transpose(out, (0, 1, 4, 2, 5, 3)).reshape(B, O, H * P, W * P)
    H1, W1 = img_size
    return out[:, :, :H1, :W1]


def _reference(x, gamma, beta, w_expand, w_final, b_final, *,
               patch_size, img_size, eps=1e-5, with_sigmoid=True):
    """Pure-JAX mirror of the PyTorch Head.forward (unfused)."""
    B, C, H, W = x.shape
    P = patch_size
    O = w_final.shape[0]
    t = jnp.transpose(x, (0, 2, 3, 1))                              # b h w c
    mean = jnp.mean(t, axis=-1, keepdims=True)
    var = jnp.mean((t - mean) ** 2, axis=-1, keepdims=True)
    tn = (t - mean) / jnp.sqrt(var + eps) * gamma + beta
    y = jnp.einsum("bhwk,fk->bhwf", tn, w_expand)                   # (B,H,W,P*P*C)
    # reverse_window: 'b h w (s1 s2 c) -> b c (h s1) (w s2)'
    y = y.reshape(B, H, W, P, P, C)
    y = jnp.transpose(y, (0, 5, 1, 3, 2, 4)).reshape(B, C, H * P, W * P)
    H1, W1 = img_size
    y = y[:, :, :H1, :W1]
    z = jnp.transpose(y, (0, 2, 3, 1))                              # b h w c
    z = jnp.einsum("bhwc,oc->bhwo", z, w_final) + b_final
    if with_sigmoid:
        z = 1.0 / (1.0 + jnp.exp(-z))
    return jnp.transpose(z, (0, 3, 1, 2))


if __name__ == "__main__":
    def make_case(key, B, C, H, W, P, O):
        ks = jax.random.split(key, 6)
        x = jax.random.normal(ks[0], (B, C, H, W), dtype=jnp.float32)
        gamma = 1.0 + 0.1 * jax.random.normal(ks[1], (C,), dtype=jnp.float32)
        beta = 0.1 * jax.random.normal(ks[2], (C,), dtype=jnp.float32)
        # PatchExpanding.expand: nn.Linear(C, P*P*C, bias=False) -> weight (P*P*C, C)
        w_expand = jax.random.normal(ks[3], (P * P * C, C), dtype=jnp.float32) * (C ** -0.5)
        # Head.final[0]: nn.Linear(C, O) -> weight (O, C), bias (O,)
        w_final = jax.random.normal(ks[4], (O, C), dtype=jnp.float32) * (C ** -0.5)
        b_final = 0.1 * jax.random.normal(ks[5], (O,), dtype=jnp.float32)
        return x, gamma, beta, w_expand, w_final, b_final

    cases = [
        # (B, C,  H,  W, P,  O, img_size)
        (2, 32, 16, 16, 4, 32, (61, 63)),   # crop path, token count divides the tile
        (1, 32, 12, 12, 2,  8, (23, 22)),   # ragged token count (padding) + B=1
    ]

    key = jax.random.PRNGKey(0)
    for (B, C, H, W, P, O, img_size) in cases:
        key, sub = jax.random.split(key)
        args = make_case(sub, B, C, H, W, P, O)

        ref = _reference(*args, patch_size=P, img_size=img_size)

        # Exact-parity path (f32 MXU operands).
        out_f32 = jax.block_until_ready(
            head_forward(*args, patch_size=P, img_size=img_size, matmul_dtype=None))
        assert out_f32.shape == (B, O, img_size[0], img_size[1]), out_f32.shape
        assert jnp.allclose(out_f32, ref, atol=1e-4, rtol=1e-4), "f32 path mismatch"

        # Default fast path (bf16 MXU operands, f32 accumulation).
        out_bf = jax.block_until_ready(
            head_forward(*args, patch_size=P, img_size=img_size))
        assert out_bf.shape == (B, O, img_size[0], img_size[1]), out_bf.shape
        assert jnp.allclose(out_bf, ref, atol=2e-2), "bf16 path mismatch"

    print("KERNEL_OK")
</pallas_src>

<mosaic_0001>
module attributes {stable_mosaic.version = 11 : i64} {
  func.func @_head_kernel(%arg0: i32, %arg1: i32, %arg2: memref<1x32x256xf32, #tpu.memory_space<vmem>>, %arg3: memref<512x32xf32, #tpu.memory_space<vmem>>, %arg4: memref<512x1xf32, #tpu.memory_space<vmem>>, %arg5: memref<1x512x256xf32, #tpu.memory_space<vmem>>) attributes {dimension_semantics = [#tpu.dimension_semantics<parallel>, #tpu.dimension_semantics<parallel>], iteration_bounds = array<i64: 2, 1>, scalar_prefetch = 0 : i64, scratch_operands = 0 : i64, tpu.core_type = #tpu.core_type<tc>, window_params = [{transform_indices = @transform_0, window_bounds = array<i64: 1, 32, 256>}, {pipeline_mode = #tpu.pipeline_mode<synchronous>, transform_indices = @transform_1, window_bounds = array<i64: 512, 32>}, {pipeline_mode = #tpu.pipeline_mode<synchronous>, transform_indices = @transform_2, window_bounds = array<i64: 512, 1>}, {transform_indices = @transform_3, window_bounds = array<i64: 1, 512, 256>}]} {
    %c0 = arith.constant 0 : index
    %c0_0 = arith.constant 0 : index
    %c0_1 = arith.constant 0 : index
    %0 = vector.load %arg2[%c0, %c0_0, %c0_1] : memref<1x32x256xf32, #tpu.memory_space<vmem>>, vector<1x32x256xf32>
    %1 = vector.shape_cast %0 : vector<1x32x256xf32> to vector<32x256xf32>
    %cst = arith.constant dense<0.000000e+00> : vector<256xf32>
    %2 = vector.multi_reduction <add>, %1, %cst [0] : vector<32x256xf32> to vector<256xf32>
    %3 = vector.shape_cast %2 : vector<256xf32> to vector<1x256xf32>
    %cst_2 = arith.constant 3.125000e-02 : f32
    %4 = vector.broadcast %cst_2 : f32 to vector<1x256xf32>
    %5 = arith.mulf %3, %4 : vector<1x256xf32>
    %6 = arith.mulf %1, %1 : vector<32x256xf32>
    %cst_3 = arith.constant dense<0.000000e+00> : vector<256xf32>
    %7 = vector.multi_reduction <add>, %6, %cst_3 [0] : vector<32x256xf32> to vector<256xf32>
    %8 = vector.shape_cast %7 : vector<256xf32> to vector<1x256xf32>
    %cst_4 = arith.constant 3.125000e-02 : f32
    %9 = vector.broadcast %cst_4 : f32 to vector<1x256xf32>
    %10 = arith.mulf %8, %9 : vector<1x256xf32>
    %11 = arith.mulf %5, %5 : vector<1x256xf32>
    %12 = arith.subf %10, %11 : vector<1x256xf32>
    %cst_5 = arith.constant 0.000000e+00 : f32
    %13 = vector.broadcast %cst_5 : f32 to vector<1x256xf32>
    %14 = arith.maximumf %12, %13 : vector<1x256xf32>
    %15 = vector.broadcast %5 : vector<1x256xf32> to vector<32x256xf32>
    %16 = arith.subf %1, %15 : vector<32x256xf32>
    %cst_6 = arith.constant 9.99999974E-6 : f32
    %17 = vector.broadcast %cst_6 : f32 to vector<1x256xf32>
    %18 = arith.addf %14, %17 : vector<1x256xf32>
    %19 = math.rsqrt %18 : vector<1x256xf32>
    %20 = vector.broadcast %19 : vector<1x256xf32> to vector<32x256xf32>
    %21 = arith.mulf %16, %20 : vector<32x256xf32>
    %c0_7 = arith.constant 0 : index
    %c0_8 = arith.constant 0 : index
    %22 = vector.load %arg3[%c0_7, %c0_8] : memref<512x32xf32, #tpu.memory_space<vmem>>, vector<512x32xf32>
    %cst_9 = arith.constant dense<0.000000e+00> : vector<512x256xf32>
    %23 = tpu.matmul %22, %21, %cst_9 {dimension_numbers = #tpu.dot_dimension_numbers<[1], [0], [0], [1], [0, 0, 1, 1], [], []>} : vector<512x32xf32>, vector<32x256xf32>, vector<512x256xf32> -> vector<512x256xf32>
    %c0_10 = arith.constant 0 : index
    %c0_11 = arith.constant 0 : index
    %24 = vector.load %arg4[%c0_10, %c0_11] : memref<512x1xf32, #tpu.memory_space<vmem>>, vector<512x1xf32>
    %25 = vector.broadcast %24 : vector<512x1xf32> to vector<512x256xf32>
    %26 = arith.addf %23, %25 : vector<512x256xf32>
    %cst_12 = arith.constant 0.000000e+00 : f32
    %27 = vector.broadcast %cst_12 : f32 to vector<512x256xf32>
    %28 = arith.cmpf oge, %26, %27 : vector<512x256xf32>
    %cst_13 = arith.constant 0.000000e+00 : f32
    %29 = vector.broadcast %cst_13 : f32 to vector<512x256xf32>
    %30 = arith.subf %29, %26 : vector<512x256xf32>
    %31 = arith.select %28, %30, %26 : vector<512x256xi1>, vector<512x256xf32>
    %32 = math.exp %31 : vector<512x256xf32>
    %cst_14 = arith.constant 1.000000e+00 : f32
    %33 = vector.broadcast %cst_14 : f32 to vector<512x256xf32>
    %34 = arith.select %28, %33, %32 : vector<512x256xi1>, vector<512x256xf32>
    %cst_15 = arith.constant 1.000000e+00 : f32
    %35 = vector.broadcast %cst_15 : f32 to vector<512x256xf32>
    %36 = arith.addf %35, %32 : vector<512x256xf32>
    %37 = arith.divf %34, %36 : vector<512x256xf32>
    %c0_16 = arith.constant 0 : index
    %c0_17 = arith.constant 0 : index
    %c0_18 = arith.constant 0 : index
    %38 = vector.load %arg5[%c0_16, %c0_17, %c0_18] : memref<1x512x256xf32, #tpu.memory_space<vmem>>, vector<1x512x256xf32>
    %39 = vector.shape_cast %38 : vector<1x512x256xf32> to vector<512x256xf32>
    %40 = vector.shape_cast %37 : vector<512x256xf32> to vector<1x512x256xf32>
    tpu.vector_store %arg5[%c0_16, %c0_17, %c0_18], %40 {strides = array<i32>} : memref<1x512x256xf32, #tpu.memory_space<vmem>>, vector<1x512x256xf32>,
    return
  }
  func.func @transform_0(%arg0: i32, %arg1: i32) -> (i32, i32, i32) {
    %c0_i32 = arith.constant 0 : i32
    %c0_i32_0 = arith.constant 0 : i32
    return %arg0, %c0_i32, %arg1 : i32, i32, i32
  }
  func.func @transform_1(%arg0: i32, %arg1: i32) -> (i32, i32) {
    %c0_i32 = arith.constant 0 : i32
    %c0_i32_0 = arith.constant 0 : i32
    %c0_i32_1 = arith.constant 0 : i32
    return %c0_i32, %c0_i32_0 : i32, i32
  }
  func.func @transform_2(%arg0: i32, %arg1: i32) -> (i32, i32) {
    %c0_i32 = arith.constant 0 : i32
    %c0_i32_0 = arith.constant 0 : i32
    %c0_i32_1 = arith.constant 0 : i32
    return %c0_i32, %c0_i32_0 : i32, i32
  }
  func.func @transform_3(%arg0: i32, %arg1: i32) -> (i32, i32, i32) {
    %c0_i32 = arith.constant 0 : i32
    %c0_i32_0 = arith.constant 0 : i32
    return %arg0, %c0_i32, %arg1 : i32, i32, i32
  }
}

module attributes {stable_mosaic.version = 11 : i64} {
  func.func @_head_kernel(%arg0: i32, %arg1: i32, %arg2: memref<1x32x256xf32, #tpu.memory_space<vmem>>, %arg3: memref<512x32xf32, #tpu.memory_space<vmem>>, %arg4: memref<512x1xf32, #tpu.memory_space<vmem>>, %arg5: memref<1x512x256xf32, #tpu.memory_space<vmem>>) attributes {dimension_semantics = [#tpu.dimension_semantics<parallel>, #tpu.dimension_semantics<parallel>], iteration_bounds = array<i64: 2, 1>, scalar_prefetch = 0 : i64, scratch_operands = 0 : i64, tpu.core_type = #tpu.core_type<tc>, window_params = [{transform_indices = @transform_0, window_bounds = array<i64: 1, 32, 256>}, {pipeline_mode = #tpu.pipeline_mode<synchronous>, transform_indices = @transform_1, window_bounds = array<i64: 512, 32>}, {pipeline_mode = #tpu.pipeline_mode<synchronous>, transform_indices = @transform_2, window_bounds = array<i64: 512, 1>}, {transform_indices = @transform_3, window_bounds = array<i64: 1, 512, 256>}]} {
    %c0 = arith.constant 0 : index
    %c0_0 = arith.constant 0 : index
    %c0_1 = arith.constant 0 : index
    %0 = vector.load %arg2[%c0, %c0_0, %c0_1] : memref<1x32x256xf32, #tpu.memory_space<vmem>>, vector<1x32x256xf32>
    %1 = vector.shape_cast %0 : vector<1x32x256xf32> to vector<32x256xf32>
    %cst = arith.constant dense<0.000000e+00> : vector<256xf32>
    %2 = vector.multi_reduction <add>, %1, %cst [0] : vector<32x256xf32> to vector<256xf32>
    %3 = vector.shape_cast %2 : vector<256xf32> to vector<1x256xf32>
    %cst_2 = arith.constant 3.125000e-02 : f32
    %4 = vector.broadcast %cst_2 : f32 to vector<1x256xf32>
    %5 = arith.mulf %3, %4 : vector<1x256xf32>
    %6 = arith.mulf %1, %1 : vector<32x256xf32>
    %cst_3 = arith.constant dense<0.000000e+00> : vector<256xf32>
    %7 = vector.multi_reduction <add>, %6, %cst_3 [0] : vector<32x256xf32> to vector<256xf32>
    %8 = vector.shape_cast %7 : vector<256xf32> to vector<1x256xf32>
    %cst_4 = arith.constant 3.125000e-02 : f32
    %9 = vector.broadcast %cst_4 : f32 to vector<1x256xf32>
    %10 = arith.mulf %8, %9 : vector<1x256xf32>
    %11 = arith.mulf %5, %5 : vector<1x256xf32>
    %12 = arith.subf %10, %11 : vector<1x256xf32>
    %cst_5 = arith.constant 0.000000e+00 : f32
    %13 = vector.broadcast %cst_5 : f32 to vector<1x256xf32>
    %14 = arith.maximumf %12, %13 : vector<1x256xf32>
    %15 = vector.broadcast %5 : vector<1x256xf32> to vector<32x256xf32>
    %16 = arith.subf %1, %15 : vector<32x256xf32>
    %cst_6 = arith.constant 9.99999974E-6 : f32
    %17 = vector.broadcast %cst_6 : f32 to vector<1x256xf32>
    %18 = arith.addf %14, %17 : vector<1x256xf32>
    %19 = math.rsqrt %18 : vector<1x256xf32>
    %20 = vector.broadcast %19 : vector<1x256xf32> to vector<32x256xf32>
    %21 = arith.mulf %16, %20 : vector<32x256xf32>
    %c0_7 = arith.constant 0 : index
    %c0_8 = arith.constant 0 : index
    %22 = vector.load %arg3[%c0_7, %c0_8] : memref<512x32xf32, #tpu.memory_space<vmem>>, vector<512x32xf32>
    %cst_9 = arith.constant dense<0.000000e+00> : vector<512x256xf32>
    %23 = tpu.matmul %22, %21, %cst_9 {dimension_numbers = #tpu.dot_dimension_numbers<[1], [0], [0], [1], [0, 0, 1, 1], [], []>} : vector<512x32xf32>, vector<32x256xf32>, vector<512x256xf32> -> vector<512x256xf32>
    %c0_10 = arith.constant 0 : index
    %c0_11 = arith.constant 0 : index
    %24 = vector.load %arg4[%c0_10, %c0_11] : memref<512x1xf32, #tpu.memory_space<vmem>>, vector<512x1xf32>
    %25 = vector.broadcast %24 : vector<512x1xf32> to vector<512x256xf32>
    %26 = arith.addf %23, %25 : vector<512x256xf32>
    %cst_12 = arith.constant 0.000000e+00 : f32
    %27 = vector.broadcast %cst_12 : f32 to vector<512x256xf32>
    %28 = arith.cmpf oge, %26, %27 : vector<512x256xf32>
    %cst_13 = arith.constant 0.000000e+00 : f32
    %29 = vector.broadcast %cst_13 : f32 to vector<512x256xf32>
    %30 = arith.subf %29, %26 : vector<512x256xf32>
    %31 = arith.select %28, %30, %26 : vector<512x256xi1>, vector<512x256xf32>
    %32 = math.exp %31 : vector<512x256xf32>
    %cst_14 = arith.constant 1.000000e+00 : f32
    %33 = vector.broadcast %cst_14 : f32 to vector<512x256xf32>
    %34 = arith.select %28, %33, %32 : vector<512x256xi1>, vector<512x256xf32>
    %cst_15 = arith.constant 1.000000e+00 : f32
    %35 = vector.broadcast %cst_15 : f32 to vector<512x256xf32>
    %36 = arith.addf %35, %32 : vector<512x256xf32>
    %37 = arith.divf %34, %36 : vector<512x256xf32>
    %c0_16 = arith.constant 0 : index
    %c0_17 = arith.constant 0 : index
    %c0_18 = arith.constant 0 : index
    %38 = vector.load %arg5[%c0_16, %c0_17, %c0_18] : memref<1x512x256xf32, #tpu.memory_space<vmem>>, vector<1x512x256xf32>
    %39 = vector.shape_cast %38 : vector<1x512x256xf32> to vector<512x256xf32>
    %40 = vector.shape_cast %37 : vector<512x256xf32> to vector<1x512x256xf32>
    tpu.vector_store %arg5[%c0_16, %c0_17, %c0_18], %40 {strides = array<i32>} : memref<1x512x256xf32, #tpu.memory_space<vmem>>, vector<1x512x256xf32>,
    return
  }
  func.func @transform_0(%arg0: i32, %arg1: i32) -> (i32, i32, i32) {
    %c0_i32 = arith.constant 0 : i32
    %c0_i32_0 = arith.constant 0 : i32
    return %arg0, %c0_i32, %arg1 : i32, i32, i32
  }
  func.func @transform_1(%arg0: i32, %arg1: i32) -> (i32, i32) {
    %c0_i32 = arith.constant 0 : i32
    %c0_i32_0 = arith.constant 0 : i32
    %c0_i32_1 = arith.constant 0 : i32
    return %c0_i32, %c0_i32_0 : i32, i32
  }
  func.func @transform_2(%arg0: i32, %arg1: i32) -> (i32, i32) {
    %c0_i32 = arith.constant 0 : i32
    %c0_i32_0 = arith.constant 0 : i32
    %c0_i32_1 = arith.constant 0 : i32
    return %c0_i32, %c0_i32_0 : i32, i32
  }
  func.func @transform_3(%arg0: i32, %arg1: i32) -> (i32, i32, i32) {
    %c0_i32 = arith.constant 0 : i32
    %c0_i32_0 = arith.constant 0 : i32
    return %arg0, %c0_i32, %arg1 : i32, i32, i32
  }
}

</mosaic_0001>

<llo_original>
// kernel: tpu_custom_call.1
$region0: #{tpu_custom_call.1}
  #allocation0 [shape = 'u32[]', space=smem, size = 0x4, offset = 0x4, fixed_abs, tag = 'smem constant byte address 0x4 - core index']
  #allocation1 [shape = 'u32[144,128]{1,0:T(1,128)}', space=vmem, size = 0x12000, scoped, tag = 'internal scratch']
  %s0 = inlined_call_operand.vmem [shape: f32[2,32,256], index: 0, kind: input, shape index: {}]
  %s1 = inlined_call_operand.vmem [shape: f32[512,32], index: 1, kind: input, shape index: {}]
  %s2 = inlined_call_operand.vmem [shape: f32[512,1], index: 2, kind: input, shape index: {}]
  %s3 = inlined_call_operand.hbm [shape: f32[2,512,256], index: 3, kind: output, shape index: {}]
  %s4 = sld [smem:[#allocation0]]
  $region45: #{tpu_custom_call.1} parent=0
    _
  %s6 = ssub.s32 1, %s4
  %s7 = scalar_select 0, %s6, %s4
  $region1: #{tpu_custom_call.1} parent=0
    #allocation2 [shape = 'u8[1048576]{0}', space=vmem, size = 0x100000, scoped, tag = 'output window, operand 0']
    #allocation3 [shape = 's32[2]{0}', space=sflag, size = 0x8, scoped, tag = 'scoped memory for tpu_custom_call.1']
    %8 = vsyncpa [#allocation3], 0
    %s9 = scalar_lea.sflag [#allocation3], 1
    %10 = vsyncpa %s9, 0
    loop: start=0, step=1, limit=4
    $region2: #{tpu_custom_call.1} parent=1 // loop_pre_header
      _
    $region3: #{tpu_custom_call.1} parent=1 // loop_header
      %s12 = sphi 0, %s16
      %p13 = scmp.ge.s32.totalorder %s12, 4
      %s19 = sphi 0, %s31
      %s20 = sphi 0, %s27
      %s21 = sphi 0, %s19
      %s22 = sphi 0, %s20
      %s23 = sphi 0, %s21
      %s24 = sphi 0, %s22
      %s36 = sphi 0, %s38
      %s39 = sphi 0, %s36
      %s40 = sphi 0, %s39
      %s56 = sphi 0, %s40
      %s60 = sphi 0, %s60
      %s62 = sphi 0, %s60
      %s63 = sphi 0, %s62
      %s77 = sphi 0, %s63
      %s81 = sphi 0, %s81
      %s83 = sphi 0, %s81
      %s84 = sphi 0, %s83
      %s98 = sphi 0, %s84
      %s106 = sphi 0, %s108
      %s109 = sphi 0, %s106
      %s110 = sphi 0, %s109
      %s126 = sphi 0, %s110
    $region4: #{tpu_custom_call.1} parent=1 // loop_header_branch
      %15 = sbr.rel (%p13) target = $region8
    $region5: #{tpu_custom_call.1} parent=1 // loop_body
      %s17 = ssub.s32 %s12, 1
      %s18 = ssub.s32 %s12, 2
      %s25 = sadd.s32 1, %s20
      %p26 = scmp.ge.s32.totalorder %s25, 1
      %s27 = scalar_select %p26, 0, %s25
      %s28 = sadd.s32 1, %s19
      %s29 = scalar_select %p26, %s28, %s19
      %p30 = scmp.ge.s32.totalorder %s29, 2
      %s31 = scalar_select %p30, 0, %s29
      %s32 = ssub.s32 %s19, %s31
      %s33 = ssub.s32 %s20, %s27
      %s34 = sor.u32 %s32, %s33
      %p35 = scmp.eq.s32.totalorder %s34, 0
      %s37 = sadd.s32 %s36, 1
      %s38 = scalar_select %p35, %s36, %s37
      %p41 = pneg %p35
      %p42 = scmp.eq.s32.totalorder %s12, 1
      %p43 = por %p41, %p42
      %p44 = scmp.ne.s32.totalorder %s36, %s39
      %p45 = scmp.eq.s32.totalorder %s12, 0
      %p46 = por %p44, %p45
      %p47 = scmp.ne.s32.totalorder %s36, %s39
      %p48 = scmp.eq.s32.totalorder %s17, 1
      %p49 = por %p47, %p48
      %p50 = scmp.ne.s32.totalorder %s39, %s40
      %p51 = scmp.eq.s32.totalorder %s17, 0
      %p52 = por %p50, %p51
      %p53 = scmp.ne.s32.totalorder %s39, %s40
      %p54 = scmp.eq.s32.totalorder %s18, 1
      %p55 = por %p53, %p54
      %p57 = scmp.ne.s32.totalorder %s40, %s56
      %p58 = scmp.eq.s32.totalorder %s18, 0
      %p59 = por %p57, %p58
      %s61 = sadd.s32 %s60, 1
      %p64 = scmp.eq.s32.totalorder %s12, 1
      %p65 = scmp.ne.s32.totalorder %s60, %s62
      %p66 = scmp.eq.s32.totalorder %s12, 0
      %p67 = por %p65, %p66
      %p68 = scmp.ne.s32.totalorder %s60, %s62
      %p69 = scmp.eq.s32.totalorder %s17, 1
      %p70 = por %p68, %p69
      %p71 = scmp.ne.s32.totalorder %s62, %s63
      %p72 = scmp.eq.s32.totalorder %s17, 0
      %p73 = por %p71, %p72
      %p74 = scmp.ne.s32.totalorder %s62, %s63
      %p75 = scmp.eq.s32.totalorder %s18, 1
      %p76 = por %p74, %p75
      %p78 = scmp.ne.s32.totalorder %s63, %s77
      %p79 = scmp.eq.s32.totalorder %s18, 0
      %p80 = por %p78, %p79
      %s82 = sadd.s32 %s81, 1
      %p85 = scmp.eq.s32.totalorder %s12, 1
      %p86 = scmp.ne.s32.totalorder %s81, %s83
      %p87 = scmp.eq.s32.totalorder %s12, 0
      %p88 = por %p86, %p87
      %p89 = scmp.ne.s32.totalorder %s81, %s83
      %p90 = scmp.eq.s32.totalorder %s17, 1
      %p91 = por %p89, %p90
      %p92 = scmp.ne.s32.totalorder %s83, %s84
      %p93 = scmp.eq.s32.totalorder %s17, 0
      %p94 = por %p92, %p93
      %p95 = scmp.ne.s32.totalorder %s83, %s84
      %p96 = scmp.eq.s32.totalorder %s18, 1
      %p97 = por %p95, %p96
      %p99 = scmp.ne.s32.totalorder %s84, %s98
      %p100 = scmp.eq.s32.totalorder %s18, 0
      %p101 = por %p99, %p100
      %s102 = ssub.s32 %s19, %s31
      %s103 = ssub.s32 %s20, %s27
      %s104 = sor.u32 %s102, %s103
      %p105 = scmp.eq.s32.totalorder %s104, 0
      %s107 = sadd.s32 %s106, 1
      %s108 = scalar_select %p105, %s106, %s107
      %p111 = pneg %p105
      %p112 = scmp.eq.s32.totalorder %s12, 1
      %p113 = por %p111, %p112
      %p114 = scmp.ne.s32.totalorder %s106, %s109
      %p115 = scmp.eq.s32.totalorder %s12, 0
      %p116 = por %p114, %p115
      %p117 = scmp.ne.s32.totalorder %s106, %s109
      %p118 = scmp.eq.s32.totalorder %s17, 1
      %p119 = por %p117, %p118
      %p120 = scmp.ne.s32.totalorder %s109, %s110
      %p121 = scmp.eq.s32.totalorder %s17, 0
      %p122 = por %p120, %p121
      %p123 = scmp.ne.s32.totalorder %s109, %s110
      %p124 = scmp.eq.s32.totalorder %s18, 1
      %p125 = por %p123, %p124
      %p127 = scmp.ne.s32.totalorder %s110, %s126
      %p128 = scmp.eq.s32.totalorder %s18, 0
      %p129 = por %p127, %p128
      %p130 = scmp.le.s32.totalorder 1, %s12
      %p131 = scmp.lt.s32.totalorder %s12, 3
      %p132 = pnand %p130, %p131
      %p133 = pneg %p132
      // Predicated region
      $region9: #{tpu_custom_call.1} parent=5 // pred_check
        _
      $region10: #{tpu_custom_call.1} parent=5 // pred_check_branch
        %135 = sbr.rel (%p132) target = $region12
      $region11: #{tpu_custom_call.1} parent=5 // pred_region
        %s136 = ssub.s32 %s12, 1
        // Predicated region
        $region13: #{tpu_custom_call.1} parent=11 // pred_check
          %p137 = pneg %p73
        $region14: #{tpu_custom_call.1} parent=11 // pred_check_branch
          %139 = sbr.rel (%p137) target = $region16
        $region15: #{tpu_custom_call.1} parent=11 // pred_region
          _
        $region16: #{tpu_custom_call.1} parent=11 // pred_fallthru
          _
        // Predicated region
        $region17: #{tpu_custom_call.1} parent=11 // pred_check
          %p140 = pneg %p94
        $region18: #{tpu_custom_call.1} parent=11 // pred_check_branch
          %142 = sbr.rel (%p140) target = $region20
        $region19: #{tpu_custom_call.1} parent=11 // pred_region
          _
        $region20: #{tpu_custom_call.1} parent=11 // pred_fallthru
          _
      $region12: #{tpu_custom_call.1} parent=5 // pred_fallthru
        _
      %p143 = scmp.lt.s32.totalorder %s12, 2
      // Predicated region
      $region21: #{tpu_custom_call.1} parent=5 // pred_check
        %p144 = pneg %p143
      $region22: #{tpu_custom_call.1} parent=5 // pred_check_branch
        %146 = sbr.rel (%p144) target = $region24
      $region23: #{tpu_custom_call.1} parent=5 // pred_region
        // Predicated region
        $region25: #{tpu_custom_call.1} parent=23 // pred_check
          %p147 = pneg %p46
        $region26: #{tpu_custom_call.1} parent=23 // pred_check_branch
          %149 = sbr.rel (%p147) target = $region28
        $region27: #{tpu_custom_call.1} parent=23 // pred_region
          %s150 = smul.u32 2, %s20
          %p151 = scmp.lt.s32.totalorder %s19, 1
          %s152 = scalar_select %p151, %s19, 1
          %p153 = scmp.lt.s32.totalorder %s150, 1
          %s154 = scalar_select %p153, %s150, 1
          %s155 = smul.addr %s152, 8
          %s156 = sadd.s32 %s154, %s155
          %s157 = smul.addr %s156, 8
          %s158 = scalar_lea.vmem %s0, %s157
          %s159 = smul.u32 2, %s20
        $region28: #{tpu_custom_call.1} parent=23 // pred_fallthru
          _
      $region24: #{tpu_custom_call.1} parent=5 // pred_fallthru
        _
      %p160 = scmp.le.s32.totalorder 1, %s12
      %p161 = scmp.lt.s32.totalorder %s12, 3
      %p162 = pnand %p160, %p161
      %p163 = pneg %p162
      // Predicated region
      $region29: #{tpu_custom_call.1} parent=5 // pred_check
        _
      $region30: #{tpu_custom_call.1} parent=5 // pred_check_branch
        %165 = sbr.rel (%p162) target = $region32
      $region31: #{tpu_custom_call.1} parent=5 // pred_region
        %s166 = ssub.s32 %s12, 1
        %s167 = smul.u32 2, %s22
        %p168 = scmp.lt.s32.totalorder %s21, 1
        %s169 = scalar_select %p168, %s21, 1
        %p170 = scmp.lt.s32.totalorder %s167, 1
        %s171 = scalar_select %p170, %s167, 1
        %s172 = smul.addr %s169, 8
        %s173 = sadd.s32 %s171, %s172
        %s174 = smul.addr %s173, 8
        %s175 = scalar_lea.vmem %s0, %s174
        %p176 = pneg %p52
        %p177 = pneg %p49
        %p178 = pneg %p73
        %p179 = pneg %p70
        %p180 = pneg %p94
        %p181 = pneg %p91
        %p182 = pneg %p122
        %p183 = pneg %p119
        %s184 = sand.u32 %s109, 1
        %s185 = scalar_lea.sflag [#allocation3], %s184
        %s186 = sand.u32 %s109, 1
        %s187 = smul.addr %s186, 1024
        %s188 = scalar_lea.vmem [#allocation2], %s187
        %s189 = smul.u32 2, %s22
        %p190 = scmp.lt.s32.totalorder %s21, 1
        %s191 = scalar_select %p190, %s21, 1
        %p192 = scmp.lt.s32.totalorder %s189, 1
        %s193 = scalar_select %p192, %s189, 1
        %s194 = smul.addr %s191, 8
        %s195 = sadd.s32 %s193, %s194
        %s196 = smul.addr %s195, 8
        %s197 = scalar_lea.vmem %s0, %s196
        %s198 = smul.u32 2, %s22
        %s199 = smul.u32 2, %s22
        %v200 = vld [vmem:[%s197] sm:$0xff]
        %v201 = vld [vmem:[%s197 + $0x8] sm:$0xff]
        %v202 = vld [vmem:[%s197 + $0x10] sm:$0xff]
        %v203 = vld [vmem:[%s197 + $0x18] sm:$0xff]
        %v204 = vld [vmem:[%s197 + $0x20] sm:$0xff]
        %v205 = vld [vmem:[%s197 + $0x28] sm:$0xff]
        %v206 = vld [vmem:[%s197 + $0x30] sm:$0xff]
        %v207 = vld [vmem:[%s197 + $0x38] sm:$0xff]
        %v208 = vadd.f32 %v200, %v202
        %v209 = vadd.f32 %v208, %v204
        %v210 = vadd.f32 %v209, %v206
        %v211 = vrot.slane %v210, 4
        %v212 = vadd.f32 %v210, %v211
        %v213 = vrot.slane %v212, 2
        %v214 = vadd.f32 %v212, %v213
        %v215 = vrot.slane %v214, 1
        %v216 = vadd.f32 %v214, %v215
        %v217 = vadd.f32 %v201, %v203
        %v218 = vadd.f32 %v217, %v205
        %v219 = vadd.f32 %v218, %v207
        %v220 = vrot.slane %v219, 4
        %v221 = vadd.f32 %v219, %v220
        %v222 = vrot.slane %v221, 2
        %v223 = vadd.f32 %v221, %v222
        %v224 = vrot.slane %v223, 1
        %v225 = vadd.f32 %v223, %v224
        %v226 = vmul.f32 %v216, 0.03125
        %v227 = vmul.f32 %v225, 0.03125
        %v228 = vmul.f32 %v200, %v200
        %v229 = vmul.f32 %v201, %v201
        %v230 = vmul.f32 %v202, %v202
        %v231 = vmul.f32 %v203, %v203
        %v232 = vmul.f32 %v204, %v204
        %v233 = vmul.f32 %v205, %v205
        %v234 = vmul.f32 %v206, %v206
        %v235 = vmul.f32 %v207, %v207
        %v236 = vadd.f32 %v228, %v230
        %v237 = vadd.f32 %v236, %v232
        %v238 = vadd.f32 %v237, %v234
        %v239 = vrot.slane %v238, 4
        %v240 = vadd.f32 %v238, %v239
        %v241 = vrot.slane %v240, 2
        %v242 = vadd.f32 %v240, %v241
        %v243 = vrot.slane %v242, 1
        %v244 = vadd.f32 %v242, %v243
        %v245 = vadd.f32 %v229, %v231
        %v246 = vadd.f32 %v245, %v233
        %v247 = vadd.f32 %v246, %v235
        %v248 = vrot.slane %v247, 4
        %v249 = vadd.f32 %v247, %v248
        %v250 = vrot.slane %v249, 2
        %v251 = vadd.f32 %v249, %v250
        %v252 = vrot.slane %v251, 1
        %v253 = vadd.f32 %v251, %v252
        %v254 = vmul.f32 %v244, 0.03125
        %v255 = vmul.f32 %v253, 0.03125
        %v256 = vmul.f32 %v226, %v226
        %v257 = vmul.f32 %v227, %v227
        %v258 = vsub.f32 %v254, %v256
        %v259 = vsub.f32 %v255, %v257
        %v260 = vmax.f32 %v258, 0.0
        %v261 = vmax.f32 %v259, 0.0
        %v262 = vsub.f32 %v200, %v226
        %v263 = vsub.f32 %v201, %v227
        %v264 = vsub.f32 %v202, %v226
        %v265 = vsub.f32 %v203, %v227
        %v266 = vsub.f32 %v204, %v226
        %v267 = vsub.f32 %v205, %v227
        %v268 = vsub.f32 %v206, %v226
        %v269 = vsub.f32 %v207, %v227
        %v270 = vadd.f32 %v260, 1e-05
        %v271 = vadd.f32 %v261, 1e-05
        %v272 = vrsqrt.pop %v270
        %v273 = vrsqrt.pop %v271
        %v274 = vmul.f32 %v262, %v272
        %v275 = vmul.f32 %v263, %v273
        %v276 = vmul.f32 %v264, %v272
        %v277 = vmul.f32 %v265, %v273
        %v278 = vmul.f32 %v266, %v272
        %v279 = vmul.f32 %v267, %v273
        %v280 = vmul.f32 %v268, %v272
        %v281 = vmul.f32 %v269, %v273
        %v282 = vld [vmem:[%s1] sm:$0xff]
        %v283 = vld [vmem:[%s1 + $0x8] sm:$0xff]
        %v284 = vld [vmem:[%s1 + $0x10] sm:$0xff]
        %v285 = vld [vmem:[%s1 + $0x18] sm:$0xff]
        %v286 = vld [vmem:[%s1 + $0x20] sm:$0xff]
        %v287 = vld [vmem:[%s1 + $0x28] sm:$0xff]
        %v288 = vld [vmem:[%s1 + $0x30] sm:$0xff]
        %v289 = vld [vmem:[%s1 + $0x38] sm:$0xff]
        %v290 = vld [vmem:[%s1 + $0x40] sm:$0xff]
        %v291 = vld [vmem:[%s1 + $0x48] sm:$0xff]
        %v292 = vld [vmem:[%s1 + $0x50] sm:$0xff]
        %v293 = vld [vmem:[%s1 + $0x58] sm:$0xff]
        %v294 = vld [vmem:[%s1 + $0x60] sm:$0xff]
        %v295 = vld [vmem:[%s1 + $0x68] sm:$0xff]
        %v296 = vld [vmem:[%s1 + $0x70] sm:$0xff]
        %v297 = vld [vmem:[%s1 + $0x78] sm:$0xff]
        %v298 = vld [vmem:[%s1 + $0x80] sm:$0xff]
        %v299 = vld [vmem:[%s1 + $0x88] sm:$0xff]
        %v300 = vld [vmem:[%s1 + $0x90] sm:$0xff]
        %v301 = vld [vmem:[%s1 + $0x98] sm:$0xff]
        %v302 = vld [vmem:[%s1 + $0xa0] sm:$0xff]
        %v303 = vld [vmem:[%s1 + $0xa8] sm:$0xff]
        %v304 = vld [vmem:[%s1 + $0xb0] sm:$0xff]
        %v305 = vld [vmem:[%s1 + $0xb8] sm:$0xff]
        %v306 = vld [vmem:[%s1 + $0xc0] sm:$0xff]
        %v307 = vld [vmem:[%s1 + $0xc8] sm:$0xff]
        %v308 = vld [vmem:[%s1 + $0xd0] sm:$0xff]
        %v309 = vld [vmem:[%s1 + $0xd8] sm:$0xff]
        %v310 = vld [vmem:[%s1 + $0xe0] sm:$0xff]
        %v311 = vld [vmem:[%s1 + $0xe8] sm:$0xff]
        %v312 = vld [vmem:[%s1 + $0xf0] sm:$0xff]
        %v313 = vld [vmem:[%s1 + $0xf8] sm:$0xff]
        %v314 = vld [vmem:[%s1 + $0x100] sm:$0xff]
        %v315 = vld [vmem:[%s1 + $0x108] sm:$0xff]
        %v316 = vld [vmem:[%s1 + $0x110] sm:$0xff]
        %v317 = vld [vmem:[%s1 + $0x118] sm:$0xff]
        %v318 = vld [vmem:[%s1 + $0x120] sm:$0xff]
        %v319 = vld [vmem:[%s1 + $0x128] sm:$0xff]
        %v320 = vld [vmem:[%s1 + $0x130] sm:$0xff]
        %v321 = vld [vmem:[%s1 + $0x138] sm:$0xff]
        %v322 = vld [vmem:[%s1 + $0x140] sm:$0xff]
        %v323 = vld [vmem:[%s1 + $0x148] sm:$0xff]
        %v324 = vld [vmem:[%s1 + $0x150] sm:$0xff]
        %v325 = vld [vmem:[%s1 + $0x158] sm:$0xff]
        %v326 = vld [vmem:[%s1 + $0x160] sm:$0xff]
        %v327 = vld [vmem:[%s1 + $0x168] sm:$0xff]
        %v328 = vld [vmem:[%s1 + $0x170] sm:$0xff]
        %v329 = vld [vmem:[%s1 + $0x178] sm:$0xff]
        %v330 = vld [vmem:[%s1 + $0x180] sm:$0xff]
        %v331 = vld [vmem:[%s1 + $0x188] sm:$0xff]
        %v332 = vld [vmem:[%s1 + $0x190] sm:$0xff]
        %v333 = vld [vmem:[%s1 + $0x198] sm:$0xff]
        %v334 = vld [vmem:[%s1 + $0x1a0] sm:$0xff]
        %v335 = vld [vmem:[%s1 + $0x1a8] sm:$0xff]
        %v336 = vld [vmem:[%s1 + $0x1b0] sm:$0xff]
        %v337 = vld [vmem:[%s1 + $0x1b8] sm:$0xff]
        %v338 = vld [vmem:[%s1 + $0x1c0] sm:$0xff]
        %v339 = vld [vmem:[%s1 + $0x1c8] sm:$0xff]
        %v340 = vld [vmem:[%s1 + $0x1d0] sm:$0xff]
        %v341 = vld [vmem:[%s1 + $0x1d8] sm:$0xff]
        %v342 = vld [vmem:[%s1 + $0x1e0] sm:$0xff]
        %v343 = vld [vmem:[%s1 + $0x1e8] sm:$0xff]
        %v344 = vld [vmem:[%s1 + $0x1f0] sm:$0xff]
        %v345 = vld [vmem:[%s1 + $0x1f8] sm:$0xff]
        %v346 = vld [vmem:[%s2] sm:$0xff]
        %v347 = vld [vmem:[%s2 + $0x8] sm:$0xff]
        %v348 = vld [vmem:[%s2 + $0x10] sm:$0xff]
        %v349 = vld [vmem:[%s2 + $0x18] sm:$0xff]
        %v350 = vld [vmem:[%s2 + $0x20] sm:$0xff]
        %v351 = vld [vmem:[%s2 + $0x28] sm:$0xff]
        %v352 = vld [vmem:[%s2 + $0x30] sm:$0xff]
        %v353 = vld [vmem:[%s2 + $0x38] sm:$0xff]
        %v354 = vld [vmem:[%s2 + $0x40] sm:$0xff]
        %v355 = vld [vmem:[%s2 + $0x48] sm:$0xff]
        %v356 = vld [vmem:[%s2 + $0x50] sm:$0xff]
        %v357 = vld [vmem:[%s2 + $0x58] sm:$0xff]
        %v358 = vld [vmem:[%s2 + $0x60] sm:$0xff]
        %v359 = vld [vmem:[%s2 + $0x68] sm:$0xff]
        %v360 = vld [vmem:[%s2 + $0x70] sm:$0xff]
        %v361 = vld [vmem:[%s2 + $0x78] sm:$0xff]
        %v362 = vld [vmem:[%s2 + $0x80] sm:$0xff]
        %v363 = vld [vmem:[%s2 + $0x88] sm:$0xff]
        %v364 = vld [vmem:[%s2 + $0x90] sm:$0xff]
        %v365 = vld [vmem:[%s2 + $0x98] sm:$0xff]
        %v366 = vld [vmem:[%s2 + $0xa0] sm:$0xff]
        %v367 = vld [vmem:[%s2 + $0xa8] sm:$0xff]
        %v368 = vld [vmem:[%s2 + $0xb0] sm:$0xff]
        %v369 = vld [vmem:[%s2 + $0xb8] sm:$0xff]
        %v370 = vld [vmem:[%s2 + $0xc0] sm:$0xff]
        %v371 = vld [vmem:[%s2 + $0xc8] sm:$0xff]
        %v372 = vld [vmem:[%s2 + $0xd0] sm:$0xff]
        %v373 = vld [vmem:[%s2 + $0xd8] sm:$0xff]
        %v374 = vld [vmem:[%s2 + $0xe0] sm:$0xff]
        %v375 = vld [vmem:[%s2 + $0xe8] sm:$0xff]
        %v376 = vld [vmem:[%s2 + $0xf0] sm:$0xff]
        %v377 = vld [vmem:[%s2 + $0xf8] sm:$0xff]
        %v378 = vld [vmem:[%s2 + $0x100] sm:$0xff]
        %v379 = vld [vmem:[%s2 + $0x108] sm:$0xff]
        %v380 = vld [vmem:[%s2 + $0x110] sm:$0xff]
        %v381 = vld [vmem:[%s2 + $0x118] sm:$0xff]
        %v382 = vld [vmem:[%s2 + $0x120] sm:$0xff]
        %v383 = vld [vmem:[%s2 + $0x128] sm:$0xff]
        %v384 = vld [vmem:[%s2 + $0x130] sm:$0xff]
        %v385 = vld [vmem:[%s2 + $0x138] sm:$0xff]
        %v386 = vld [vmem:[%s2 + $0x140] sm:$0xff]
        %v387 = vld [vmem:[%s2 + $0x148] sm:$0xff]
        %v388 = vld [vmem:[%s2 + $0x150] sm:$0xff]
        %v389 = vld [vmem:[%s2 + $0x158] sm:$0xff]
        %v390 = vld [vmem:[%s2 + $0x160] sm:$0xff]
        %v391 = vld [vmem:[%s2 + $0x168] sm:$0xff]
        %v392 = vld [vmem:[%s2 + $0x170] sm:$0xff]
        %v393 = vld [vmem:[%s2 + $0x178] sm:$0xff]
        %v394 = vld [vmem:[%s2 + $0x180] sm:$0xff]
        %v395 = vld [vmem:[%s2 + $0x188] sm:$0xff]
        %v396 = vld [vmem:[%s2 + $0x190] sm:$0xff]
        %v397 = vld [vmem:[%s2 + $0x198] sm:$0xff]
        %v398 = vld [vmem:[%s2 + $0x1a0] sm:$0xff]
        %v399 = vld [vmem:[%s2 + $0x1a8] sm:$0xff]
        %v400 = vld [vmem:[%s2 + $0x1b0] sm:$0xff]
        %v401 = vld [vmem:[%s2 + $0x1b8] sm:$0xff]
        %v402 = vld [vmem:[%s2 + $0x1c0] sm:$0xff]
        %v403 = vld [vmem:[%s2 + $0x1c8] sm:$0xff]
        %v404 = vld [vmem:[%s2 + $0x1d0] sm:$0xff]
        %v405 = vld [vmem:[%s2 + $0x1d8] sm:$0xff]
        %v406 = vld [vmem:[%s2 + $0x1e0] sm:$0xff]
        %v407 = vld [vmem:[%s2 + $0x1e8] sm:$0xff]
        %v408 = vld [vmem:[%s2 + $0x1f0] sm:$0xff]
        %v409 = vld [vmem:[%s2 + $0x1f8] sm:$0xff]
        %411 = vset.pattern.permute.xlu0 0
        %412 = vperm.xlu0 %411, %v346
        %v413 = vpop.permute.xlu0 %412
        %416 = vset.pattern.permute.xlu0 0
        %417 = vperm.xlu0 %416, %v347
        %v418 = vpop.permute.xlu0 %417
        %421 = vset.pattern.permute.xlu0 0
        %422 = vperm.xlu0 %421, %v348
        %v423 = vpop.permute.xlu0 %422
        %426 = vset.pattern.permute.xlu0 0
        %427 = vperm.xlu0 %426, %v349
        %v428 = vpop.permute.xlu0 %427
        %431 = vset.pattern.permute.xlu0 0
        %432 = vperm.xlu0 %431, %v350
        %v433 = vpop.permute.xlu0 %432
        %436 = vset.pattern.permute.xlu0 0
        %437 = vperm.xlu0 %436, %v351
        %v438 = vpop.permute.xlu0 %437
        %441 = vset.pattern.permute.xlu0 0
        %442 = vperm.xlu0 %441, %v352
        %v443 = vpop.permute.xlu0 %442
        %446 = vset.pattern.permute.xlu0 0
        %447 = vperm.xlu0 %446, %v353
        %v448 = vpop.permute.xlu0 %447
        %451 = vset.pattern.permute.xlu0 0
        %452 = vperm.xlu0 %451, %v354
        %v453 = vpop.permute.xlu0 %452
        %456 = vset.pattern.permute.xlu0 0
        %457 = vperm.xlu0 %456, %v355
        %v458 = vpop.permute.xlu0 %457
        %461 = vset.pattern.permute.xlu0 0
        %462 = vperm.xlu0 %461, %v356
        %v463 = vpop.permute.xlu0 %462
        %466 = vset.pattern.permute.xlu0 0
        %467 = vperm.xlu0 %466, %v357
        %v468 = vpop.permute.xlu0 %467
        %471 = vset.pattern.permute.xlu0 0
        %472 = vperm.xlu0 %471, %v358
        %v473 = vpop.permute.xlu0 %472
        %476 = vset.pattern.permute.xlu0 0
        %477 = vperm.xlu0 %476, %v359
        %v478 = vpop.permute.xlu0 %477
        %481 = vset.pattern.permute.xlu0 0
        %482 = vperm.xlu0 %481, %v360
        %v483 = vpop.permute.xlu0 %482
        %486 = vset.pattern.permute.xlu0 0
        %487 = vperm.xlu0 %486, %v361
        %v488 = vpop.permute.xlu0 %487
        %491 = vset.pattern.permute.xlu0 0
        %492 = vperm.xlu0 %491, %v362
        %v493 = vpop.permute.xlu0 %492
        %496 = vset.pattern.permute.xlu0 0
        %497 = vperm.xlu0 %496, %v363
        %v498 = vpop.permute.xlu0 %497
        %501 = vset.pattern.permute.xlu0 0
        %502 = vperm.xlu0 %501, %v364
        %v503 = vpop.permute.xlu0 %502
        %506 = vset.pattern.permute.xlu0 0
        %507 = vperm.xlu0 %506, %v365
        %v508 = vpop.permute.xlu0 %507
        %511 = vset.pattern.permute.xlu0 0
        %512 = vperm.xlu0 %511, %v366
        %v513 = vpop.permute.xlu0 %512
        %516 = vset.pattern.permute.xlu0 0
        %517 = vperm.xlu0 %516, %v367
        %v518 = vpop.permute.xlu0 %517
        %521 = vset.pattern.permute.xlu0 0
        %522 = vperm.xlu0 %521, %v368
        %v523 = vpop.permute.xlu0 %522
        %526 = vset.pattern.permute.xlu0 0
        %527 = vperm.xlu0 %526, %v369
        %v528 = vpop.permute.xlu0 %527
        %531 = vset.pattern.permute.xlu0 0
        %532 = vperm.xlu0 %531, %v370
        %v533 = vpop.permute.xlu0 %532
        %536 = vset.pattern.permute.xlu0 0
        %537 = vperm.xlu0 %536, %v371
        %v538 = vpop.permute.xlu0 %537
        %541 = vset.pattern.permute.xlu0 0
        %542 = vperm.xlu0 %541, %v372
        %v543 = vpop.permute.xlu0 %542
        %546 = vset.pattern.permute.xlu0 0
        %547 = vperm.xlu0 %546, %v373
        %v548 = vpop.permute.xlu0 %547
        %551 = vset.pattern.permute.xlu0 0
        %552 = vperm.xlu0 %551, %v374
        %v553 = vpop.permute.xlu0 %552
        %556 = vset.pattern.permute.xlu0 0
        %557 = vperm.xlu0 %556, %v375
        %v558 = vpop.permute.xlu0 %557
        %561 = vset.pattern.permute.xlu0 0
        %562 = vperm.xlu0 %561, %v376
        %v563 = vpop.permute.xlu0 %562
        %566 = vset.pattern.permute.xlu0 0
        %567 = vperm.xlu0 %566, %v377
        %v568 = vpop.permute.xlu0 %567
        %571 = vset.pattern.permute.xlu0 0
        %572 = vperm.xlu0 %571, %v378
        %v573 = vpop.permute.xlu0 %572
        %576 = vset.pattern.permute.xlu0 0
        %577 = vperm.xlu0 %576, %v379
        %v578 = vpop.permute.xlu0 %577
        %581 = vset.pattern.permute.xlu0 0
        %582 = vperm.xlu0 %581, %v380
        %v583 = vpop.permute.xlu0 %582
        %586 = vset.pattern.permute.xlu0 0
        %587 = vperm.xlu0 %586, %v381
        %v588 = vpop.permute.xlu0 %587
        %591 = vset.pattern.permute.xlu0 0
        %592 = vperm.xlu0 %591, %v382
        %v593 = vpop.permute.xlu0 %592
        %596 = vset.pattern.permute.xlu0 0
        %597 = vperm.xlu0 %596, %v383
        %v598 = vpop.permute.xlu0 %597
        %601 = vset.pattern.permute.xlu0 0
        %602 = vperm.xlu0 %601, %v384
        %v603 = vpop.permute.xlu0 %602
        %606 = vset.pattern.permute.xlu0 0
        %607 = vperm.xlu0 %606, %v385
        %v608 = vpop.permute.xlu0 %607
        %611 = vset.pattern.permute.xlu0 0
        %612 = vperm.xlu0 %611, %v386
        %v613 = vpop.permute.xlu0 %612
        %616 = vset.pattern.permute.xlu0 0
        %617 = vperm.xlu0 %616, %v387
        %v618 = vpop.permute.xlu0 %617
        %621 = vset.pattern.permute.xlu0 0
        %622 = vperm.xlu0 %621, %v388
        %v623 = vpop.permute.xlu0 %622
        %626 = vset.pattern.permute.xlu0 0
        %627 = vperm.xlu0 %626, %v389
        %v628 = vpop.permute.xlu0 %627
        %631 = vset.pattern.permute.xlu0 0
        %632 = vperm.xlu0 %631, %v390
        %v633 = vpop.permute.xlu0 %632
        %636 = vset.pattern.permute.xlu0 0
        %637 = vperm.xlu0 %636, %v391
        %v638 = vpop.permute.xlu0 %637
        %641 = vset.pattern.permute.xlu0 0
        %642 = vperm.xlu0 %641, %v392
        %v643 = vpop.permute.xlu0 %642
        %646 = vset.pattern.permute.xlu0 0
        %647 = vperm.xlu0 %646, %v393
        %v648 = vpop.permute.xlu0 %647
        %651 = vset.pattern.permute.xlu0 0
        %652 = vperm.xlu0 %651, %v394
        %v653 = vpop.permute.xlu0 %652
        %656 = vset.pattern.permute.xlu0 0
        %657 = vperm.xlu0 %656, %v395
        %v658 = vpop.permute.xlu0 %657
        %661 = vset.pattern.permute.xlu0 0
        %662 = vperm.xlu0 %661, %v396
        %v663 = vpop.permute.xlu0 %662
        %666 = vset.pattern.permute.xlu0 0
        %667 = vperm.xlu0 %666, %v397
        %v668 = vpop.permute.xlu0 %667
        %671 = vset.pattern.permute.xlu0 0
        %672 = vperm.xlu0 %671, %v398
        %v673 = vpop.permute.xlu0 %672
        %676 = vset.pattern.permute.xlu0 0
        %677 = vperm.xlu0 %676, %v399
        %v678 = vpop.permute.xlu0 %677
        %681 = vset.pattern.permute.xlu0 0
        %682 = vperm.xlu0 %681, %v400
        %v683 = vpop.permute.xlu0 %682
        %686 = vset.pattern.permute.xlu0 0
        %687 = vperm.xlu0 %686, %v401
        %v688 = vpop.permute.xlu0 %687
        %691 = vset.pattern.permute.xlu0 0
        %692 = vperm.xlu0 %691, %v402
        %v693 = vpop.permute.xlu0 %692
        %696 = vset.pattern.permute.xlu0 0
        %697 = vperm.xlu0 %696, %v403
        %v698 = vpop.permute.xlu0 %697
        %701 = vset.pattern.permute.xlu0 0
        %702 = vperm.xlu0 %701, %v404
        %v703 = vpop.permute.xlu0 %702
        %706 = vset.pattern.permute.xlu0 0
        %707 = vperm.xlu0 %706, %v405
        %v708 = vpop.permute.xlu0 %707
        %711 = vset.pattern.permute.xlu0 0
        %712 = vperm.xlu0 %711, %v406
        %v713 = vpop.permute.xlu0 %712
        %716 = vset.pattern.permute.xlu0 0
        %717 = vperm.xlu0 %716, %v407
        %v718 = vpop.permute.xlu0 %717
        %721 = vset.pattern.permute.xlu0 0
        %722 = vperm.xlu0 %721, %v408
        %v723 = vpop.permute.xlu0 %722
        %726 = vset.pattern.permute.xlu0 0
        %727 = vperm.xlu0 %726, %v409
        %v728 = vpop.permute.xlu0 %727
        %vm730 = vcmask 261120
        %v732 = vsel %vm730, %v282, 0
        %v735 = vsel %vm730, %v283, 0
        %v738 = vsel %vm730, %v284, 0
        %v741 = vsel %vm730, %v285, 0
        %v744 = vsel %vm730, %v286, 0
        %v747 = vsel %vm730, %v287, 0
        %v750 = vsel %vm730, %v288, 0
        %v753 = vsel %vm730, %v289, 0
        %v756 = vsel %vm730, %v290, 0
        %v759 = vsel %vm730, %v291, 0
        %v762 = vsel %vm730, %v292, 0
        %v765 = vsel %vm730, %v293, 0
        %v768 = vsel %vm730, %v294, 0
        %v771 = vsel %vm730, %v295, 0
        %v774 = vsel %vm730, %v296, 0
        %v777 = vsel %vm730, %v297, 0
        %v780 = vsel %vm730, %v298, 0
        %v783 = vsel %vm730, %v299, 0
        %v786 = vsel %vm730, %v300, 0
        %v789 = vsel %vm730, %v301, 0
        %v792 = vsel %vm730, %v302, 0
        %v795 = vsel %vm730, %v303, 0
        %v798 = vsel %vm730, %v304, 0
        %v801 = vsel %vm730, %v305, 0
        %v804 = vsel %vm730, %v306, 0
        %v807 = vsel %vm730, %v307, 0
        %v810 = vsel %vm730, %v308, 0
        %v813 = vsel %vm730, %v309, 0
        %v816 = vsel %vm730, %v310, 0
        %v819 = vsel %vm730, %v311, 0
        %v822 = vsel %vm730, %v312, 0
        %v825 = vsel %vm730, %v313, 0
        %v828 = vsel %vm730, %v314, 0
        %v831 = vsel %vm730, %v315, 0
        %v834 = vsel %vm730, %v316, 0
        %v837 = vsel %vm730, %v317, 0
        %v840 = vsel %vm730, %v318, 0
        %v843 = vsel %vm730, %v319, 0
        %v846 = vsel %vm730, %v320, 0
        %v849 = vsel %vm730, %v321, 0
        %v852 = vsel %vm730, %v322, 0
        %v855 = vsel %vm730, %v323, 0
        %v858 = vsel %vm730, %v324, 0
        %v861 = vsel %vm730, %v325, 0
        %v864 = vsel %vm730, %v326, 0
        %v867 = vsel %vm730, %v327, 0
        %v870 = vsel %vm730, %v328, 0
        %v873 = vsel %vm730, %v329, 0
        %v876 = vsel %vm730, %v330, 0
        %v879 = vsel %vm730, %v331, 0
        %v882 = vsel %vm730, %v332, 0
        %v885 = vsel %vm730, %v333, 0
        %v888 = vsel %vm730, %v334, 0
        %v891 = vsel %vm730, %v335, 0
        %v894 = vsel %vm730, %v336, 0
        %v897 = vsel %vm730, %v337, 0
        %v900 = vsel %vm730, %v338, 0
        %v903 = vsel %vm730, %v339, 0
        %v906 = vsel %vm730, %v340, 0
        %v909 = vsel %vm730, %v341, 0
        %v912 = vsel %vm730, %v342, 0
        %v915 = vsel %vm730, %v343, 0
        %v918 = vsel %vm730, %v344, 0
        %v921 = vsel %vm730, %v345, 0
        %923 = vmatprep.subr.mxu0 %v275
        %924 = vmatpush1.msra.mxu0 %v274
        %925 = vmatprep.subr.mxu0 %v277
        %926 = vmatpush1.msra.mxu0 %v276
        %927 = vmatprep.subr.mxu0 %v279
        %928 = vmatpush1.msra.mxu0 %v278
        %929 = vmatprep.subr.mxu0 %v281
        %930 = vmatpush1.msra.mxu0 %v280
        %931 = vmatprep.subr.mxu0 0.0
        %932 = vmatpush1.msra.mxu0 0.0
        %933 = vmatprep.subr.mxu0 0.0
        %934 = vmatpush1.msra.mxu0 0.0
        %935 = vmatprep.subr.mxu0 0.0
        %936 = vmatpush1.msra.mxu0 0.0
        %937 = vmatprep.subr.mxu0 0.0
        %938 = vmatpush1.msra.mxu0 0.0
        %939 = vmatprep.subr.mxu0 0.0
        %940 = vmatpush1.msra.mxu0 0.0
        %941 = vmatprep.subr.mxu0 0.0
        %942 = vmatpush1.msra.mxu0 0.0
        %943 = vmatprep.subr.mxu0 0.0
        %944 = vmatpush1.msra.mxu0 0.0
        %945 = vmatprep.subr.mxu0 0.0
        %946 = vmatpush1.msra.mxu0 0.0
        %947 = vmatprep.subr.mxu0 0.0
        %948 = vmatpush1.msra.mxu0 0.0
        %949 = vmatprep.subr.mxu0 0.0
        %950 = vmatpush1.msra.mxu0 0.0
        %951 = vmatprep.subr.mxu0 0.0
        %952 = vmatpush1.msra.mxu0 0.0
        %953 = vmatprep.subr.mxu0 0.0
        %954 = vmatpush1.msra.mxu0 0.0
        %955 = vmatprep.subr.mxu0 0.0
        %956 = vmatpush1.msra.mxu0 0.0
        %957 = vmatprep.subr.mxu0 0.0
        %958 = vmatpush1.msra.mxu0 0.0
        %959 = vmatprep.subr.mxu0 0.0
        %960 = vmatpush1.msra.mxu0 0.0
        %961 = vmatprep.subr.mxu0 0.0
        %962 = vmatpush1.msra.mxu0 0.0
        %963 = vmatprep.subr.mxu0 0.0
        %964 = vmatpush1.msra.mxu0 0.0
        %965 = vmatprep.subr.mxu0 0.0
        %966 = vmatpush1.msra.mxu0 0.0
        %967 = vmatprep.subr.mxu0 0.0
        %968 = vmatpush1.msra.mxu0 0.0
        %969 = vmatprep.subr.mxu0 0.0
        %970 = vmatpush1.msra.mxu0 0.0
        %971 = vmatprep.subr.mxu0 0.0
        %972 = vmatpush1.msra.mxu0 0.0
        %973 = vmatprep.subr.mxu0 0.0
        %974 = vmatpush1.msra.mxu0 0.0
        %975 = vmatprep.subr.mxu0 0.0
        %976 = vmatpush1.msra.mxu0 0.0
        %977 = vmatprep.subr.mxu0 0.0
        %978 = vmatpush1.msra.mxu0 0.0
        %979 = vmatprep.subr.mxu0 0.0
        %980 = vmatpush1.msra.mxu0 0.0
        %981 = vmatprep.subr.mxu0 0.0
        %982 = vmatpush1.msra.mxu0 0.0
        %983 = vmatprep.subr.mxu0 0.0
        %984 = vmatpush1.msra.mxu0 0.0
        %985 = vmatprep.subr.mxu0 0.0
        %986 = vmatpush1.msra.mxu0 0.0
        %987 = vmatprep.mubr.f32.mxu0 0.0
        %988 = vmatmul.mubr.f32.gmra.mrb[0].mxu0 %v732
        %v989 = vpop.f32.mrb[0].mxu0
        %v990 = vadd.f32 %v413, %v989
        %v991 = vpop.f32.mrb[0].mxu0
        %v992 = vadd.f32 %v413, %v991
        %993 = vmatprep.mubr.f32.mxu0 0.0
        %994 = vmatmul.mubr.f32.gmra.mrb[0].mxu0 %v735
        %v995 = vpop.f32.mrb[0].mxu0
        %v996 = vadd.f32 %v418, %v995
        %v997 = vpop.f32.mrb[0].mxu0
        %v998 = vadd.f32 %v418, %v997
        %999 = vmatprep.mubr.f32.mxu0 0.0
        %1000 = vmatmul.mubr.f32.gmra.mrb[0].mxu0 %v738
        %v1001 = vpop.f32.mrb[0].mxu0
        %v1002 = vadd.f32 %v423, %v1001
        %v1003 = vpop.f32.mrb[0].mxu0
        %v1004 = vadd.f32 %v423, %v1003
        %1005 = vmatprep.mubr.f32.mxu0 0.0
        %1006 = vmatmul.mubr.f32.gmra.mrb[0].mxu0 %v741
        %v1007 = vpop.f32.mrb[0].mxu0
        %v1008 = vadd.f32 %v428, %v1007
        %v1009 = vpop.f32.mrb[0].mxu0
        %v1010 = vadd.f32 %v428, %v1009
        %1011 = vmatprep.mubr.f32.mxu0 0.0
        %1012 = vmatmul.mubr.f32.gmra.mrb[0].mxu0 %v744
        %v1013 = vpop.f32.mrb[0].mxu0
        %v1014 = vadd.f32 %v433, %v1013
        %v1015 = vpop.f32.mrb[0].mxu0
        %v1016 = vadd.f32 %v433, %v1015
        %1017 = vmatprep.mubr.f32.mxu0 0.0
        %1018 = vmatmul.mubr.f32.gmra.mrb[0].mxu0 %v747
        %v1019 = vpop.f32.mrb[0].mxu0
        %v1020 = vadd.f32 %v438, %v1019
        %v1021 = vpop.f32.mrb[0].mxu0
        %v1022 = vadd.f32 %v438, %v1021
        %1023 = vmatprep.mubr.f32.mxu0 0.0
        %1024 = vmatmul.mubr.f32.gmra.mrb[0].mxu0 %v750
        %v1025 = vpop.f32.mrb[0].mxu0
        %v1026 = vadd.f32 %v443, %v1025
        %v1027 = vpop.f32.mrb[0].mxu0
        %v1028 = vadd.f32 %v443, %v1027
        %1029 = vmatprep.mubr.f32.mxu0 0.0
        %1030 = vmatmul.mubr.f32.gmra.mrb[0].mxu0 %v753
        %v1031 = vpop.f32.mrb[0].mxu0
        %v1032 = vadd.f32 %v448, %v1031
        %v1033 = vpop.f32.mrb[0].mxu0
        %v1034 = vadd.f32 %v448, %v1033
        %1035 = vmatprep.mubr.f32.mxu0 0.0
        %1036 = vmatmul.mubr.f32.gmra.mrb[0].mxu0 %v756
        %v1037 = vpop.f32.mrb[0].mxu0
        %v1038 = vadd.f32 %v453, %v1037
        %v1039 = vpop.f32.mrb[0].mxu0
        %v1040 = vadd.f32 %v453, %v1039
        %1041 = vmatprep.mubr.f32.mxu0 0.0
        %1042 = vmatmul.mubr.f32.gmra.mrb[0].mxu0 %v759
        %v1043 = vpop.f32.mrb[0].mxu0
        %v1044 = vadd.f32 %v458, %v1043
        %v1045 = vpop.f32.mrb[0].mxu0
        %v1046 = vadd.f32 %v458, %v1045
        %1047 = vmatprep.mubr.f32.mxu0 0.0
        %1048 = vmatmul.mubr.f32.gmra.mrb[0].mxu0 %v762
        %v1049 = vpop.f32.mrb[0].mxu0
        %v1050 = vadd.f32 %v463, %v1049
        %v1051 = vpop.f32.mrb[0].mxu0
        %v1052 = vadd.f32 %v463, %v1051
        %1053 = vmatprep.mubr.f32.mxu0 0.0
        %1054 = vmatmul.mubr.f32.gmra.mrb[0].mxu0 %v765
        %v1055 = vpop.f32.mrb[0].mxu0
        %v1056 = vadd.f32 %v468, %v1055
        %v1057 = vpop.f32.mrb[0].mxu0
        %v1058 = vadd.f32 %v468, %v1057
        %1059 = vmatprep.mubr.f32.mxu0 0.0
        %1060 = vmatmul.mubr.f32.gmra.mrb[0].mxu0 %v768
        %v1061 = vpop.f32.mrb[0].mxu0
        %v1062 = vadd.f32 %v473, %v1061
        %v1063 = vpop.f32.mrb[0].mxu0
        %v1064 = vadd.f32 %v473, %v1063
        %1065 = vmatprep.mubr.f32.mxu0 0.0
        %1066 = vmatmul.mubr.f32.gmra.mrb[0].mxu0 %v771
        %v1067 = vpop.f32.mrb[0].mxu0
        %v1068 = vadd.f32 %v478, %v1067
        %v1069 = vpop.f32.mrb[0].mxu0
        %v1070 = vadd.f32 %v478, %v1069
        %1071 = vmatprep.mubr.f32.mxu0 0.0
        %1072 = vmatmul.mubr.f32.gmra.mrb[0].mxu0 %v774
        %v1073 = vpop.f32.mrb[0].mxu0
        %v1074 = vadd.f32 %v483, %v1073
        %v1075 = vpop.f32.mrb[0].mxu0
        %v1076 = vadd.f32 %v483, %v1075
        %1077 = vmatprep.mubr.f32.mxu0 0.0
        %1078 = vmatmul.mubr.f32.gmra.mrb[0].mxu0 %v777
        %v1079 = vpop.f32.mrb[0].mxu0
        %v1080 = vadd.f32 %v488, %v1079
        %v1081 = vpop.f32.mrb[0].mxu0
        %v1082 = vadd.f32 %v488, %v1081
        %1083 = vmatprep.mubr.f32.mxu0 0.0
        %1084 = vmatmul.mubr.f32.gmra.mrb[0].mxu0 %v780
        %v1085 = vpop.f32.mrb[0].mxu0
        %v1086 = vadd.f32 %v493, %v1085
        %v1087 = vpop.f32.mrb[0].mxu0
        %v1088 = vadd.f32 %v493, %v1087
        %1089 = vmatprep.mubr.f32.mxu0 0.0
        %1090 = vmatmul.mubr.f32.gmra.mrb[0].mxu0 %v783
        %v1091 = vpop.f32.mrb[0].mxu0
        %v1092 = vadd.f32 %v498, %v1091
        %v1093 = vpop.f32.mrb[0].mxu0
        %v1094 = vadd.f32 %v498, %v1093
        %1095 = vmatprep.mubr.f32.mxu0 0.0
        %1096 = vmatmul.mubr.f32.gmra.mrb[0].mxu0 %v786
        %v1097 = vpop.f32.mrb[0].mxu0
        %v1098 = vadd.f32 %v503, %v1097
        %v1099 = vpop.f32.mrb[0].mxu0
        %v1100 = vadd.f32 %v503, %v1099
        %1101 = vmatprep.mubr.f32.mxu0 0.0
        %1102 = vmatmul.mubr.f32.gmra.mrb[0].mxu0 %v789
        %v1103 = vpop.f32.mrb[0].mxu0
        %v1104 = vadd.f32 %v508, %v1103
        %v1105 = vpop.f32.mrb[0].mxu0
        %v1106 = vadd.f32 %v508, %v1105
        %1107 = vmatprep.mubr.f32.mxu0 0.0
        %1108 = vmatmul.mubr.f32.gmra.mrb[0].mxu0 %v792
        %v1109 = vpop.f32.mrb[0].mxu0
        %v1110 = vadd.f32 %v513, %v1109
        %v1111 = vpop.f32.mrb[0].mxu0
        %v1112 = vadd.f32 %v513, %v1111
        %1113 = vmatprep.mubr.f32.mxu0 0.0
        %1114 = vmatmul.mubr.f32.gmra.mrb[0].mxu0 %v795
        %v1115 = vpop.f32.mrb[0].mxu0
        %v1116 = vadd.f32 %v518, %v1115
        %v1117 = vpop.f32.mrb[0].mxu0
        %v1118 = vadd.f32 %v518, %v1117
        %1119 = vmatprep.mubr.f32.mxu0 0.0
        %1120 = vmatmul.mubr.f32.gmra.mrb[0].mxu0 %v798
        %v1121 = vpop.f32.mrb[0].mxu0
        %v1122 = vadd.f32 %v523, %v1121
        %v1123 = vpop.f32.mrb[0].mxu0
        %v1124 = vadd.f32 %v523, %v1123
        %1125 = vmatprep.mubr.f32.mxu0 0.0
        %1126 = vmatmul.mubr.f32.gmra.mrb[0].mxu0 %v801
        %v1127 = vpop.f32.mrb[0].mxu0
        %v1128 = vadd.f32 %v528, %v1127
        %v1129 = vpop.f32.mrb[0].mxu0
        %v1130 = vadd.f32 %v528, %v1129
        %1131 = vmatprep.mubr.f32.mxu0 0.0
        %1132 = vmatmul.mubr.f32.gmra.mrb[0].mxu0 %v804
        %v1133 = vpop.f32.mrb[0].mxu0
        %v1134 = vadd.f32 %v533, %v1133
        %v1135 = vpop.f32.mrb[0].mxu0
        %v1136 = vadd.f32 %v533, %v1135
        %1137 = vmatprep.mubr.f32.mxu0 0.0
        %1138 = vmatmul.mubr.f32.gmra.mrb[0].mxu0 %v807
        %v1139 = vpop.f32.mrb[0].mxu0
        %v1140 = vadd.f32 %v538, %v1139
        %v1141 = vpop.f32.mrb[0].mxu0
        %v1142 = vadd.f32 %v538, %v1141
        %1143 = vmatprep.mubr.f32.mxu0 0.0
        %1144 = vmatmul.mubr.f32.gmra.mrb[0].mxu0 %v810
        %v1145 = vpop.f32.mrb[0].mxu0
        %v1146 = vadd.f32 %v543, %v1145
        %v1147 = vpop.f32.mrb[0].mxu0
        %v1148 = vadd.f32 %v543, %v1147
        %1149 = vmatprep.mubr.f32.mxu0 0.0
        %1150 = vmatmul.mubr.f32.gmra.mrb[0].mxu0 %v813
        %v1151 = vpop.f32.mrb[0].mxu0
        %v1152 = vadd.f32 %v548, %v1151
        %v1153 = vpop.f32.mrb[0].mxu0
        %v1154 = vadd.f32 %v548, %v1153
        %1155 = vmatprep.mubr.f32.mxu0 0.0
        %1156 = vmatmul.mubr.f32.gmra.mrb[0].mxu0 %v816
        %v1157 = vpop.f32.mrb[0].mxu0
        %v1158 = vadd.f32 %v553, %v1157
        %v1159 = vpop.f32.mrb[0].mxu0
        %v1160 = vadd.f32 %v553, %v1159
        %1161 = vmatprep.mubr.f32.mxu0 0.0
        %1162 = vmatmul.mubr.f32.gmra.mrb[0].mxu0 %v819
        %v1163 = vpop.f32.mrb[0].mxu0
        %v1164 = vadd.f32 %v558, %v1163
        %v1165 = vpop.f32.mrb[0].mxu0
        %v1166 = vadd.f32 %v558, %v1165
        %1167 = vmatprep.mubr.f32.mxu0 0.0
        %1168 = vmatmul.mubr.f32.gmra.mrb[0].mxu0 %v822
        %v1169 = vpop.f32.mrb[0].mxu0
        %v1170 = vadd.f32 %v563, %v1169
        %v1171 = vpop.f32.mrb[0].mxu0
        %v1172 = vadd.f32 %v563, %v1171
        %1173 = vmatprep.mubr.f32.mxu0 0.0
        %1174 = vmatmul.mubr.f32.gmra.mrb[0].mxu0 %v825
        %v1175 = vpop.f32.mrb[0].mxu0
        %v1176 = vadd.f32 %v568, %v1175
        %v1177 = vpop.f32.mrb[0].mxu0
        %v1178 = vadd.f32 %v568, %v1177
        %1179 = vmatprep.mubr.f32.mxu0 0.0
        %1180 = vmatmul.mubr.f32.gmra.mrb[0].mxu0 %v828
        %v1181 = vpop.f32.mrb[0].mxu0
        %v1182 = vadd.f32 %v573, %v1181
        %v1183 = vpop.f32.mrb[0].mxu0
        %v1184 = vadd.f32 %v573, %v1183
        %1185 = vmatprep.mubr.f32.mxu0 0.0
        %1186 = vmatmul.mubr.f32.gmra.mrb[0].mxu0 %v831
        %v1187 = vpop.f32.mrb[0].mxu0
        %v1188 = vadd.f32 %v578, %v1187
        %v1189 = vpop.f32.mrb[0].mxu0
        %v1190 = vadd.f32 %v578, %v1189
        %1191 = vmatprep.mubr.f32.mxu0 0.0
        %1192 = vmatmul.mubr.f32.gmra.mrb[0].mxu0 %v834
        %v1193 = vpop.f32.mrb[0].mxu0
        %v1194 = vadd.f32 %v583, %v1193
        %v1195 = vpop.f32.mrb[0].mxu0
        %v1196 = vadd.f32 %v583, %v1195
        %1197 = vmatprep.mubr.f32.mxu0 0.0
        %1198 = vmatmul.mubr.f32.gmra.mrb[0].mxu0 %v837
        %v1199 = vpop.f32.mrb[0].mxu0
        %v1200 = vadd.f32 %v588, %v1199
        %v1201 = vpop.f32.mrb[0].mxu0
        %v1202 = vadd.f32 %v588, %v1201
        %1203 = vmatprep.mubr.f32.mxu0 0.0
        %1204 = vmatmul.mubr.f32.gmra.mrb[0].mxu0 %v840
        %v1205 = vpop.f32.mrb[0].mxu0
        %v1206 = vadd.f32 %v593, %v1205
        %v1207 = vpop.f32.mrb[0].mxu0
        %v1208 = vadd.f32 %v593, %v1207
        %1209 = vmatprep.mubr.f32.mxu0 0.0
        %1210 = vmatmul.mubr.f32.gmra.mrb[0].mxu0 %v843
        %v1211 = vpop.f32.mrb[0].mxu0
        %v1212 = vadd.f32 %v598, %v1211
        %v1213 = vpop.f32.mrb[0].mxu0
        %v1214 = vadd.f32 %v598, %v1213
        %1215 = vmatprep.mubr.f32.mxu0 0.0
        %1216 = vmatmul.mubr.f32.gmra.mrb[0].mxu0 %v846
        %v1217 = vpop.f32.mrb[0].mxu0
        %v1218 = vadd.f32 %v603, %v1217
        %v1219 = vpop.f32.mrb[0].mxu0
        %v1220 = vadd.f32 %v603, %v1219
        %1221 = vmatprep.mubr.f32.mxu0 0.0
        %1222 = vmatmul.mubr.f32.gmra.mrb[0].mxu0 %v849
        %v1223 = vpop.f32.mrb[0].mxu0
        %v1224 = vadd.f32 %v608, %v1223
        %v1225 = vpop.f32.mrb[0].mxu0
        %v1226 = vadd.f32 %v608, %v1225
        %1227 = vmatprep.mubr.f32.mxu0 0.0
        %1228 = vmatmul.mubr.f32.gmra.mrb[0].mxu0 %v852
        %v1229 = vpop.f32.mrb[0].mxu0
        %v1230 = vadd.f32 %v613, %v1229
        %v1231 = vpop.f32.mrb[0].mxu0
        %v1232 = vadd.f32 %v613, %v1231
        %1233 = vmatprep.mubr.f32.mxu0 0.0
        %1234 = vmatmul.mubr.f32.gmra.mrb[0].mxu0 %v855
        %v1235 = vpop.f32.mrb[0].mxu0
        %v1236 = vadd.f32 %v618, %v1235
        %v1237 = vpop.f32.mrb[0].mxu0
        %v1238 = vadd.f32 %v618, %v1237
        %1239 = vmatprep.mubr.f32.mxu0 0.0
        %1240 = vmatmul.mubr.f32.gmra.mrb[0].mxu0 %v858
        %v1241 = vpop.f32.mrb[0].mxu0
        %v1242 = vadd.f32 %v623, %v1241
        %v1243 = vpop.f32.mrb[0].mxu0
        %v1244 = vadd.f32 %v623, %v1243
        %1245 = vmatprep.mubr.f32.mxu0 0.0
        %1246 = vmatmul.mubr.f32.gmra.mrb[0].mxu0 %v861
        %v1247 = vpop.f32.mrb[0].mxu0
        %v1248 = vadd.f32 %v628, %v1247
        %v1249 = vpop.f32.mrb[0].mxu0
        %v1250 = vadd.f32 %v628, %v1249
        %1251 = vmatprep.mubr.f32.mxu0 0.0
        %1252 = vmatmul.mubr.f32.gmra.mrb[0].mxu0 %v864
        %v1253 = vpop.f32.mrb[0].mxu0
        %v1254 = vadd.f32 %v633, %v1253
        %v1255 = vpop.f32.mrb[0].mxu0
        %v1256 = vadd.f32 %v633, %v1255
        %1257 = vmatprep.mubr.f32.mxu0 0.0
        %1258 = vmatmul.mubr.f32.gmra.mrb[0].mxu0 %v867
        %v1259 = vpop.f32.mrb[0].mxu0
        %v1260 = vadd.f32 %v638, %v1259
        %v1261 = vpop.f32.mrb[0].mxu0
        %v1262 = vadd.f32 %v638, %v1261
        %1263 = vmatprep.mubr.f32.mxu0 0.0
        %1264 = vmatmul.mubr.f32.gmra.mrb[0].mxu0 %v870
        %v1265 = vpop.f32.mrb[0].mxu0
        %v1266 = vadd.f32 %v643, %v1265
        %v1267 = vpop.f32.mrb[0].mxu0
        %v1268 = vadd.f32 %v643, %v1267
        %1269 = vmatprep.mubr.f32.mxu0 0.0
        %1270 = vmatmul.mubr.f32.gmra.mrb[0].mxu0 %v873
        %v1271 = vpop.f32.mrb[0].mxu0
        %v1272 = vadd.f32 %v648, %v1271
        %v1273 = vpop.f32.mrb[0].mxu0
        %v1274 = vadd.f32 %v648, %v1273
        %1275 = vmatprep.mubr.f32.mxu0 0.0
        %1276 = vmatmul.mubr.f32.gmra.mrb[0].mxu0 %v876
        %v1277 = vpop.f32.mrb[0].mxu0
        %v1278 = vadd.f32 %v653, %v1277
        %v1279 = vpop.f32.mrb[0].mxu0
        %v1280 = vadd.f32 %v653, %v1279
        %1281 = vmatprep.mubr.f32.mxu0 0.0
        %1282 = vmatmul.mubr.f32.gmra.mrb[0].mxu0 %v879
        %v1283 = vpop.f32.mrb[0].mxu0
        %v1284 = vadd.f32 %v658, %v1283
        %v1285 = vpop.f32.mrb[0].mxu0
        %v1286 = vadd.f32 %v658, %v1285
        %1287 = vmatprep.mubr.f32.mxu0 0.0
        %1288 = vmatmul.mubr.f32.gmra.mrb[0].mxu0 %v882
        %v1289 = vpop.f32.mrb[0].mxu0
        %v1290 = vadd.f32 %v663, %v1289
        %v1291 = vpop.f32.mrb[0].mxu0
        %v1292 = vadd.f32 %v663, %v1291
        %1293 = vmatprep.mubr.f32.mxu0 0.0
        %1294 = vmatmul.mubr.f32.gmra.mrb[0].mxu0 %v885
        %v1295 = vpop.f32.mrb[0].mxu0
        %v1296 = vadd.f32 %v668, %v1295
        %v1297 = vpop.f32.mrb[0].mxu0
        %v1298 = vadd.f32 %v668, %v1297
        %1299 = vmatprep.mubr.f32.mxu0 0.0
        %1300 = vmatmul.mubr.f32.gmra.mrb[0].mxu0 %v888
        %v1301 = vpop.f32.mrb[0].mxu0
        %v1302 = vadd.f32 %v673, %v1301
        %v1303 = vpop.f32.mrb[0].mxu0
        %v1304 = vadd.f32 %v673, %v1303
        %1305 = vmatprep.mubr.f32.mxu0 0.0
        %1306 = vmatmul.mubr.f32.gmra.mrb[0].mxu0 %v891
        %v1307 = vpop.f32.mrb[0].mxu0
        %v1308 = vadd.f32 %v678, %v1307
        %v1309 = vpop.f32.mrb[0].mxu0
        %v1310 = vadd.f32 %v678, %v1309
        %1311 = vmatprep.mubr.f32.mxu0 0.0
        %1312 = vmatmul.mubr.f32.gmra.mrb[0].mxu0 %v894
        %v1313 = vpop.f32.mrb[0].mxu0
        %v1314 = vadd.f32 %v683, %v1313
        %v1315 = vpop.f32.mrb[0].mxu0
        %v1316 = vadd.f32 %v683, %v1315
        %1317 = vmatprep.mubr.f32.mxu0 0.0
        %1318 = vmatmul.mubr.f32.gmra.mrb[0].mxu0 %v897
        %v1319 = vpop.f32.mrb[0].mxu0
        %v1320 = vadd.f32 %v688, %v1319
        %v1321 = vpop.f32.mrb[0].mxu0
        %v1322 = vadd.f32 %v688, %v1321
        %1323 = vmatprep.mubr.f32.mxu0 0.0
        %1324 = vmatmul.mubr.f32.gmra.mrb[0].mxu0 %v900
        %v1325 = vpop.f32.mrb[0].mxu0
        %v1326 = vadd.f32 %v693, %v1325
        %v1327 = vpop.f32.mrb[0].mxu0
        %v1328 = vadd.f32 %v693, %v1327
        %1329 = vmatprep.mubr.f32.mxu0 0.0
        %1330 = vmatmul.mubr.f32.gmra.mrb[0].mxu0 %v903
        %v1331 = vpop.f32.mrb[0].mxu0
        %v1332 = vadd.f32 %v698, %v1331
        %v1333 = vpop.f32.mrb[0].mxu0
        %v1334 = vadd.f32 %v698, %v1333
        %1335 = vmatprep.mubr.f32.mxu0 0.0
        %1336 = vmatmul.mubr.f32.gmra.mrb[0].mxu0 %v906
        %v1337 = vpop.f32.mrb[0].mxu0
        %v1338 = vadd.f32 %v703, %v1337
        %v1339 = vpop.f32.mrb[0].mxu0
        %v1340 = vadd.f32 %v703, %v1339
        %1341 = vmatprep.mubr.f32.mxu0 0.0
        %1342 = vmatmul.mubr.f32.gmra.mrb[0].mxu0 %v909
        %v1343 = vpop.f32.mrb[0].mxu0
        %v1344 = vadd.f32 %v708, %v1343
        %v1345 = vpop.f32.mrb[0].mxu0
        %v1346 = vadd.f32 %v708, %v1345
        %1347 = vmatprep.mubr.f32.mxu0 0.0
        %1348 = vmatmul.mubr.f32.gmra.mrb[0].mxu0 %v912
        %v1349 = vpop.f32.mrb[0].mxu0
        %v1350 = vadd.f32 %v713, %v1349
        %v1351 = vpop.f32.mrb[0].mxu0
        %v1352 = vadd.f32 %v713, %v1351
        %1353 = vmatprep.mubr.f32.mxu0 0.0
        %1354 = vmatmul.mubr.f32.gmra.mrb[0].mxu0 %v915
        %v1355 = vpop.f32.mrb[0].mxu0
        %v1356 = vadd.f32 %v718, %v1355
        %v1357 = vpop.f32.mrb[0].mxu0
        %v1358 = vadd.f32 %v718, %v1357
        %1359 = vmatprep.mubr.f32.mxu0 0.0
        %1360 = vmatmul.mubr.f32.gmra.mrb[0].mxu0 %v918
        %v1361 = vpop.f32.mrb[0].mxu0
        %v1362 = vadd.f32 %v723, %v1361
        %v1363 = vpop.f32.mrb[0].mxu0
        %v1364 = vadd.f32 %v723, %v1363
        %1365 = vmatprep.mubr.f32.mxu0 0.0
        %1366 = vmatmul.mubr.f32.gmra.mrb[0].mxu0 %v921
        %v1367 = vpop.f32.mrb[0].mxu0
        %v1368 = vadd.f32 %v728, %v1367
        %v1369 = vpop.f32.mrb[0].mxu0
        %v1370 = vadd.f32 %v728, %v1369
        %1371 = vdwg.mxu0
        %vm1372 = vcmp.ge.f32.partialorder %v990, 0.0
        %vm1373 = vcmp.ge.f32.partialorder %v992, 0.0
        %vm1374 = vcmp.ge.f32.partialorder %v996, 0.0
        %vm1375 = vcmp.ge.f32.partialorder %v998, 0.0
        %vm1376 = vcmp.ge.f32.partialorder %v1002, 0.0
        %vm1377 = vcmp.ge.f32.partialorder %v1004, 0.0
        %vm1378 = vcmp.ge.f32.partialorder %v1008, 0.0
        %vm1379 = vcmp.ge.f32.partialorder %v1010, 0.0
        %vm1380 = vcmp.ge.f32.partialorder %v1014, 0.0
        %vm1381 = vcmp.ge.f32.partialorder %v1016, 0.0
        %vm1382 = vcmp.ge.f32.partialorder %v1020, 0.0
        %vm1383 = vcmp.ge.f32.partialorder %v1022, 0.0
        %vm1384 = vcmp.ge.f32.partialorder %v1026, 0.0
        %vm1385 = vcmp.ge.f32.partialorder %v1028, 0.0
        %vm1386 = vcmp.ge.f32.partialorder %v1032, 0.0
        %vm1387 = vcmp.ge.f32.partialorder %v1034, 0.0
        %vm1388 = vcmp.ge.f32.partialorder %v1038, 0.0
        %vm1389 = vcmp.ge.f32.partialorder %v1040, 0.0
        %vm1390 = vcmp.ge.f32.partialorder %v1044, 0.0
        %vm1391 = vcmp.ge.f32.partialorder %v1046, 0.0
        %vm1392 = vcmp.ge.f32.partialorder %v1050, 0.0
        %vm1393 = vcmp.ge.f32.partialorder %v1052, 0.0
        %vm1394 = vcmp.ge.f32.partialorder %v1056, 0.0
        %vm1395 = vcmp.ge.f32.partialorder %v1058, 0.0
        %vm1396 = vcmp.ge.f32.partialorder %v1062, 0.0
        %vm1397 = vcmp.ge.f32.partialorder %v1064, 0.0
        %vm1398 = vcmp.ge.f32.partialorder %v1068, 0.0
        %vm1399 = vcmp.ge.f32.partialorder %v1070, 0.0
        %vm1400 = vcmp.ge.f32.partialorder %v1074, 0.0
        %vm1401 = vcmp.ge.f32.partialorder %v1076, 0.0
        %vm1402 = vcmp.ge.f32.partialorder %v1080, 0.0
        %vm1403 = vcmp.ge.f32.partialorder %v1082, 0.0
        %vm1404 = vcmp.ge.f32.partialorder %v1086, 0.0
        %vm1405 = vcmp.ge.f32.partialorder %v1088, 0.0
        %vm1406 = vcmp.ge.f32.partialorder %v1092, 0.0
        %vm1407 = vcmp.ge.f32.partialorder %v1094, 0.0
        %vm1408 = vcmp.ge.f32.partialorder %v1098, 0.0
        %vm1409 = vcmp.ge.f32.partialorder %v1100, 0.0
        %vm1410 = vcmp.ge.f32.partialorder %v1104, 0.0
        %vm1411 = vcmp.ge.f32.partialorder %v1106, 0.0
        %vm1412 = vcmp.ge.f32.partialorder %v1110, 0.0
        %vm1413 = vcmp.ge.f32.partialorder %v1112, 0.0
        %vm1414 = vcmp.ge.f32.partialorder %v1116, 0.0
        %vm1415 = vcmp.ge.f32.partialorder %v1118, 0.0
        %vm1416 = vcmp.ge.f32.partialorder %v1122, 0.0
        %vm1417 = vcmp.ge.f32.partialorder %v1124, 0.0
        %vm1418 = vcmp.ge.f32.partialorder %v1128, 0.0
        %vm1419 = vcmp.ge.f32.partialorder %v1130, 0.0
        %vm1420 = vcmp.ge.f32.partialorder %v1134, 0.0
        %vm1421 = vcmp.ge.f32.partialorder %v1136, 0.0
        %vm1422 = vcmp.ge.f32.partialorder %v1140, 0.0
        %vm1423 = vcmp.ge.f32.partialorder %v1142, 0.0
        %vm1424 = vcmp.ge.f32.partialorder %v1146, 0.0
        %vm1425 = vcmp.ge.f32.partialorder %v1148, 0.0
        %vm1426 = vcmp.ge.f32.partialorder %v1152, 0.0
        %vm1427 = vcmp.ge.f32.partialorder %v1154, 0.0
        %vm1428 = vcmp.ge.f32.partialorder %v1158, 0.0
        %vm1429 = vcmp.ge.f32.partialorder %v1160, 0.0
        %vm1430 = vcmp.ge.f32.partialorder %v1164, 0.0
        %vm1431 = vcmp.ge.f32.partialorder %v1166, 0.0
        %vm1432 = vcmp.ge.f32.partialorder %v1170, 0.0
        %vm1433 = vcmp.ge.f32.partialorder %v1172, 0.0
        %vm1434 = vcmp.ge.f32.partialorder %v1176, 0.0
        %vm1435 = vcmp.ge.f32.partialorder %v1178, 0.0
        %vm1436 = vcmp.ge.f32.partialorder %v1182, 0.0
        %vm1437 = vcmp.ge.f32.partialorder %v1184, 0.0
        %vm1438 = vcmp.ge.f32.partialorder %v1188, 0.0
        %vm1439 = vcmp.ge.f32.partialorder %v1190, 0.0
        %vm1440 = vcmp.ge.f32.partialorder %v1194, 0.0
        %vm1441 = vcmp.ge.f32.partialorder %v1196, 0.0
        %vm1442 = vcmp.ge.f32.partialorder %v1200, 0.0
        %vm1443 = vcmp.ge.f32.partialorder %v1202, 0.0
        %vm1444 = vcmp.ge.f32.partialorder %v1206, 0.0
        %vm1445 = vcmp.ge.f32.partialorder %v1208, 0.0
        %vm1446 = vcmp.ge.f32.partialorder %v1212, 0.0
        %vm1447 = vcmp.ge.f32.partialorder %v1214, 0.0
        %vm1448 = vcmp.ge.f32.partialorder %v1218, 0.0
        %vm1449 = vcmp.ge.f32.partialorder %v1220, 0.0
        %vm1450 = vcmp.ge.f32.partialorder %v1224, 0.0
        %vm1451 = vcmp.ge.f32.partialorder %v1226, 0.0
        %vm1452 = vcmp.ge.f32.partialorder %v1230, 0.0
        %vm1453 = vcmp.ge.f32.partialorder %v1232, 0.0
        %vm1454 = vcmp.ge.f32.partialorder %v1236, 0.0
        %vm1455 = vcmp.ge.f32.partialorder %v1238, 0.0
        %vm1456 = vcmp.ge.f32.partialorder %v1242, 0.0
        %vm1457 = vcmp.ge.f32.partialorder %v1244, 0.0
        %vm1458 = vcmp.ge.f32.partialorder %v1248, 0.0
        %vm1459 = vcmp.ge.f32.partialorder %v1250, 0.0
        %vm1460 = vcmp.ge.f32.partialorder %v1254, 0.0
        %vm1461 = vcmp.ge.f32.partialorder %v1256, 0.0
        %vm1462 = vcmp.ge.f32.partialorder %v1260, 0.0
        %vm1463 = vcmp.ge.f32.partialorder %v1262, 0.0
        %vm1464 = vcmp.ge.f32.partialorder %v1266, 0.0
        %vm1465 = vcmp.ge.f32.partialorder %v1268, 0.0
        %vm1466 = vcmp.ge.f32.partialorder %v1272, 0.0
        %vm1467 = vcmp.ge.f32.partialorder %v1274, 0.0
        %vm1468 = vcmp.ge.f32.partialorder %v1278, 0.0
        %vm1469 = vcmp.ge.f32.partialorder %v1280, 0.0
        %vm1470 = vcmp.ge.f32.partialorder %v1284, 0.0
        %vm1471 = vcmp.ge.f32.partialorder %v1286, 0.0
        %vm1472 = vcmp.ge.f32.partialorder %v1290, 0.0
        %vm1473 = vcmp.ge.f32.partialorder %v1292, 0.0
        %vm1474 = vcmp.ge.f32.partialorder %v1296, 0.0
        %vm1475 = vcmp.ge.f32.partialorder %v1298, 0.0
        %vm1476 = vcmp.ge.f32.partialorder %v1302, 0.0
        %vm1477 = vcmp.ge.f32.partialorder %v1304, 0.0
        %vm1478 = vcmp.ge.f32.partialorder %v1308, 0.0
        %vm1479 = vcmp.ge.f32.partialorder %v1310, 0.0
        %vm1480 = vcmp.ge.f32.partialorder %v1314, 0.0
        %vm1481 = vcmp.ge.f32.partialorder %v1316, 0.0
        %vm1482 = vcmp.ge.f32.partialorder %v1320, 0.0
        %vm1483 = vcmp.ge.f32.partialorder %v1322, 0.0
        %vm1484 = vcmp.ge.f32.partialorder %v1326, 0.0
        %vm1485 = vcmp.ge.f32.partialorder %v1328, 0.0
        %vm1486 = vcmp.ge.f32.partialorder %v1332, 0.0
        %vm1487 = vcmp.ge.f32.partialorder %v1334, 0.0
        %vm1488 = vcmp.ge.f32.partialorder %v1338, 0.0
        %vm1489 = vcmp.ge.f32.partialorder %v1340, 0.0
        %vm1490 = vcmp.ge.f32.partialorder %v1344, 0.0
        %vm1491 = vcmp.ge.f32.partialorder %v1346, 0.0
        %vm1492 = vcmp.ge.f32.partialorder %v1350, 0.0
        %vm1493 = vcmp.ge.f32.partialorder %v1352, 0.0
        %vm1494 = vcmp.ge.f32.partialorder %v1356, 0.0
        %vm1495 = vcmp.ge.f32.partialorder %v1358, 0.0
        %vm1496 = vcmp.ge.f32.partialorder %v1362, 0.0
        %vm1497 = vcmp.ge.f32.partialorder %v1364, 0.0
        %vm1498 = vcmp.ge.f32.partialorder %v1368, 0.0
        %vm1499 = vcmp.ge.f32.partialorder %v1370, 0.0
        %v1500 = vsub.f32 0.0, %v990
        %v1501 = vsub.f32 0.0, %v992
        %v1502 = vsub.f32 0.0, %v996
        %v1503 = vsub.f32 0.0, %v998
        %v1504 = vsub.f32 0.0, %v1002
        %v1505 = vsub.f32 0.0, %v1004
        %v1506 = vsub.f32 0.0, %v1008
        %v1507 = vsub.f32 0.0, %v1010
        %v1508 = vsub.f32 0.0, %v1014
        %v1509 = vsub.f32 0.0, %v1016
        %v1510 = vsub.f32 0.0, %v1020
        %v1511 = vsub.f32 0.0, %v1022
        %v1512 = vsub.f32 0.0, %v1026
        %v1513 = vsub.f32 0.0, %v1028
        %v1514 = vsub.f32 0.0, %v1032
        %v1515 = vsub.f32 0.0, %v1034
        %v1516 = vsub.f32 0.0, %v1038
        %v1517 = vsub.f32 0.0, %v1040
        %v1518 = vsub.f32 0.0, %v1044
        %v1519 = vsub.f32 0.0, %v1046
        %v1520 = vsub.f32 0.0, %v1050
        %v1521 = vsub.f32 0.0, %v1052
        %v1522 = vsub.f32 0.0, %v1056
        %v1523 = vsub.f32 0.0, %v1058
        %v1524 = vsub.f32 0.0, %v1062
        %v1525 = vsub.f32 0.0, %v1064
        %v1526 = vsub.f32 0.0, %v1068
        %v1527 = vsub.f32 0.0, %v1070
        %v1528 = vsub.f32 0.0, %v1074
        %v1529 = vsub.f32 0.0, %v1076
        %v1530 = vsub.f32 0.0, %v1080
        %v1531 = vsub.f32 0.0, %v1082
        %v1532 = vsub.f32 0.0, %v1086
        %v1533 = vsub.f32 0.0, %v1088
        %v1534 = vsub.f32 0.0, %v1092
        %v1535 = vsub.f32 0.0, %v1094
        %v1536 = vsub.f32 0.0, %v1098
        %v1537 = vsub.f32 0.0, %v1100
        %v1538 = vsub.f32 0.0, %v1104
        %v1539 = vsub.f32 0.0, %v1106
        %v1540 = vsub.f32 0.0, %v1110
        %v1541 = vsub.f32 0.0, %v1112
        %v1542 = vsub.f32 0.0, %v1116
        %v1543 = vsub.f32 0.0, %v1118
        %v1544 = vsub.f32 0.0, %v1122
        %v1545 = vsub.f32 0.0, %v1124
        %v1546 = vsub.f32 0.0, %v1128
        %v1547 = vsub.f32 0.0, %v1130
        %v1548 = vsub.f32 0.0, %v1134
        %v1549 = vsub.f32 0.0, %v1136
        %v1550 = vsub.f32 0.0, %v1140
        %v1551 = vsub.f32 0.0, %v1142
        %v1552 = vsub.f32 0.0, %v1146
        %v1553 = vsub.f32 0.0, %v1148
        %v1554 = vsub.f32 0.0, %v1152
        %v1555 = vsub.f32 0.0, %v1154
        %v1556 = vsub.f32 0.0, %v1158
        %v1557 = vsub.f32 0.0, %v1160
        %v1558 = vsub.f32 0.0, %v1164
        %v1559 = vsub.f32 0.0, %v1166
        %v1560 = vsub.f32 0.0, %v1170
        %v1561 = vsub.f32 0.0, %v1172
        %v1562 = vsub.f32 0.0, %v1176
        %v1563 = vsub.f32 0.0, %v1178
        %v1564 = vsub.f32 0.0, %v1182
        %v1565 = vsub.f32 0.0, %v1184
        %v1566 = vsub.f32 0.0, %v1188
        %v1567 = vsub.f32 0.0, %v1190
        %v1568 = vsub.f32 0.0, %v1194
        %v1569 = vsub.f32 0.0, %v1196
        %v1570 = vsub.f32 0.0, %v1200
        %v1571 = vsub.f32 0.0, %v1202
        %v1572 = vsub.f32 0.0, %v1206
        %v1573 = vsub.f32 0.0, %v1208
        %v1574 = vsub.f32 0.0, %v1212
        %v1575 = vsub.f32 0.0, %v1214
        %v1576 = vsub.f32 0.0, %v1218
        %v1577 = vsub.f32 0.0, %v1220
        %v1578 = vsub.f32 0.0, %v1224
        %v1579 = vsub.f32 0.0, %v1226
        %v1580 = vsub.f32 0.0, %v1230
        %v1581 = vsub.f32 0.0, %v1232
        %v1582 = vsub.f32 0.0, %v1236
        %v1583 = vsub.f32 0.0, %v1238
        %v1584 = vsub.f32 0.0, %v1242
        %v1585 = vsub.f32 0.0, %v1244
        %v1586 = vsub.f32 0.0, %v1248
        %v1587 = vsub.f32 0.0, %v1250
        %v1588 = vsub.f32 0.0, %v1254
        %v1589 = vsub.f32 0.0, %v1256
        %v1590 = vsub.f32 0.0, %v1260
        %v1591 = vsub.f32 0.0, %v1262
        %v1592 = vsub.f32 0.0, %v1266
        %v1593 = vsub.f32 0.0, %v1268
        %v1594 = vsub.f32 0.0, %v1272
        %v1595 = vsub.f32 0.0, %v1274
        %v1596 = vsub.f32 0.0, %v1278
        %v1597 = vsub.f32 0.0, %v1280
        %v1598 = vsub.f32 0.0, %v1284
        %v1599 = vsub.f32 0.0, %v1286
        %v1600 = vsub.f32 0.0, %v1290
        %v1601 = vsub.f32 0.0, %v1292
        %v1602 = vsub.f32 0.0, %v1296
        %v1603 = vsub.f32 0.0, %v1298
        %v1604 = vsub.f32 0.0, %v1302
        %v1605 = vsub.f32 0.0, %v1304
        %v1606 = vsub.f32 0.0, %v1308
        %v1607 = vsub.f32 0.0, %v1310
        %v1608 = vsub.f32 0.0, %v1314
        %v1609 = vsub.f32 0.0, %v1316
        %v1610 = vsub.f32 0.0, %v1320
        %v1611 = vsub.f32 0.0, %v1322
        %v1612 = vsub.f32 0.0, %v1326
        %v1613 = vsub.f32 0.0, %v1328
        %v1614 = vsub.f32 0.0, %v1332
        %v1615 = vsub.f32 0.0, %v1334
        %v1616 = vsub.f32 0.0, %v1338
        %v1617 = vsub.f32 0.0, %v1340
        %v1618 = vsub.f32 0.0, %v1344
        %v1619 = vsub.f32 0.0, %v1346
        %v1620 = vsub.f32 0.0, %v1350
        %v1621 = vsub.f32 0.0, %v1352
        %v1622 = vsub.f32 0.0, %v1356
        %v1623 = vsub.f32 0.0, %v1358
        %v1624 = vsub.f32 0.0, %v1362
        %v1625 = vsub.f32 0.0, %v1364
        %v1626 = vsub.f32 0.0, %v1368
        %v1627 = vsub.f32 0.0, %v1370
        %v1628 = vsel %vm1372, %v1500, %v990
        %v1629 = vsel %vm1373, %v1501, %v992
        %v1630 = vsel %vm1374, %v1502, %v996
        %v1631 = vsel %vm1375, %v1503, %v998
        %v1632 = vsel %vm1376, %v1504, %v1002
        %v1633 = vsel %vm1377, %v1505, %v1004
        %v1634 = vsel %vm1378, %v1506, %v1008
        %v1635 = vsel %vm1379, %v1507, %v1010
        %v1636 = vsel %vm1380, %v1508, %v1014
        %v1637 = vsel %vm1381, %v1509, %v1016
        %v1638 = vsel %vm1382, %v1510, %v1020
        %v1639 = vsel %vm1383, %v1511, %v1022
        %v1640 = vsel %vm1384, %v1512, %v1026
        %v1641 = vsel %vm1385, %v1513, %v1028
        %v1642 = vsel %vm1386, %v1514, %v1032
        %v1643 = vsel %vm1387, %v1515, %v1034
        %v1644 = vsel %vm1388, %v1516, %v1038
        %v1645 = vsel %vm1389, %v1517, %v1040
        %v1646 = vsel %vm1390, %v1518, %v1044
        %v1647 = vsel %vm1391, %v1519, %v1046
        %v1648 = vsel %vm1392, %v1520, %v1050
        %v1649 = vsel %vm1393, %v1521, %v1052
        %v1650 = vsel %vm1394, %v1522, %v1056
        %v1651 = vsel %vm1395, %v1523, %v1058
        %v1652 = vsel %vm1396, %v1524, %v1062
        %v1653 = vsel %vm1397, %v1525, %v1064
        %v1654 = vsel %vm1398, %v1526, %v1068
        %v1655 = vsel %vm1399, %v1527, %v1070
        %v1656 = vsel %vm1400, %v1528, %v1074
        %v1657 = vsel %vm1401, %v1529, %v1076
        %v1658 = vsel %vm1402, %v1530, %v1080
        %v1659 = vsel %vm1403, %v1531, %v1082
        %v1660 = vsel %vm1404, %v1532, %v1086
        %v1661 = vsel %vm1405, %v1533, %v1088
        %v1662 = vsel %vm1406, %v1534, %v1092
        %v1663 = vsel %vm1407, %v1535, %v1094
        %v1664 = vsel %vm1408, %v1536, %v1098
        %v1665 = vsel %vm1409, %v1537, %v1100
        %v1666 = vsel %vm1410, %v1538, %v1104
        %v1667 = vsel %vm1411, %v1539, %v1106
        %v1668 = vsel %vm1412, %v1540, %v1110
        %v1669 = vsel %vm1413, %v1541, %v1112
        %v1670 = vsel %vm1414, %v1542, %v1116
        %v1671 = vsel %vm1415, %v1543, %v1118
        %v1672 = vsel %vm1416, %v1544, %v1122
        %v1673 = vsel %vm1417, %v1545, %v1124
        %v1674 = vsel %vm1418, %v1546, %v1128
        %v1675 = vsel %vm1419, %v1547, %v1130
        %v1676 = vsel %vm1420, %v1548, %v1134
        %v1677 = vsel %vm1421, %v1549, %v1136
        %v1678 = vsel %vm1422, %v1550, %v1140
        %v1679 = vsel %vm1423, %v1551, %v1142
        %v1680 = vsel %vm1424, %v1552, %v1146
        %v1681 = vsel %vm1425, %v1553, %v1148
        %v1682 = vsel %vm1426, %v1554, %v1152
        %v1683 = vsel %vm1427, %v1555, %v1154
        %v1684 = vsel %vm1428, %v1556, %v1158
        %v1685 = vsel %vm1429, %v1557, %v1160
        %v1686 = vsel %vm1430, %v1558, %v1164
        %v1687 = vsel %vm1431, %v1559, %v1166
        %v1688 = vsel %vm1432, %v1560, %v1170
        %v1689 = vsel %vm1433, %v1561, %v1172
        %v1690 = vsel %vm1434, %v1562, %v1176
        %v1691 = vsel %vm1435, %v1563, %v1178
        %v1692 = vsel %vm1436, %v1564, %v1182
        %v1693 = vsel %vm1437, %v1565, %v1184
        %v1694 = vsel %vm1438, %v1566, %v1188
        %v1695 = vsel %vm1439, %v1567, %v1190
        %v1696 = vsel %vm1440, %v1568, %v1194
        %v1697 = vsel %vm1441, %v1569, %v1196
        %v1698 = vsel %vm1442, %v1570, %v1200
        %v1699 = vsel %vm1443, %v1571, %v1202
        %v1700 = vsel %vm1444, %v1572, %v1206
        %v1701 = vsel %vm1445, %v1573, %v1208
        %v1702 = vsel %vm1446, %v1574, %v1212
        %v1703 = vsel %vm1447, %v1575, %v1214
        %v1704 = vsel %vm1448, %v1576, %v1218
        %v1705 = vsel %vm1449, %v1577, %v1220
        %v1706 = vsel %vm1450, %v1578, %v1224
        %v1707 = vsel %vm1451, %v1579, %v1226
        %v1708 = vsel %vm1452, %v1580, %v1230
        %v1709 = vsel %vm1453, %v1581, %v1232
        %v1710 = vsel %vm1454, %v1582, %v1236
        %v1711 = vsel %vm1455, %v1583, %v1238
        %v1712 = vsel %vm1456, %v1584, %v1242
        %v1713 = vsel %vm1457, %v1585, %v1244
        %v1714 = vsel %vm1458, %v1586, %v1248
        %v1715 = vsel %vm1459, %v1587, %v1250
        %v1716 = vsel %vm1460, %v1588, %v1254
        %v1717 = vsel %vm1461, %v1589, %v1256
        %v1718 = vsel %vm1462, %v1590, %v1260
        %v1719 = vsel %vm1463, %v1591, %v1262
        %v1720 = vsel %vm1464, %v1592, %v1266
        %v1721 = vsel %vm1465, %v1593, %v1268
        %v1722 = vsel %vm1466, %v1594, %v1272
        %v1723 = vsel %vm1467, %v1595, %v1274
        %v1724 = vsel %vm1468, %v1596, %v1278
        %v1725 = vsel %vm1469, %v1597, %v1280
        %v1726 = vsel %vm1470, %v1598, %v1284
        %v1727 = vsel %vm1471, %v1599, %v1286
        %v1728 = vsel %vm1472, %v1600, %v1290
        %v1729 = vsel %vm1473, %v1601, %v1292
        %v1730 = vsel %vm1474, %v1602, %v1296
        %v1731 = vsel %vm1475, %v1603, %v1298
        %v1732 = vsel %vm1476, %v1604, %v1302
        %v1733 = vsel %vm1477, %v1605, %v1304
        %v1734 = vsel %vm1478, %v1606, %v1308
        %v1735 = vsel %vm1479, %v1607, %v1310
        %v1736 = vsel %vm1480, %v1608, %v1314
        %v1737 = vsel %vm1481, %v1609, %v1316
        %v1738 = vsel %vm1482, %v1610, %v1320
        %v1739 = vsel %vm1483, %v1611, %v1322
        %v1740 = vsel %vm1484, %v1612, %v1326
        %v1741 = vsel %vm1485, %v1613, %v1328
        %v1742 = vsel %vm1486, %v1614, %v1332
        %v1743 = vsel %vm1487, %v1615, %v1334
        %v1744 = vsel %vm1488, %v1616, %v1338
        %v1745 = vsel %vm1489, %v1617, %v1340
        %v1746 = vsel %vm1490, %v1618, %v1344
        %v1747 = vsel %vm1491, %v1619, %v1346
        %v1748 = vsel %vm1492, %v1620, %v1350
        %v1749 = vsel %vm1493, %v1621, %v1352
        %v1750 = vsel %vm1494, %v1622, %v1356
        %v1751 = vsel %vm1495, %v1623, %v1358
        %v1752 = vsel %vm1496, %v1624, %v1362
        %v1753 = vsel %vm1497, %v1625, %v1364
        %v1754 = vsel %vm1498, %v1626, %v1368
        %v1755 = vsel %vm1499, %v1627, %v1370
        %v1756 = vmul.f32 %v1628, 1.442695
        %v1757 = vpow.pop %v1756
        %v1758 = vmul.f32 %v1629, 1.442695
        %v1759 = vpow.pop %v1758
        %v1760 = vmul.f32 %v1630, 1.442695
        %v1761 = vpow.pop %v1760
        %v1762 = vmul.f32 %v1631, 1.442695
        %v1763 = vpow.pop %v1762
        %v1764 = vmul.f32 %v1632, 1.442695
        %v1765 = vpow.pop %v1764
        %v1766 = vmul.f32 %v1633, 1.442695
        %v1767 = vpow.pop %v1766
        %v1768 = vmul.f32 %v1634, 1.442695
        %v1769 = vpow.pop %v1768
        %v1770 = vmul.f32 %v1635, 1.442695
        %v1771 = vpow.pop %v1770
        %v1772 = vmul.f32 %v1636, 1.442695
        %v1773 = vpow.pop %v1772
        %v1774 = vmul.f32 %v1637, 1.442695
        %v1775 = vpow.pop %v1774
        %v1776 = vmul.f32 %v1638, 1.442695
        %v1777 = vpow.pop %v1776
        %v1778 = vmul.f32 %v1639, 1.442695
        %v1779 = vpow.pop %v1778
        %v1780 = vmul.f32 %v1640, 1.442695
        %v1781 = vpow.pop %v1780
        %v1782 = vmul.f32 %v1641, 1.442695
        %v1783 = vpow.pop %v1782
        %v1784 = vmul.f32 %v1642, 1.442695
        %v1785 = vpow.pop %v1784
        %v1786 = vmul.f32 %v1643, 1.442695
        %v1787 = vpow.pop %v1786
        %v1788 = vmul.f32 %v1644, 1.442695
        %v1789 = vpow.pop %v1788
        %v1790 = vmul.f32 %v1645, 1.442695
        %v1791 = vpow.pop %v1790
        %v1792 = vmul.f32 %v1646, 1.442695
        %v1793 = vpow.pop %v1792
        %v1794 = vmul.f32 %v1647, 1.442695
        %v1795 = vpow.pop %v1794
        %v1796 = vmul.f32 %v1648, 1.442695
        %v1797 = vpow.pop %v1796
        %v1798 = vmul.f32 %v1649, 1.442695
        %v1799 = vpow.pop %v1798
        %v1800 = vmul.f32 %v1650, 1.442695
        %v1801 = vpow.pop %v1800
        %v1802 = vmul.f32 %v1651, 1.442695
        %v1803 = vpow.pop %v1802
        %v1804 = vmul.f32 %v1652, 1.442695
        %v1805 = vpow.pop %v1804
        %v1806 = vmul.f32 %v1653, 1.442695
        %v1807 = vpow.pop %v1806
        %v1808 = vmul.f32 %v1654, 1.442695
        %v1809 = vpow.pop %v1808
        %v1810 = vmul.f32 %v1655, 1.442695
        %v1811 = vpow.pop %v1810
        %v1812 = vmul.f32 %v1656, 1.442695
        %v1813 = vpow.pop %v1812
        %v1814 = vmul.f32 %v1657, 1.442695
        %v1815 = vpow.pop %v1814
        %v1816 = vmul.f32 %v1658, 1.442695
        %v1817 = vpow.pop %v1816
        %v1818 = vmul.f32 %v1659, 1.442695
        %v1819 = vpow.pop %v1818
        %v1820 = vmul.f32 %v1660, 1.442695
        %v1821 = vpow.pop %v1820
        %v1822 = vmul.f32 %v1661, 1.442695
        %v1823 = vpow.pop %v1822
        %v1824 = vmul.f32 %v1662, 1.442695
        %v1825 = vpow.pop %v1824
        %v1826 = vmul.f32 %v1663, 1.442695
        %v1827 = vpow.pop %v1826
        %v1828 = vmul.f32 %v1664, 1.442695
        %v1829 = vpow.pop %v1828
        %v1830 = vmul.f32 %v1665, 1.442695
        %v1831 = vpow.pop %v1830
        %v1832 = vmul.f32 %v1666, 1.442695
        %v1833 = vpow.pop %v1832
        %v1834 = vmul.f32 %v1667, 1.442695
        %v1835 = vpow.pop %v1834
        %v1836 = vmul.f32 %v1668, 1.442695
        %v1837 = vpow.pop %v1836
        %v1838 = vmul.f32 %v1669, 1.442695
        %v1839 = vpow.pop %v1838
        %v1840 = vmul.f32 %v1670, 1.442695
        %v1841 = vpow.pop %v1840
        %v1842 = vmul.f32 %v1671, 1.442695
        %v1843 = vpow.pop %v1842
        %v1844 = vmul.f32 %v1672, 1.442695
        %v1845 = vpow.pop %v1844
        %v1846 = vmul.f32 %v1673, 1.442695
        %v1847 = vpow.pop %v1846
        %v1848 = vmul.f32 %v1674, 1.442695
        %v1849 = vpow.pop %v1848
        %v1850 = vmul.f32 %v1675, 1.442695
        %v1851 = vpow.pop %v1850
        %v1852 = vmul.f32 %v1676, 1.442695
        %v1853 = vpow.pop %v1852
        %v1854 = vmul.f32 %v1677, 1.442695
        %v1855 = vpow.pop %v1854
        %v1856 = vmul.f32 %v1678, 1.442695
        %v1857 = vpow.pop %v1856
        %v1858 = vmul.f32 %v1679, 1.442695
        %v1859 = vpow.pop %v1858
        %v1860 = vmul.f32 %v1680, 1.442695
        %v1861 = vpow.pop %v1860
        %v1862 = vmul.f32 %v1681, 1.442695
        %v1863 = vpow.pop %v1862
        %v1864 = vmul.f32 %v1682, 1.442695
        %v1865 = vpow.pop %v1864
        %v1866 = vmul.f32 %v1683, 1.442695
        %v1867 = vpow.pop %v1866
        %v1868 = vmul.f32 %v1684, 1.442695
        %v1869 = vpow.pop %v1868
        %v1870 = vmul.f32 %v1685, 1.442695
        %v1871 = vpow.pop %v1870
        %v1872 = vmul.f32 %v1686, 1.442695
        %v1873 = vpow.pop %v1872
        %v1874 = vmul.f32 %v1687, 1.442695
        %v1875 = vpow.pop %v1874
        %v1876 = vmul.f32 %v1688, 1.442695
        %v1877 = vpow.pop %v1876
        %v1878 = vmul.f32 %v1689, 1.442695
        %v1879 = vpow.pop %v1878
        %v1880 = vmul.f32 %v1690, 1.442695
        %v1881 = vpow.pop %v1880
        %v1882 = vmul.f32 %v1691, 1.442695
        %v1883 = vpow.pop %v1882
        %v1884 = vmul.f32 %v1692, 1.442695
        %v1885 = vpow.pop %v1884
        %v1886 = vmul.f32 %v1693, 1.442695
        %v1887 = vpow.pop %v1886
        %v1888 = vmul.f32 %v1694, 1.442695
        %v1889 = vpow.pop %v1888
        %v1890 = vmul.f32 %v1695, 1.442695
        %v1891 = vpow.pop %v1890
        %v1892 = vmul.f32 %v1696, 1.442695
        %v1893 = vpow.pop %v1892
        %v1894 = vmul.f32 %v1697, 1.442695
        %v1895 = vpow.pop %v1894
        %v1896 = vmul.f32 %v1698, 1.442695
        %v1897 = vpow.pop %v1896
        %v1898 = vmul.f32 %v1699, 1.442695
        %v1899 = vpow.pop %v1898
        %v1900 = vmul.f32 %v1700, 1.442695
        %v1901 = vpow.pop %v1900
        %v1902 = vmul.f32 %v1701, 1.442695
        %v1903 = vpow.pop %v1902
        %v1904 = vmul.f32 %v1702, 1.442695
        %v1905 = vpow.pop %v1904
        %v1906 = vmul.f32 %v1703, 1.442695
        %v1907 = vpow.pop %v1906
        %v1908 = vmul.f32 %v1704, 1.442695
        %v1909 = vpow.pop %v1908
        %v1910 = vmul.f32 %v1705, 1.442695
        %v1911 = vpow.pop %v1910
        %v1912 = vmul.f32 %v1706, 1.442695
        %v1913 = vpow.pop %v1912
        %v1914 = vmul.f32 %v1707, 1.442695
        %v1915 = vpow.pop %v1914
        %v1916 = vmul.f32 %v1708, 1.442695
        %v1917 = vpow.pop %v1916
        %v1918 = vmul.f32 %v1709, 1.442695
        %v1919 = vpow.pop %v1918
        %v1920 = vmul.f32 %v1710, 1.442695
        %v1921 = vpow.pop %v1920
        %v1922 = vmul.f32 %v1711, 1.442695
        %v1923 = vpow.pop %v1922
        %v1924 = vmul.f32 %v1712, 1.442695
        %v1925 = vpow.pop %v1924
        %v1926 = vmul.f32 %v1713, 1.442695
        %v1927 = vpow.pop %v1926
        %v1928 = vmul.f32 %v1714, 1.442695
        %v1929 = vpow.pop %v1928
        %v1930 = vmul.f32 %v1715, 1.442695
        %v1931 = vpow.pop %v1930
        %v1932 = vmul.f32 %v1716, 1.442695
        %v1933 = vpow.pop %v1932
        %v1934 = vmul.f32 %v1717, 1.442695
        %v1935 = vpow.pop %v1934
        %v1936 = vmul.f32 %v1718, 1.442695
        %v1937 = vpow.pop %v1936
        %v1938 = vmul.f32 %v1719, 1.442695
        %v1939 = vpow.pop %v1938
        %v1940 = vmul.f32 %v1720, 1.442695
        %v1941 = vpow.pop %v1940
        %v1942 = vmul.f32 %v1721, 1.442695
        %v1943 = vpow.pop %v1942
        %v1944 = vmul.f32 %v1722, 1.442695
        %v1945 = vpow.pop %v1944
        %v1946 = vmul.f32 %v1723, 1.442695
        %v1947 = vpow.pop %v1946
        %v1948 = vmul.f32 %v1724, 1.442695
        %v1949 = vpow.pop %v1948
        %v1950 = vmul.f32 %v1725, 1.442695
        %v1951 = vpow.pop %v1950
        %v1952 = vmul.f32 %v1726, 1.442695
        %v1953 = vpow.pop %v1952
        %v1954 = vmul.f32 %v1727, 1.442695
        %v1955 = vpow.pop %v1954
        %v1956 = vmul.f32 %v1728, 1.442695
        %v1957 = vpow.pop %v1956
        %v1958 = vmul.f32 %v1729, 1.442695
        %v1959 = vpow.pop %v1958
        %v1960 = vmul.f32 %v1730, 1.442695
        %v1961 = vpow.pop %v1960
        %v1962 = vmul.f32 %v1731, 1.442695
        %v1963 = vpow.pop %v1962
        %v1964 = vmul.f32 %v1732, 1.442695
        %v1965 = vpow.pop %v1964
        %v1966 = vmul.f32 %v1733, 1.442695
        %v1967 = vpow.pop %v1966
        %v1968 = vmul.f32 %v1734, 1.442695
        %v1969 = vpow.pop %v1968
        %v1970 = vmul.f32 %v1735, 1.442695
        %v1971 = vpow.pop %v1970
        %v1972 = vmul.f32 %v1736, 1.442695
        %v1973 = vpow.pop %v1972
        %v1974 = vmul.f32 %v1737, 1.442695
        %v1975 = vpow.pop %v1974
        %v1976 = vmul.f32 %v1738, 1.442695
        %v1977 = vpow.pop %v1976
        %v1978 = vmul.f32 %v1739, 1.442695
        %v1979 = vpow.pop %v1978
        %v1980 = vmul.f32 %v1740, 1.442695
        %v1981 = vpow.pop %v1980
        %v1982 = vmul.f32 %v1741, 1.442695
        %v1983 = vpow.pop %v1982
        %v1984 = vmul.f32 %v1742, 1.442695
        %v1985 = vpow.pop %v1984
        %v1986 = vmul.f32 %v1743, 1.442695
        %v1987 = vpow.pop %v1986
        %v1988 = vmul.f32 %v1744, 1.442695
        %v1989 = vpow.pop %v1988
        %v1990 = vmul.f32 %v1745, 1.442695
        %v1991 = vpow.pop %v1990
        %v1992 = vmul.f32 %v1746, 1.442695
        %v1993 = vpow.pop %v1992
        %v1994 = vmul.f32 %v1747, 1.442695
        %v1995 = vpow.pop %v1994
        %v1996 = vmul.f32 %v1748, 1.442695
        %v1997 = vpow.pop %v1996
        %v1998 = vmul.f32 %v1749, 1.442695
        %v1999 = vpow.pop %v1998
        %v2000 = vmul.f32 %v1750, 1.442695
        %v2001 = vpow.pop %v2000
        %v2002 = vmul.f32 %v1751, 1.442695
        %v2003 = vpow.pop %v2002
        %v2004 = vmul.f32 %v1752, 1.442695
        %v2005 = vpow.pop %v2004
        %v2006 = vmul.f32 %v1753, 1.442695
        %v2007 = vpow.pop %v2006
        %v2008 = vmul.f32 %v1754, 1.442695
        %v2009 = vpow.pop %v2008
        %v2010 = vmul.f32 %v1755, 1.442695
        %v2011 = vpow.pop %v2010
        %v2012 = vsel %vm1372, 1.0, %v1757
        %v2013 = vsel %vm1373, 1.0, %v1759
        %v2014 = vsel %vm1374, 1.0, %v1761
        %v2015 = vsel %vm1375, 1.0, %v1763
        %v2016 = vsel %vm1376, 1.0, %v1765
        %v2017 = vsel %vm1377, 1.0, %v1767
        %v2018 = vsel %vm1378, 1.0, %v1769
        %v2019 = vsel %vm1379, 1.0, %v1771
        %v2020 = vsel %vm1380, 1.0, %v1773
        %v2021 = vsel %vm1381, 1.0, %v1775
        %v2022 = vsel %vm1382, 1.0, %v1777
        %v2023 = vsel %vm1383, 1.0, %v1779
        %v2024 = vsel %vm1384, 1.0, %v1781
        %v2025 = vsel %vm1385, 1.0, %v1783
        %v2026 = vsel %vm1386, 1.0, %v1785
        %v2027 = vsel %vm1387, 1.0, %v1787
        %v2028 = vsel %vm1388, 1.0, %v1789
        %v2029 = vsel %vm1389, 1.0, %v1791
        %v2030 = vsel %vm1390, 1.0, %v1793
        %v2031 = vsel %vm1391, 1.0, %v1795
        %v2032 = vsel %vm1392, 1.0, %v1797
        %v2033 = vsel %vm1393, 1.0, %v1799
        %v2034 = vsel %vm1394, 1.0, %v1801
        %v2035 = vsel %vm1395, 1.0, %v1803
        %v2036 = vsel %vm1396, 1.0, %v1805
        %v2037 = vsel %vm1397, 1.0, %v1807
        %v2038 = vsel %vm1398, 1.0, %v1809
        %v2039 = vsel %vm1399, 1.0, %v1811
        %v2040 = vsel %vm1400, 1.0, %v1813
        %v2041 = vsel %vm1401, 1.0, %v1815
        %v2042 = vsel %vm1402, 1.0, %v1817
        %v2043 = vsel %vm1403, 1.0, %v1819
        %v2044 = vsel %vm1404, 1.0, %v1821
        %v2045 = vsel %vm1405, 1.0, %v1823
        %v2046 = vsel %vm1406, 1.0, %v1825
        %v2047 = vsel %vm1407, 1.0, %v1827
        %v2048 = vsel %vm1408, 1.0, %v1829
        %v2049 = vsel %vm1409, 1.0, %v1831
        %v2050 = vsel %vm1410, 1.0, %v1833
        %v2051 = vsel %vm1411, 1.0, %v1835
        %v2052 = vsel %vm1412, 1.0, %v1837
        %v2053 = vsel %vm1413, 1.0, %v1839
        %v2054 = vsel %vm1414, 1.0, %v1841
        %v2055 = vsel %vm1415, 1.0, %v1843
        %v2056 = vsel %vm1416, 1.0, %v1845
        %v2057 = vsel %vm1417, 1.0, %v1847
        %v2058 = vsel %vm1418, 1.0, %v1849
        %v2059 = vsel %vm1419, 1.0, %v1851
        %v2060 = vsel %vm1420, 1.0, %v1853
        %v2061 = vsel %vm1421, 1.0, %v1855
        %v2062 = vsel %vm1422, 1.0, %v1857
        %v2063 = vsel %vm1423, 1.0, %v1859
        %v2064 = vsel %vm1424, 1.0, %v1861
        %v2065 = vsel %vm1425, 1.0, %v1863
        %v2066 = vsel %vm1426, 1.0, %v1865
        %v2067 = vsel %vm1427, 1.0, %v1867
        %v2068 = vsel %vm1428, 1.0, %v1869
        %v2069 = vsel %vm1429, 1.0, %v1871
        %v2070 = vsel %vm1430, 1.0, %v1873
        %v2071 = vsel %vm1431, 1.0, %v1875
        %v2072 = vsel %vm1432, 1.0, %v1877
        %v2073 = vsel %vm1433, 1.0, %v1879
        %v2074 = vsel %vm1434, 1.0, %v1881
        %v2075 = vsel %vm1435, 1.0, %v1883
        %v2076 = vsel %vm1436, 1.0, %v1885
        %v2077 = vsel %vm1437, 1.0, %v1887
        %v2078 = vsel %vm1438, 1.0, %v1889
        %v2079 = vsel %vm1439, 1.0, %v1891
        %v2080 = vsel %vm1440, 1.0, %v1893
        %v2081 = vsel %vm1441, 1.0, %v1895
        %v2082 = vsel %vm1442, 1.0, %v1897
        %v2083 = vsel %vm1443, 1.0, %v1899
        %v2084 = vsel %vm1444, 1.0, %v1901
        %v2085 = vsel %vm1445, 1.0, %v1903
        %v2086 = vsel %vm1446, 1.0, %v1905
        %v2087 = vsel %vm1447, 1.0, %v1907
        %v2088 = vsel %vm1448, 1.0, %v1909
        %v2089 = vsel %vm1449, 1.0, %v1911
        %v2090 = vsel %vm1450, 1.0, %v1913
        %v2091 = vsel %vm1451, 1.0, %v1915
        %v2092 = vsel %vm1452, 1.0, %v1917
        %v2093 = vsel %vm1453, 1.0, %v1919
        %v2094 = vsel %vm1454, 1.0, %v1921
        %v2095 = vsel %vm1455, 1.0, %v1923
        %v2096 = vsel %vm1456, 1.0, %v1925
        %v2097 = vsel %vm1457, 1.0, %v1927
        %v2098 = vsel %vm1458, 1.0, %v1929
        %v2099 = vsel %vm1459, 1.0, %v1931
        %v2100 = vsel %vm1460, 1.0, %v1933
        %v2101 = vsel %vm1461, 1.0, %v1935
        %v2102 = vsel %vm1462, 1.0, %v1937
        %v2103 = vsel %vm1463, 1.0, %v1939
        %v2104 = vsel %vm1464, 1.0, %v1941
        %v2105 = vsel %vm1465, 1.0, %v1943
        %v2106 = vsel %vm1466, 1.0, %v1945
        %v2107 = vsel %vm1467, 1.0, %v1947
        %v2108 = vsel %vm1468, 1.0, %v1949
        %v2109 = vsel %vm1469, 1.0, %v1951
        %v2110 = vsel %vm1470, 1.0, %v1953
        %v2111 = vsel %vm1471, 1.0, %v1955
        %v2112 = vsel %vm1472, 1.0, %v1957
        %v2113 = vsel %vm1473, 1.0, %v1959
        %v2114 = vsel %vm1474, 1.0, %v1961
        %v2115 = vsel %vm1475, 1.0, %v1963
        %v2116 = vsel %vm1476, 1.0, %v1965
        %v2117 = vsel %vm1477, 1.0, %v1967
        %v2118 = vsel %vm1478, 1.0, %v1969
        %v2119 = vsel %vm1479, 1.0, %v1971
        %v2120 = vsel %vm1480, 1.0, %v1973
        %v2121 = vsel %vm1481, 1.0, %v1975
        %v2122 = vsel %vm1482, 1.0, %v1977
        %v2123 = vsel %vm1483, 1.0, %v1979
        %v2124 = vsel %vm1484, 1.0, %v1981
        %v2125 = vsel %vm1485, 1.0, %v1983
        %v2126 = vsel %vm1486, 1.0, %v1985
        %v2127 = vsel %vm1487, 1.0, %v1987
        %v2128 = vsel %vm1488, 1.0, %v1989
        %v2129 = vsel %vm1489, 1.0, %v1991
        %v2130 = vsel %vm1490, 1.0, %v1993
        %v2131 = vsel %vm1491, 1.0, %v1995
        %v2132 = vsel %vm1492, 1.0, %v1997
        %v2133 = vsel %vm1493, 1.0, %v1999
        %v2134 = vsel %vm1494, 1.0, %v2001
        %v2135 = vsel %vm1495, 1.0, %v2003
        %v2136 = vsel %vm1496, 1.0, %v2005
        %v2137 = vsel %vm1497, 1.0, %v2007
        %v2138 = vsel %vm1498, 1.0, %v2009
        %v2139 = vsel %vm1499, 1.0, %v2011
        %v2140 = vadd.f32 %v1757, 1.0
        %v2141 = vadd.f32 %v1759, 1.0
        %v2142 = vadd.f32 %v1761, 1.0
        %v2143 = vadd.f32 %v1763, 1.0
        %v2144 = vadd.f32 %v1765, 1.0
        %v2145 = vadd.f32 %v1767, 1.0
        %v2146 = vadd.f32 %v1769, 1.0
        %v2147 = vadd.f32 %v1771, 1.0
        %v2148 = vadd.f32 %v1773, 1.0
        %v2149 = vadd.f32 %v1775, 1.0
        %v2150 = vadd.f32 %v1777, 1.0
        %v2151 = vadd.f32 %v1779, 1.0
        %v2152 = vadd.f32 %v1781, 1.0
        %v2153 = vadd.f32 %v1783, 1.0
        %v2154 = vadd.f32 %v1785, 1.0
        %v2155 = vadd.f32 %v1787, 1.0
        %v2156 = vadd.f32 %v1789, 1.0
        %v2157 = vadd.f32 %v1791, 1.0
        %v2158 = vadd.f32 %v1793, 1.0
        %v2159 = vadd.f32 %v1795, 1.0
        %v2160 = vadd.f32 %v1797, 1.0
        %v2161 = vadd.f32 %v1799, 1.0
        %v2162 = vadd.f32 %v1801, 1.0
        %v2163 = vadd.f32 %v1803, 1.0
        %v2164 = vadd.f32 %v1805, 1.0
        %v2165 = vadd.f32 %v1807, 1.0
        %v2166 = vadd.f32 %v1809, 1.0
        %v2167 = vadd.f32 %v1811, 1.0
        %v2168 = vadd.f32 %v1813, 1.0
        %v2169 = vadd.f32 %v1815, 1.0
        %v2170 = vadd.f32 %v1817, 1.0
        %v2171 = vadd.f32 %v1819, 1.0
        %v2172 = vadd.f32 %v1821, 1.0
        %v2173 = vadd.f32 %v1823, 1.0
        %v2174 = vadd.f32 %v1825, 1.0
        %v2175 = vadd.f32 %v1827, 1.0
        %v2176 = vadd.f32 %v1829, 1.0
        %v2177 = vadd.f32 %v1831, 1.0
        %v2178 = vadd.f32 %v1833, 1.0
        %v2179 = vadd.f32 %v1835, 1.0
        %v2180 = vadd.f32 %v1837, 1.0
        %v2181 = vadd.f32 %v1839, 1.0
        %v2182 = vadd.f32 %v1841, 1.0
        %v2183 = vadd.f32 %v1843, 1.0
        %v2184 = vadd.f32 %v1845, 1.0
        %v2185 = vadd.f32 %v1847, 1.0
        %v2186 = vadd.f32 %v1849, 1.0
        %v2187 = vadd.f32 %v1851, 1.0
        %v2188 = vadd.f32 %v1853, 1.0
        %v2189 = vadd.f32 %v1855, 1.0
        %v2190 = vadd.f32 %v1857, 1.0
        %v2191 = vadd.f32 %v1859, 1.0
        %v2192 = vadd.f32 %v1861, 1.0
        %v2193 = vadd.f32 %v1863, 1.0
        %v2194 = vadd.f32 %v1865, 1.0
        %v2195 = vadd.f32 %v1867, 1.0
        %v2196 = vadd.f32 %v1869, 1.0
        %v2197 = vadd.f32 %v1871, 1.0
        %v2198 = vadd.f32 %v1873, 1.0
        %v2199 = vadd.f32 %v1875, 1.0
        %v2200 = vadd.f32 %v1877, 1.0
        %v2201 = vadd.f32 %v1879, 1.0
        %v2202 = vadd.f32 %v1881, 1.0
        %v2203 = vadd.f32 %v1883, 1.0
        %v2204 = vadd.f32 %v1885, 1.0
        %v2205 = vadd.f32 %v1887, 1.0
        %v2206 = vadd.f32 %v1889, 1.0
        %v2207 = vadd.f32 %v1891, 1.0
        %v2208 = vadd.f32 %v1893, 1.0
        %v2209 = vadd.f32 %v1895, 1.0
        %v2210 = vadd.f32 %v1897, 1.0
        %v2211 = vadd.f32 %v1899, 1.0
        %v2212 = vadd.f32 %v1901, 1.0
        %v2213 = vadd.f32 %v1903, 1.0
        %v2214 = vadd.f32 %v1905, 1.0
        %v2215 = vadd.f32 %v1907, 1.0
        %v2216 = vadd.f32 %v1909, 1.0
        %v2217 = vadd.f32 %v1911, 1.0
        %v2218 = vadd.f32 %v1913, 1.0
        %v2219 = vadd.f32 %v1915, 1.0
        %v2220 = vadd.f32 %v1917, 1.0
        %v2221 = vadd.f32 %v1919, 1.0
        %v2222 = vadd.f32 %v1921, 1.0
        %v2223 = vadd.f32 %v1923, 1.0
        %v2224 = vadd.f32 %v1925, 1.0
        %v2225 = vadd.f32 %v1927, 1.0
        %v2226 = vadd.f32 %v1929, 1.0
        %v2227 = vadd.f32 %v1931, 1.0
        %v2228 = vadd.f32 %v1933, 1.0
        %v2229 = vadd.f32 %v1935, 1.0
        %v2230 = vadd.f32 %v1937, 1.0
        %v2231 = vadd.f32 %v1939, 1.0
        %v2232 = vadd.f32 %v1941, 1.0
        %v2233 = vadd.f32 %v1943, 1.0
        %v2234 = vadd.f32 %v1945, 1.0
        %v2235 = vadd.f32 %v1947, 1.0
        %v2236 = vadd.f32 %v1949, 1.0
        %v2237 = vadd.f32 %v1951, 1.0
        %v2238 = vadd.f32 %v1953, 1.0
        %v2239 = vadd.f32 %v1955, 1.0
        %v2240 = vadd.f32 %v1957, 1.0
        %v2241 = vadd.f32 %v1959, 1.0
        %v2242 = vadd.f32 %v1961, 1.0
        %v2243 = vadd.f32 %v1963, 1.0
        %v2244 = vadd.f32 %v1965, 1.0
        %v2245 = vadd.f32 %v1967, 1.0
        %v2246 = vadd.f32 %v1969, 1.0
        %v2247 = vadd.f32 %v1971, 1.0
        %v2248 = vadd.f32 %v1973, 1.0
        %v2249 = vadd.f32 %v1975, 1.0
        %v2250 = vadd.f32 %v1977, 1.0
        %v2251 = vadd.f32 %v1979, 1.0
        %v2252 = vadd.f32 %v1981, 1.0
        %v2253 = vadd.f32 %v1983, 1.0
        %v2254 = vadd.f32 %v1985, 1.0
        %v2255 = vadd.f32 %v1987, 1.0
        %v2256 = vadd.f32 %v1989, 1.0
        %v2257 = vadd.f32 %v1991, 1.0
        %v2258 = vadd.f32 %v1993, 1.0
        %v2259 = vadd.f32 %v1995, 1.0
        %v2260 = vadd.f32 %v1997, 1.0
        %v2261 = vadd.f32 %v1999, 1.0
        %v2262 = vadd.f32 %v2001, 1.0
        %v2263 = vadd.f32 %v2003, 1.0
        %v2264 = vadd.f32 %v2005, 1.0
        %v2265 = vadd.f32 %v2007, 1.0
        %v2266 = vadd.f32 %v2009, 1.0
        %v2267 = vadd.f32 %v2011, 1.0
        %v2268 = vrcp.pop %v2140
        %v2269 = vmul.f32 %v2012, %v2268
        %v2270 = vrcp.pop %v2141
        %v2271 = vmul.f32 %v2013, %v2270
        %v2272 = vrcp.pop %v2142
        %v2273 = vmul.f32 %v2014, %v2272
        %v2274 = vrcp.pop %v2143
        %v2275 = vmul.f32 %v2015, %v2274
        %v2276 = vrcp.pop %v2144
        %v2277 = vmul.f32 %v2016, %v2276
        %v2278 = vrcp.pop %v2145
        %v2279 = vmul.f32 %v2017, %v2278
        %v2280 = vrcp.pop %v2146
        %v2281 = vmul.f32 %v2018, %v2280
        %v2282 = vrcp.pop %v2147
        %v2283 = vmul.f32 %v2019, %v2282
        %v2284 = vrcp.pop %v2148
        %v2285 = vmul.f32 %v2020, %v2284
        %v2286 = vrcp.pop %v2149
        %v2287 = vmul.f32 %v2021, %v2286
        %v2288 = vrcp.pop %v2150
        %v2289 = vmul.f32 %v2022, %v2288
        %v2290 = vrcp.pop %v2151
        %v2291 = vmul.f32 %v2023, %v2290
        %v2292 = vrcp.pop %v2152
        %v2293 = vmul.f32 %v2024, %v2292
        %v2294 = vrcp.pop %v2153
        %v2295 = vmul.f32 %v2025, %v2294
        %v2296 = vrcp.pop %v2154
        %v2297 = vmul.f32 %v2026, %v2296
        %v2298 = vrcp.pop %v2155
        %v2299 = vmul.f32 %v2027, %v2298
        %v2300 = vrcp.pop %v2156
        %v2301 = vmul.f32 %v2028, %v2300
        %v2302 = vrcp.pop %v2157
        %v2303 = vmul.f32 %v2029, %v2302
        %v2304 = vrcp.pop %v2158
        %v2305 = vmul.f32 %v2030, %v2304
        %v2306 = vrcp.pop %v2159
        %v2307 = vmul.f32 %v2031, %v2306
        %v2308 = vrcp.pop %v2160
        %v2309 = vmul.f32 %v2032, %v2308
        %v2310 = vrcp.pop %v2161
        %v2311 = vmul.f32 %v2033, %v2310
        %v2312 = vrcp.pop %v2162
        %v2313 = vmul.f32 %v2034, %v2312
        %v2314 = vrcp.pop %v2163
        %v2315 = vmul.f32 %v2035, %v2314
        %v2316 = vrcp.pop %v2164
        %v2317 = vmul.f32 %v2036, %v2316
        %v2318 = vrcp.pop %v2165
        %v2319 = vmul.f32 %v2037, %v2318
        %v2320 = vrcp.pop %v2166
        %v2321 = vmul.f32 %v2038, %v2320
        %v2322 = vrcp.pop %v2167
        %v2323 = vmul.f32 %v2039, %v2322
        %v2324 = vrcp.pop %v2168
        %v2325 = vmul.f32 %v2040, %v2324
        %v2326 = vrcp.pop %v2169
        %v2327 = vmul.f32 %v2041, %v2326
        %v2328 = vrcp.pop %v2170
        %v2329 = vmul.f32 %v2042, %v2328
        %v2330 = vrcp.pop %v2171
        %v2331 = vmul.f32 %v2043, %v2330
        %v2332 = vrcp.pop %v2172
        %v2333 = vmul.f32 %v2044, %v2332
        %v2334 = vrcp.pop %v2173
        %v2335 = vmul.f32 %v2045, %v2334
        %v2336 = vrcp.pop %v2174
        %v2337 = vmul.f32 %v2046, %v2336
        %v2338 = vrcp.pop %v2175
        %v2339 = vmul.f32 %v2047, %v2338
        %v2340 = vrcp.pop %v2176
        %v2341 = vmul.f32 %v2048, %v2340
        %v2342 = vrcp.pop %v2177
        %v2343 = vmul.f32 %v2049, %v2342
        %v2344 = vrcp.pop %v2178
        %v2345 = vmul.f32 %v2050, %v2344
        %v2346 = vrcp.pop %v2179
        %v2347 = vmul.f32 %v2051, %v2346
        %v2348 = vrcp.pop %v2180
        %v2349 = vmul.f32 %v2052, %v2348
        %v2350 = vrcp.pop %v2181
        %v2351 = vmul.f32 %v2053, %v2350
        %v2352 = vrcp.pop %v2182
        %v2353 = vmul.f32 %v2054, %v2352
        %v2354 = vrcp.pop %v2183
        %v2355 = vmul.f32 %v2055, %v2354
        %v2356 = vrcp.pop %v2184
        %v2357 = vmul.f32 %v2056, %v2356
        %v2358 = vrcp.pop %v2185
        %v2359 = vmul.f32 %v2057, %v2358
        %v2360 = vrcp.pop %v2186
        %v2361 = vmul.f32 %v2058, %v2360
        %v2362 = vrcp.pop %v2187
        %v2363 = vmul.f32 %v2059, %v2362
        %v2364 = vrcp.pop %v2188
        %v2365 = vmul.f32 %v2060, %v2364
        %v2366 = vrcp.pop %v2189
        %v2367 = vmul.f32 %v2061, %v2366
        %v2368 = vrcp.pop %v2190
        %v2369 = vmul.f32 %v2062, %v2368
        %v2370 = vrcp.pop %v2191
        %v2371 = vmul.f32 %v2063, %v2370
        %v2372 = vrcp.pop %v2192
        %v2373 = vmul.f32 %v2064, %v2372
        %v2374 = vrcp.pop %v2193
        %v2375 = vmul.f32 %v2065, %v2374
        %v2376 = vrcp.pop %v2194
        %v2377 = vmul.f32 %v2066, %v2376
        %v2378 = vrcp.pop %v2195
        %v2379 = vmul.f32 %v2067, %v2378
        %v2380 = vrcp.pop %v2196
        %v2381 = vmul.f32 %v2068, %v2380
        %v2382 = vrcp.pop %v2197
        %v2383 = vmul.f32 %v2069, %v2382
        %v2384 = vrcp.pop %v2198
        %v2385 = vmul.f32 %v2070, %v2384
        %v2386 = vrcp.pop %v2199
        %v2387 = vmul.f32 %v2071, %v2386
        %v2388 = vrcp.pop %v2200
        %v2389 = vmul.f32 %v2072, %v2388
        %v2390 = vrcp.pop %v2201
        %v2391 = vmul.f32 %v2073, %v2390
        %v2392 = vrcp.pop %v2202
        %v2393 = vmul.f32 %v2074, %v2392
        %v2394 = vrcp.pop %v2203
        %v2395 = vmul.f32 %v2075, %v2394
        %v2396 = vrcp.pop %v2204
        %v2397 = vmul.f32 %v2076, %v2396
        %v2398 = vrcp.pop %v2205
        %v2399 = vmul.f32 %v2077, %v2398
        %v2400 = vrcp.pop %v2206
        %v2401 = vmul.f32 %v2078, %v2400
        %v2402 = vrcp.pop %v2207
        %v2403 = vmul.f32 %v2079, %v2402
        %v2404 = vrcp.pop %v2208
        %v2405 = vmul.f32 %v2080, %v2404
        %v2406 = vrcp.pop %v2209
        %v2407 = vmul.f32 %v2081, %v2406
        %v2408 = vrcp.pop %v2210
        %v2409 = vmul.f32 %v2082, %v2408
        %v2410 = vrcp.pop %v2211
        %v2411 = vmul.f32 %v2083, %v2410
        %v2412 = vrcp.pop %v2212
        %v2413 = vmul.f32 %v2084, %v2412
        %v2414 = vrcp.pop %v2213
        %v2415 = vmul.f32 %v2085, %v2414
        %v2416 = vrcp.pop %v2214
        %v2417 = vmul.f32 %v2086, %v2416
        %v2418 = vrcp.pop %v2215
        %v2419 = vmul.f32 %v2087, %v2418
        %v2420 = vrcp.pop %v2216
        %v2421 = vmul.f32 %v2088, %v2420
        %v2422 = vrcp.pop %v2217
        %v2423 = vmul.f32 %v2089, %v2422
        %v2424 = vrcp.pop %v2218
        %v2425 = vmul.f32 %v2090, %v2424
        %v2426 = vrcp.pop %v2219
        %v2427 = vmul.f32 %v2091, %v2426
        %v2428 = vrcp.pop %v2220
        %v2429 = vmul.f32 %v2092, %v2428
        %v2430 = vrcp.pop %v2221
        %v2431 = vmul.f32 %v2093, %v2430
        %v2432 = vrcp.pop %v2222
        %v2433 = vmul.f32 %v2094, %v2432
        %v2434 = vrcp.pop %v2223
        %v2435 = vmul.f32 %v2095, %v2434
        %v2436 = vrcp.pop %v2224
        %v2437 = vmul.f32 %v2096, %v2436
        %v2438 = vrcp.pop %v2225
        %v2439 = vmul.f32 %v2097, %v2438
        %v2440 = vrcp.pop %v2226
        %v2441 = vmul.f32 %v2098, %v2440
        %v2442 = vrcp.pop %v2227
        %v2443 = vmul.f32 %v2099, %v2442
        %v2444 = vrcp.pop %v2228
        %v2445 = vmul.f32 %v2100, %v2444
        %v2446 = vrcp.pop %v2229
        %v2447 = vmul.f32 %v2101, %v2446
        %v2448 = vrcp.pop %v2230
        %v2449 = vmul.f32 %v2102, %v2448
        %v2450 = vrcp.pop %v2231
        %v2451 = vmul.f32 %v2103, %v2450
        %v2452 = vrcp.pop %v2232
        %v2453 = vmul.f32 %v2104, %v2452
        %v2454 = vrcp.pop %v2233
        %v2455 = vmul.f32 %v2105, %v2454
        %v2456 = vrcp.pop %v2234
        %v2457 = vmul.f32 %v2106, %v2456
        %v2458 = vrcp.pop %v2235
        %v2459 = vmul.f32 %v2107, %v2458
        %v2460 = vrcp.pop %v2236
        %v2461 = vmul.f32 %v2108, %v2460
        %v2462 = vrcp.pop %v2237
        %v2463 = vmul.f32 %v2109, %v2462
        %v2464 = vrcp.pop %v2238
        %v2465 = vmul.f32 %v2110, %v2464
        %v2466 = vrcp.pop %v2239
        %v2467 = vmul.f32 %v2111, %v2466
        %v2468 = vrcp.pop %v2240
        %v2469 = vmul.f32 %v2112, %v2468
        %v2470 = vrcp.pop %v2241
        %v2471 = vmul.f32 %v2113, %v2470
        %v2472 = vrcp.pop %v2242
        %v2473 = vmul.f32 %v2114, %v2472
        %v2474 = vrcp.pop %v2243
        %v2475 = vmul.f32 %v2115, %v2474
        %v2476 = vrcp.pop %v2244
        %v2477 = vmul.f32 %v2116, %v2476
        %v2478 = vrcp.pop %v2245
        %v2479 = vmul.f32 %v2117, %v2478
        %v2480 = vrcp.pop %v2246
        %v2481 = vmul.f32 %v2118, %v2480
        %v2482 = vrcp.pop %v2247
        %v2483 = vmul.f32 %v2119, %v2482
        %v2484 = vrcp.pop %v2248
        %v2485 = vmul.f32 %v2120, %v2484
        %v2486 = vrcp.pop %v2249
        %v2487 = vmul.f32 %v2121, %v2486
        %v2488 = vrcp.pop %v2250
        %v2489 = vmul.f32 %v2122, %v2488
        %v2490 = vrcp.pop %v2251
        %v2491 = vmul.f32 %v2123, %v2490
        %v2492 = vrcp.pop %v2252
        %v2493 = vmul.f32 %v2124, %v2492
        %v2494 = vrcp.pop %v2253
        %v2495 = vmul.f32 %v2125, %v2494
        %v2496 = vrcp.pop %v2254
        %v2497 = vmul.f32 %v2126, %v2496
        %v2498 = vrcp.pop %v2255
        %v2499 = vmul.f32 %v2127, %v2498
        %v2500 = vrcp.pop %v2256
        %v2501 = vmul.f32 %v2128, %v2500
        %v2502 = vrcp.pop %v2257
        %v2503 = vmul.f32 %v2129, %v2502
        %v2504 = vrcp.pop %v2258
        %v2505 = vmul.f32 %v2130, %v2504
        %v2506 = vrcp.pop %v2259
        %v2507 = vmul.f32 %v2131, %v2506
        %v2508 = vrcp.pop %v2260
        %v2509 = vmul.f32 %v2132, %v2508
        %v2510 = vrcp.pop %v2261
        %v2511 = vmul.f32 %v2133, %v2510
        %v2512 = vrcp.pop %v2262
        %v2513 = vmul.f32 %v2134, %v2512
        %v2514 = vrcp.pop %v2263
        %v2515 = vmul.f32 %v2135, %v2514
        %v2516 = vrcp.pop %v2264
        %v2517 = vmul.f32 %v2136, %v2516
        %v2518 = vrcp.pop %v2265
        %v2519 = vmul.f32 %v2137, %v2518
        %v2520 = vrcp.pop %v2266
        %v2521 = vmul.f32 %v2138, %v2520
        %v2522 = vrcp.pop %v2267
        %v2523 = vmul.f32 %v2139, %v2522
        %2524 = vst [vmem:[%s188] sm:$0xff] %v2269
        %2525 = vst [vmem:[%s188 + $0x8] sm:$0xff] %v2271
        %2526 = vst [vmem:[%s188 + $0x10] sm:$0xff] %v2273
        %2527 = vst [vmem:[%s188 + $0x18] sm:$0xff] %v2275
        %2528 = vst [vmem:[%s188 + $0x20] sm:$0xff] %v2277
        %2529 = vst [vmem:[%s188 + $0x28] sm:$0xff] %v2279
        %2530 = vst [vmem:[%s188 + $0x30] sm:$0xff] %v2281
        %2531 = vst [vmem:[%s188 + $0x38] sm:$0xff] %v2283
        %2532 = vst [vmem:[%s188 + $0x40] sm:$0xff] %v2285
        %2533 = vst [vmem:[%s188 + $0x48] sm:$0xff] %v2287
        %2534 = vst [vmem:[%s188 + $0x50] sm:$0xff] %v2289
        %2535 = vst [vmem:[%s188 + $0x58] sm:$0xff] %v2291
        %2536 = vst [vmem:[%s188 + $0x60] sm:$0xff] %v2293
        %2537 = vst [vmem:[%s188 + $0x68] sm:$0xff] %v2295
        %2538 = vst [vmem:[%s188 + $0x70] sm:$0xff] %v2297
        %2539 = vst [vmem:[%s188 + $0x78] sm:$0xff] %v2299
        %2540 = vst [vmem:[%s188 + $0x80] sm:$0xff] %v2301
        %2541 = vst [vmem:[%s188 + $0x88] sm:$0xff] %v2303
        %2542 = vst [vmem:[%s188 + $0x90] sm:$0xff] %v2305
        %2543 = vst [vmem:[%s188 + $0x98] sm:$0xff] %v2307
        %2544 = vst [vmem:[%s188 + $0xa0] sm:$0xff] %v2309
        %2545 = vst [vmem:[%s188 + $0xa8] sm:$0xff] %v2311
        %2546 = vst [vmem:[%s188 + $0xb0] sm:$0xff] %v2313
        %2547 = vst [vmem:[%s188 + $0xb8] sm:$0xff] %v2315
        %2548 = vst [vmem:[%s188 + $0xc0] sm:$0xff] %v2317
        %2549 = vst [vmem:[%s188 + $0xc8] sm:$0xff] %v2319
        %2550 = vst [vmem:[%s188 + $0xd0] sm:$0xff] %v2321
        %2551 = vst [vmem:[%s188 + $0xd8] sm:$0xff] %v2323
        %2552 = vst [vmem:[%s188 + $0xe0] sm:$0xff] %v2325
        %2553 = vst [vmem:[%s188 + $0xe8] sm:$0xff] %v2327
        %2554 = vst [vmem:[%s188 + $0xf0] sm:$0xff] %v2329
        %2555 = vst [vmem:[%s188 + $0xf8] sm:$0xff] %v2331
        %2556 = vst [vmem:[%s188 + $0x100] sm:$0xff] %v2333
        %2557 = vst [vmem:[%s188 + $0x108] sm:$0xff] %v2335
        %2558 = vst [vmem:[%s188 + $0x110] sm:$0xff] %v2337
        %2559 = vst [vmem:[%s188 + $0x118] sm:$0xff] %v2339
        %2560 = vst [vmem:[%s188 + $0x120] sm:$0xff] %v2341
        %2561 = vst [vmem:[%s188 + $0x128] sm:$0xff] %v2343
        %2562 = vst [vmem:[%s188 + $0x130] sm:$0xff] %v2345
        %2563 = vst [vmem:[%s188 + $0x138] sm:$0xff] %v2347
        %2564 = vst [vmem:[%s188 + $0x140] sm:$0xff] %v2349
        %2565 = vst [vmem:[%s188 + $0x148] sm:$0xff] %v2351
        %2566 = vst [vmem:[%s188 + $0x150] sm:$0xff] %v2353
        %2567 = vst [vmem:[%s188 + $0x158] sm:$0xff] %v2355
        %2568 = vst [vmem:[%s188 + $0x160] sm:$0xff] %v2357
        %2569 = vst [vmem:[%s188 + $0x168] sm:$0xff] %v2359
        %2570 = vst [vmem:[%s188 + $0x170] sm:$0xff] %v2361
        %2571 = vst [vmem:[%s188 + $0x178] sm:$0xff] %v2363
        %2572 = vst [vmem:[%s188 + $0x180] sm:$0xff] %v2365
        %2573 = vst [vmem:[%s188 + $0x188] sm:$0xff] %v2367
        %2574 = vst [vmem:[%s188 + $0x190] sm:$0xff] %v2369
        %2575 = vst [vmem:[%s188 + $0x198] sm:$0xff] %v2371
        %2576 = vst [vmem:[%s188 + $0x1a0] sm:$0xff] %v2373
        %2577 = vst [vmem:[%s188 + $0x1a8] sm:$0xff] %v2375
        %2578 = vst [vmem:[%s188 + $0x1b0] sm:$0xff] %v2377
        %2579 = vst [vmem:[%s188 + $0x1b8] sm:$0xff] %v2379
        %2580 = vst [vmem:[%s188 + $0x1c0] sm:$0xff] %v2381
        %2581 = vst [vmem:[%s188 + $0x1c8] sm:$0xff] %v2383
        %2582 = vst [vmem:[%s188 + $0x1d0] sm:$0xff] %v2385
        %2583 = vst [vmem:[%s188 + $0x1d8] sm:$0xff] %v2387
        %2584 = vst [vmem:[%s188 + $0x1e0] sm:$0xff] %v2389
        %2585 = vst [vmem:[%s188 + $0x1e8] sm:$0xff] %v2391
        %2586 = vst [vmem:[%s188 + $0x1f0] sm:$0xff] %v2393
        %2587 = vst [vmem:[%s188 + $0x1f8] sm:$0xff] %v2395
        %2588 = vst [vmem:[%s188 + $0x200] sm:$0xff] %v2397
        %2589 = vst [vmem:[%s188 + $0x208] sm:$0xff] %v2399
        %2590 = vst [vmem:[%s188 + $0x210] sm:$0xff] %v2401
        %2591 = vst [vmem:[%s188 + $0x218] sm:$0xff] %v2403
        %2592 = vst [vmem:[%s188 + $0x220] sm:$0xff] %v2405
        %2593 = vst [vmem:[%s188 + $0x228] sm:$0xff] %v2407
        %2594 = vst [vmem:[%s188 + $0x230] sm:$0xff] %v2409
        %2595 = vst [vmem:[%s188 + $0x238] sm:$0xff] %v2411
        %2596 = vst [vmem:[%s188 + $0x240] sm:$0xff] %v2413
        %2597 = vst [vmem:[%s188 + $0x248] sm:$0xff] %v2415
        %2598 = vst [vmem:[%s188 + $0x250] sm:$0xff] %v2417
        %2599 = vst [vmem:[%s188 + $0x258] sm:$0xff] %v2419
        %2600 = vst [vmem:[%s188 + $0x260] sm:$0xff] %v2421
        %2601 = vst [vmem:[%s188 + $0x268] sm:$0xff] %v2423
        %2602 = vst [vmem:[%s188 + $0x270] sm:$0xff] %v2425
        %2603 = vst [vmem:[%s188 + $0x278] sm:$0xff] %v2427
        %2604 = vst [vmem:[%s188 + $0x280] sm:$0xff] %v2429
        %2605 = vst [vmem:[%s188 + $0x288] sm:$0xff] %v2431
        %2606 = vst [vmem:[%s188 + $0x290] sm:$0xff] %v2433
        %2607 = vst [vmem:[%s188 + $0x298] sm:$0xff] %v2435
        %2608 = vst [vmem:[%s188 + $0x2a0] sm:$0xff] %v2437
        %2609 = vst [vmem:[%s188 + $0x2a8] sm:$0xff] %v2439
        %2610 = vst [vmem:[%s188 + $0x2b0] sm:$0xff] %v2441
        %2611 = vst [vmem:[%s188 + $0x2b8] sm:$0xff] %v2443
        %2612 = vst [vmem:[%s188 + $0x2c0] sm:$0xff] %v2445
        %2613 = vst [vmem:[%s188 + $0x2c8] sm:$0xff] %v2447
        %2614 = vst [vmem:[%s188 + $0x2d0] sm:$0xff] %v2449
        %2615 = vst [vmem:[%s188 + $0x2d8] sm:$0xff] %v2451
        %2616 = vst [vmem:[%s188 + $0x2e0] sm:$0xff] %v2453
        %2617 = vst [vmem:[%s188 + $0x2e8] sm:$0xff] %v2455
        %2618 = vst [vmem:[%s188 + $0x2f0] sm:$0xff] %v2457
        %2619 = vst [vmem:[%s188 + $0x2f8] sm:$0xff] %v2459
        %2620 = vst [vmem:[%s188 + $0x300] sm:$0xff] %v2461
        %2621 = vst [vmem:[%s188 + $0x308] sm:$0xff] %v2463
        %2622 = vst [vmem:[%s188 + $0x310] sm:$0xff] %v2465
        %2623 = vst [vmem:[%s188 + $0x318] sm:$0xff] %v2467
        %2624 = vst [vmem:[%s188 + $0x320] sm:$0xff] %v2469
        %2625 = vst [vmem:[%s188 + $0x328] sm:$0xff] %v2471
        %2626 = vst [vmem:[%s188 + $0x330] sm:$0xff] %v2473
        %2627 = vst [vmem:[%s188 + $0x338] sm:$0xff] %v2475
        %2628 = vst [vmem:[%s188 + $0x340] sm:$0xff] %v2477
        %2629 = vst [vmem:[%s188 + $0x348] sm:$0xff] %v2479
        %2630 = vst [vmem:[%s188 + $0x350] sm:$0xff] %v2481
        %2631 = vst [vmem:[%s188 + $0x358] sm:$0xff] %v2483
        %2632 = vst [vmem:[%s188 + $0x360] sm:$0xff] %v2485
        %2633 = vst [vmem:[%s188 + $0x368] sm:$0xff] %v2487
        %2634 = vst [vmem:[%s188 + $0x370] sm:$0xff] %v2489
        %2635 = vst [vmem:[%s188 + $0x378] sm:$0xff] %v2491
        %2636 = vst [vmem:[%s188 + $0x380] sm:$0xff] %v2493
        %2637 = vst [vmem:[%s188 + $0x388] sm:$0xff] %v2495
        %2638 = vst [vmem:[%s188 + $0x390] sm:$0xff] %v2497
        %2639 = vst [vmem:[%s188 + $0x398] sm:$0xff] %v2499
        %2640 = vst [vmem:[%s188 + $0x3a0] sm:$0xff] %v2501
        %2641 = vst [vmem:[%s188 + $0x3a8] sm:$0xff] %v2503
        %2642 = vst [vmem:[%s188 + $0x3b0] sm:$0xff] %v2505
        %2643 = vst [vmem:[%s188 + $0x3b8] sm:$0xff] %v2507
        %2644 = vst [vmem:[%s188 + $0x3c0] sm:$0xff] %v2509
        %2645 = vst [vmem:[%s188 + $0x3c8] sm:$0xff] %v2511
        %2646 = vst [vmem:[%s188 + $0x3d0] sm:$0xff] %v2513
        %2647 = vst [vmem:[%s188 + $0x3d8] sm:$0xff] %v2515
        %2648 = vst [vmem:[%s188 + $0x3e0] sm:$0xff] %v2517
        %2649 = vst [vmem:[%s188 + $0x3e8] sm:$0xff] %v2519
        %2650 = vst [vmem:[%s188 + $0x3f0] sm:$0xff] %v2521
        %2651 = vst [vmem:[%s188 + $0x3f8] sm:$0xff] %v2523
        %s2652 = sand.u32 %s109, 1
        %s2653 = scalar_lea.sflag [#allocation3], %s2652
        %s2654 = sand.u32 %s109, 1
        %s2655 = smul.addr %s2654, 1024
        %s2656 = scalar_lea.vmem [#allocation2], %s2655
        // Predicated region
        $region33: #{tpu_custom_call.1} parent=31 // pred_check
          %p2657 = pneg %p119
        $region34: #{tpu_custom_call.1} parent=31 // pred_check_branch
          %2659 = sbr.rel (%p2657) target = $region36
        $region35: #{tpu_custom_call.1} parent=31 // pred_region
          %s2660 = smul.u32 2, %s22
          %s2662 = ssub.s32 16384, 16384
          %2663 = vsyncadd %s2653, %s2662
          %s2664 = smul.addr %s21, 128
          %s2665 = sadd.s32 %s2660, %s2664
          %s2666 = smul.addr %s2665, 128
          %s2667 = scalar_lea.hbm %s3, %s2666
          %s2668 = sshll.u32 %s2656, 4
          %s2669 = int_to_ptr.vmem [resolvable:$true] %s2668
          %2674 = dma.vmem_to_hbm [thread:$0]  %s2669, 16384, %s2667, %s2653, 256, 256, 16
        $region36: #{tpu_custom_call.1} parent=31 // pred_fallthru
          _
      $region32: #{tpu_custom_call.1} parent=5 // pred_fallthru
        _
      %p2675 = scmp.le.s32.totalorder 2, %s12
      // Predicated region
      $region37: #{tpu_custom_call.1} parent=5 // pred_check
        %p2676 = pneg %p2675
      $region38: #{tpu_custom_call.1} parent=5 // pred_check_branch
        %2678 = sbr.rel (%p2676) target = $region40
      $region39: #{tpu_custom_call.1} parent=5 // pred_region
        %s2679 = ssub.s32 %s12, 2
        // Predicated region
        $region41: #{tpu_custom_call.1} parent=39 // pred_check
          %p2680 = pneg %p125
        $region42: #{tpu_custom_call.1} parent=39 // pred_check_branch
          %2682 = sbr.rel (%p2680) target = $region44
        $region43: #{tpu_custom_call.1} parent=39 // pred_region
          %s2683 = sand.u32 %s110, 1
          %s2684 = scalar_lea.sflag [#allocation3], %s2683
          %s2685 = sand.u32 %s110, 1
          %s2686 = smul.addr %s2685, 1024
          %s2687 = scalar_lea.vmem [#allocation2], %s2686
          %2688 = dma.done %s2684, 16384
        $region44: #{tpu_custom_call.1} parent=39 // pred_fallthru
          _
      $region40: #{tpu_custom_call.1} parent=5 // pred_fallthru
        _
    $region6: #{tpu_custom_call.1} parent=1 // loop_footer
      %s16 = sadd.s32 1, %s12
    $region7: #{tpu_custom_call.1} parent=1 // loop_footer_branch
      %11 = sbr.rel target = $region3
    $region8: #{tpu_custom_call.1} parent=1 // loop_exit
      _
    %2689 = vsyncpa [#allocation3], 1
    %s2690 = scalar_lea.sflag [#allocation3], 1
    %2691 = vsyncpa %s2690, 1

// kernel: tpu_custom_call.1
$region0: #{tpu_custom_call.1}
  #allocation0 [shape = 'u32[]', space=smem, size = 0x4, offset = 0x4, fixed_abs, tag = 'smem constant byte address 0x4 - core index']
  #allocation1 [shape = 'u32[144,128]{1,0:T(1,128)}', space=vmem, size = 0x12000, scoped, tag = 'internal scratch']
  %s0 = inlined_call_operand.vmem [shape: f32[2,32,256], index: 0, kind: input, shape index: {}]
  %s1 = inlined_call_operand.vmem [shape: f32[512,32], index: 1, kind: input, shape index: {}]
  %s2 = inlined_call_operand.vmem [shape: f32[512,1], index: 2, kind: input, shape index: {}]
  %s3 = inlined_call_operand.hbm [shape: f32[2,512,256], index: 3, kind: output, shape index: {}]
  %s4 = sld [smem:[#allocation0]]
  $region45: #{tpu_custom_call.1} parent=0
    _
  %s6 = ssub.s32 1, %s4
  %s7 = scalar_select 0, %s6, %s4
  $region1: #{tpu_custom_call.1} parent=0
    #allocation2 [shape = 'u8[1048576]{0}', space=vmem, size = 0x100000, scoped, tag = 'output window, operand 0']
    #allocation3 [shape = 's32[2]{0}', space=sflag, size = 0x8, scoped, tag = 'scoped memory for tpu_custom_call.1']
    %8 = vsyncpa [#allocation3], 0
    %s9 = scalar_lea.sflag [#allocation3], 1
    %10 = vsyncpa %s9, 0
    loop: start=0, step=1, limit=4
    $region2: #{tpu_custom_call.1} parent=1 // loop_pre_header
      _
    $region3: #{tpu_custom_call.1} parent=1 // loop_header
      %s12 = sphi 0, %s16
      %p13 = scmp.ge.s32.totalorder %s12, 4
      %s19 = sphi 0, %s31
      %s20 = sphi 0, %s27
      %s21 = sphi 0, %s19
      %s22 = sphi 0, %s20
      %s23 = sphi 0, %s21
      %s24 = sphi 0, %s22
      %s36 = sphi 0, %s38
      %s39 = sphi 0, %s36
      %s40 = sphi 0, %s39
      %s56 = sphi 0, %s40
      %s60 = sphi 0, %s60
      %s62 = sphi 0, %s60
      %s63 = sphi 0, %s62
      %s77 = sphi 0, %s63
      %s81 = sphi 0, %s81
      %s83 = sphi 0, %s81
      %s84 = sphi 0, %s83
      %s98 = sphi 0, %s84
      %s106 = sphi 0, %s108
      %s109 = sphi 0, %s106
      %s110 = sphi 0, %s109
      %s126 = sphi 0, %s110
    $region4: #{tpu_custom_call.1} parent=1 // loop_header_branch
      %15 = sbr.rel (%p13) target = $region8
    $region5: #{tpu_custom_call.1} parent=1 // loop_body
      %s17 = ssub.s32 %s12, 1
      %s18 = ssub.s32 %s12, 2
      %s25 = sadd.s32 1, %s20
      %p26 = scmp.ge.s32.totalorder %s25, 1
      %s27 = scalar_select %p26, 0, %s25
      %s28 = sadd.s32 1, %s19
      %s29 = scalar_select %p26, %s28, %s19
      %p30 = scmp.ge.s32.totalorder %s29, 2
      %s31 = scalar_select %p30, 0, %s29
      %s32 = ssub.s32 %s19, %s31
      %s33 = ssub.s32 %s20, %s27
      %s34 = sor.u32 %s32, %s33
      %p35 = scmp.eq.s32.totalorder %s34, 0
      %s37 = sadd.s32 %s36, 1
      %s38 = scalar_select %p35, %s36, %s37
      %p41 = pneg %p35
      %p42 = scmp.eq.s32.totalorder %s12, 1
      %p43 = por %p41, %p42
      %p44 = scmp.ne.s32.totalorder %s36, %s39
      %p45 = scmp.eq.s32.totalorder %s12, 0
      %p46 = por %p44, %p45
      %p47 = scmp.ne.s32.totalorder %s36, %s39
      %p48 = scmp.eq.s32.totalorder %s17, 1
      %p49 = por %p47, %p48
      %p50 = scmp.ne.s32.totalorder %s39, %s40
      %p51 = scmp.eq.s32.totalorder %s17, 0
      %p52 = por %p50, %p51
      %p53 = scmp.ne.s32.totalorder %s39, %s40
      %p54 = scmp.eq.s32.totalorder %s18, 1
      %p55 = por %p53, %p54
      %p57 = scmp.ne.s32.totalorder %s40, %s56
      %p58 = scmp.eq.s32.totalorder %s18, 0
      %p59 = por %p57, %p58
      %s61 = sadd.s32 %s60, 1
      %p64 = scmp.eq.s32.totalorder %s12, 1
      %p65 = scmp.ne.s32.totalorder %s60, %s62
      %p66 = scmp.eq.s32.totalorder %s12, 0
      %p67 = por %p65, %p66
      %p68 = scmp.ne.s32.totalorder %s60, %s62
      %p69 = scmp.eq.s32.totalorder %s17, 1
      %p70 = por %p68, %p69
      %p71 = scmp.ne.s32.totalorder %s62, %s63
      %p72 = scmp.eq.s32.totalorder %s17, 0
      %p73 = por %p71, %p72
      %p74 = scmp.ne.s32.totalorder %s62, %s63
      %p75 = scmp.eq.s32.totalorder %s18, 1
      %p76 = por %p74, %p75
      %p78 = scmp.ne.s32.totalorder %s63, %s77
      %p79 = scmp.eq.s32.totalorder %s18, 0
      %p80 = por %p78, %p79
      %s82 = sadd.s32 %s81, 1
      %p85 = scmp.eq.s32.totalorder %s12, 1
      %p86 = scmp.ne.s32.totalorder %s81, %s83
      %p87 = scmp.eq.s32.totalorder %s12, 0
      %p88 = por %p86, %p87
      %p89 = scmp.ne.s32.totalorder %s81, %s83
      %p90 = scmp.eq.s32.totalorder %s17, 1
      %p91 = por %p89, %p90
      %p92 = scmp.ne.s32.totalorder %s83, %s84
      %p93 = scmp.eq.s32.totalorder %s17, 0
      %p94 = por %p92, %p93
      %p95 = scmp.ne.s32.totalorder %s83, %s84
      %p96 = scmp.eq.s32.totalorder %s18, 1
      %p97 = por %p95, %p96
      %p99 = scmp.ne.s32.totalorder %s84, %s98
      %p100 = scmp.eq.s32.totalorder %s18, 0
      %p101 = por %p99, %p100
      %s102 = ssub.s32 %s19, %s31
      %s103 = ssub.s32 %s20, %s27
      %s104 = sor.u32 %s102, %s103
      %p105 = scmp.eq.s32.totalorder %s104, 0
      %s107 = sadd.s32 %s106, 1
      %s108 = scalar_select %p105, %s106, %s107
      %p111 = pneg %p105
      %p112 = scmp.eq.s32.totalorder %s12, 1
      %p113 = por %p111, %p112
      %p114 = scmp.ne.s32.totalorder %s106, %s109
      %p115 = scmp.eq.s32.totalorder %s12, 0
      %p116 = por %p114, %p115
      %p117 = scmp.ne.s32.totalorder %s106, %s109
      %p118 = scmp.eq.s32.totalorder %s17, 1
      %p119 = por %p117, %p118
      %p120 = scmp.ne.s32.totalorder %s109, %s110
      %p121 = scmp.eq.s32.totalorder %s17, 0
      %p122 = por %p120, %p121
      %p123 = scmp.ne.s32.totalorder %s109, %s110
      %p124 = scmp.eq.s32.totalorder %s18, 1
      %p125 = por %p123, %p124
      %p127 = scmp.ne.s32.totalorder %s110, %s126
      %p128 = scmp.eq.s32.totalorder %s18, 0
      %p129 = por %p127, %p128
      %p130 = scmp.le.s32.totalorder 1, %s12
      %p131 = scmp.lt.s32.totalorder %s12, 3
      %p132 = pnand %p130, %p131
      %p133 = pneg %p132
      // Predicated region
      $region9: #{tpu_custom_call.1} parent=5 // pred_check
        _
      $region10: #{tpu_custom_call.1} parent=5 // pred_check_branch
        %135 = sbr.rel (%p132) target = $region12
      $region11: #{tpu_custom_call.1} parent=5 // pred_region
        %s136 = ssub.s32 %s12, 1
        // Predicated region
        $region13: #{tpu_custom_call.1} parent=11 // pred_check
          %p137 = pneg %p73
        $region14: #{tpu_custom_call.1} parent=11 // pred_check_branch
          %139 = sbr.rel (%p137) target = $region16
        $region15: #{tpu_custom_call.1} parent=11 // pred_region
          _
        $region16: #{tpu_custom_call.1} parent=11 // pred_fallthru
          _
        // Predicated region
        $region17: #{tpu_custom_call.1} parent=11 // pred_check
          %p140 = pneg %p94
        $region18: #{tpu_custom_call.1} parent=11 // pred_check_branch
          %142 = sbr.rel (%p140) target = $region20
        $region19: #{tpu_custom_call.1} parent=11 // pred_region
          _
        $region20: #{tpu_custom_call.1} parent=11 // pred_fallthru
          _
      $region12: #{tpu_custom_call.1} parent=5 // pred_fallthru
        _
      %p143 = scmp.lt.s32.totalorder %s12, 2
      // Predicated region
      $region21: #{tpu_custom_call.1} parent=5 // pred_check
        %p144 = pneg %p143
      $region22: #{tpu_custom_call.1} parent=5 // pred_check_branch
        %146 = sbr.rel (%p144) target = $region24
      $region23: #{tpu_custom_call.1} parent=5 // pred_region
        // Predicated region
        $region25: #{tpu_custom_call.1} parent=23 // pred_check
          %p147 = pneg %p46
        $region26: #{tpu_custom_call.1} parent=23 // pred_check_branch
          %149 = sbr.rel (%p147) target = $region28
        $region27: #{tpu_custom_call.1} parent=23 // pred_region
          %s150 = smul.u32 2, %s20
          %p151 = scmp.lt.s32.totalorder %s19, 1
          %s152 = scalar_select %p151, %s19, 1
          %p153 = scmp.lt.s32.totalorder %s150, 1
          %s154 = scalar_select %p153, %s150, 1
          %s155 = smul.addr %s152, 8
          %s156 = sadd.s32 %s154, %s155
          %s157 = smul.addr %s156, 8
          %s158 = scalar_lea.vmem %s0, %s157
          %s159 = smul.u32 2, %s20
        $region28: #{tpu_custom_call.1} parent=23 // pred_fallthru
          _
      $region24: #{tpu_custom_call.1} parent=5 // pred_fallthru
        _
      %p160 = scmp.le.s32.totalorder 1, %s12
      %p161 = scmp.lt.s32.totalorder %s12, 3
      %p162 = pnand %p160, %p161
      %p163 = pneg %p162
      // Predicated region
      $region29: #{tpu_custom_call.1} parent=5 // pred_check
        _
      $region30: #{tpu_custom_call.1} parent=5 // pred_check_branch
        %165 = sbr.rel (%p162) target = $region32
      $region31: #{tpu_custom_call.1} parent=5 // pred_region
        %s166 = ssub.s32 %s12, 1
        %s167 = smul.u32 2, %s22
        %p168 = scmp.lt.s32.totalorder %s21, 1
        %s169 = scalar_select %p168, %s21, 1
        %p170 = scmp.lt.s32.totalorder %s167, 1
        %s171 = scalar_select %p170, %s167, 1
        %s172 = smul.addr %s169, 8
        %s173 = sadd.s32 %s171, %s172
        %s174 = smul.addr %s173, 8
        %s175 = scalar_lea.vmem %s0, %s174
        %p176 = pneg %p52
        %p177 = pneg %p49
        %p178 = pneg %p73
        %p179 = pneg %p70
        %p180 = pneg %p94
        %p181 = pneg %p91
        %p182 = pneg %p122
        %p183 = pneg %p119
        %s184 = sand.u32 %s109, 1
        %s185 = scalar_lea.sflag [#allocation3], %s184
        %s186 = sand.u32 %s109, 1
        %s187 = smul.addr %s186, 1024
        %s188 = scalar_lea.vmem [#allocation2], %s187
        %s189 = smul.u32 2, %s22
        %p190 = scmp.lt.s32.totalorder %s21, 1
        %s191 = scalar_select %p190, %s21, 1
        %p192 = scmp.lt.s32.totalorder %s189, 1
        %s193 = scalar_select %p192, %s189, 1
        %s194 = smul.addr %s191, 8
        %s195 = sadd.s32 %s193, %s194
        %s196 = smul.addr %s195, 8
        %s197 = scalar_lea.vmem %s0, %s196
        %s198 = smul.u32 2, %s22
        %s199 = smul.u32 2, %s22
        %v200 = vld [vmem:[%s197] sm:$0xff]
        %v201 = vld [vmem:[%s197 + $0x8] sm:$0xff]
        %v202 = vld [vmem:[%s197 + $0x10] sm:$0xff]
        %v203 = vld [vmem:[%s197 + $0x18] sm:$0xff]
        %v204 = vld [vmem:[%s197 + $0x20] sm:$0xff]
        %v205 = vld [vmem:[%s197 + $0x28] sm:$0xff]
        %v206 = vld [vmem:[%s197 + $0x30] sm:$0xff]
        %v207 = vld [vmem:[%s197 + $0x38] sm:$0xff]
        %v208 = vadd.f32 %v200, %v202
        %v209 = vadd.f32 %v208, %v204
        %v210 = vadd.f32 %v209, %v206
        %v211 = vrot.slane %v210, 4
        %v212 = vadd.f32 %v210, %v211
        %v213 = vrot.slane %v212, 2
        %v214 = vadd.f32 %v212, %v213
        %v215 = vrot.slane %v214, 1
        %v216 = vadd.f32 %v214, %v215
        %v217 = vadd.f32 %v201, %v203
        %v218 = vadd.f32 %v217, %v205
        %v219 = vadd.f32 %v218, %v207
        %v220 = vrot.slane %v219, 4
        %v221 = vadd.f32 %v219, %v220
        %v222 = vrot.slane %v221, 2
        %v223 = vadd.f32 %v221, %v222
        %v224 = vrot.slane %v223, 1
        %v225 = vadd.f32 %v223, %v224
        %v226 = vmul.f32 %v216, 0.03125
        %v227 = vmul.f32 %v225, 0.03125
        %v228 = vmul.f32 %v200, %v200
        %v229 = vmul.f32 %v201, %v201
        %v230 = vmul.f32 %v202, %v202
        %v231 = vmul.f32 %v203, %v203
        %v232 = vmul.f32 %v204, %v204
        %v233 = vmul.f32 %v205, %v205
        %v234 = vmul.f32 %v206, %v206
        %v235 = vmul.f32 %v207, %v207
        %v236 = vadd.f32 %v228, %v230
        %v237 = vadd.f32 %v236, %v232
        %v238 = vadd.f32 %v237, %v234
        %v239 = vrot.slane %v238, 4
        %v240 = vadd.f32 %v238, %v239
        %v241 = vrot.slane %v240, 2
        %v242 = vadd.f32 %v240, %v241
        %v243 = vrot.slane %v242, 1
        %v244 = vadd.f32 %v242, %v243
        %v245 = vadd.f32 %v229, %v231
        %v246 = vadd.f32 %v245, %v233
        %v247 = vadd.f32 %v246, %v235
        %v248 = vrot.slane %v247, 4
        %v249 = vadd.f32 %v247, %v248
        %v250 = vrot.slane %v249, 2
        %v251 = vadd.f32 %v249, %v250
        %v252 = vrot.slane %v251, 1
        %v253 = vadd.f32 %v251, %v252
        %v254 = vmul.f32 %v244, 0.03125
        %v255 = vmul.f32 %v253, 0.03125
        %v256 = vmul.f32 %v226, %v226
        %v257 = vmul.f32 %v227, %v227
        %v258 = vsub.f32 %v254, %v256
        %v259 = vsub.f32 %v255, %v257
        %v260 = vmax.f32 %v258, 0.0
        %v261 = vmax.f32 %v259, 0.0
        %v262 = vsub.f32 %v200, %v226
        %v263 = vsub.f32 %v201, %v227
        %v264 = vsub.f32 %v202, %v226
        %v265 = vsub.f32 %v203, %v227
        %v266 = vsub.f32 %v204, %v226
        %v267 = vsub.f32 %v205, %v227
        %v268 = vsub.f32 %v206, %v226
        %v269 = vsub.f32 %v207, %v227
        %v270 = vadd.f32 %v260, 1e-05
        %v271 = vadd.f32 %v261, 1e-05
        %v272 = vrsqrt.pop %v270
        %v273 = vrsqrt.pop %v271
        %v274 = vmul.f32 %v262, %v272
        %v275 = vmul.f32 %v263, %v273
        %v276 = vmul.f32 %v264, %v272
        %v277 = vmul.f32 %v265, %v273
        %v278 = vmul.f32 %v266, %v272
        %v279 = vmul.f32 %v267, %v273
        %v280 = vmul.f32 %v268, %v272
        %v281 = vmul.f32 %v269, %v273
        %v282 = vld [vmem:[%s1] sm:$0xff]
        %v283 = vld [vmem:[%s1 + $0x8] sm:$0xff]
        %v284 = vld [vmem:[%s1 + $0x10] sm:$0xff]
        %v285 = vld [vmem:[%s1 + $0x18] sm:$0xff]
        %v286 = vld [vmem:[%s1 + $0x20] sm:$0xff]
        %v287 = vld [vmem:[%s1 + $0x28] sm:$0xff]
        %v288 = vld [vmem:[%s1 + $0x30] sm:$0xff]
        %v289 = vld [vmem:[%s1 + $0x38] sm:$0xff]
        %v290 = vld [vmem:[%s1 + $0x40] sm:$0xff]
        %v291 = vld [vmem:[%s1 + $0x48] sm:$0xff]
        %v292 = vld [vmem:[%s1 + $0x50] sm:$0xff]
        %v293 = vld [vmem:[%s1 + $0x58] sm:$0xff]
        %v294 = vld [vmem:[%s1 + $0x60] sm:$0xff]
        %v295 = vld [vmem:[%s1 + $0x68] sm:$0xff]
        %v296 = vld [vmem:[%s1 + $0x70] sm:$0xff]
        %v297 = vld [vmem:[%s1 + $0x78] sm:$0xff]
        %v298 = vld [vmem:[%s1 + $0x80] sm:$0xff]
        %v299 = vld [vmem:[%s1 + $0x88] sm:$0xff]
        %v300 = vld [vmem:[%s1 + $0x90] sm:$0xff]
        %v301 = vld [vmem:[%s1 + $0x98] sm:$0xff]
        %v302 = vld [vmem:[%s1 + $0xa0] sm:$0xff]
        %v303 = vld [vmem:[%s1 + $0xa8] sm:$0xff]
        %v304 = vld [vmem:[%s1 + $0xb0] sm:$0xff]
        %v305 = vld [vmem:[%s1 + $0xb8] sm:$0xff]
        %v306 = vld [vmem:[%s1 + $0xc0] sm:$0xff]
        %v307 = vld [vmem:[%s1 + $0xc8] sm:$0xff]
        %v308 = vld [vmem:[%s1 + $0xd0] sm:$0xff]
        %v309 = vld [vmem:[%s1 + $0xd8] sm:$0xff]
        %v310 = vld [vmem:[%s1 + $0xe0] sm:$0xff]
        %v311 = vld [vmem:[%s1 + $0xe8] sm:$0xff]
        %v312 = vld [vmem:[%s1 + $0xf0] sm:$0xff]
        %v313 = vld [vmem:[%s1 + $0xf8] sm:$0xff]
        %v314 = vld [vmem:[%s1 + $0x100] sm:$0xff]
        %v315 = vld [vmem:[%s1 + $0x108] sm:$0xff]
        %v316 = vld [vmem:[%s1 + $0x110] sm:$0xff]
        %v317 = vld [vmem:[%s1 + $0x118] sm:$0xff]
        %v318 = vld [vmem:[%s1 + $0x120] sm:$0xff]
        %v319 = vld [vmem:[%s1 + $0x128] sm:$0xff]
        %v320 = vld [vmem:[%s1 + $0x130] sm:$0xff]
        %v321 = vld [vmem:[%s1 + $0x138] sm:$0xff]
        %v322 = vld [vmem:[%s1 + $0x140] sm:$0xff]
        %v323 = vld [vmem:[%s1 + $0x148] sm:$0xff]
        %v324 = vld [vmem:[%s1 + $0x150] sm:$0xff]
        %v325 = vld [vmem:[%s1 + $0x158] sm:$0xff]
        %v326 = vld [vmem:[%s1 + $0x160] sm:$0xff]
        %v327 = vld [vmem:[%s1 + $0x168] sm:$0xff]
        %v328 = vld [vmem:[%s1 + $0x170] sm:$0xff]
        %v329 = vld [vmem:[%s1 + $0x178] sm:$0xff]
        %v330 = vld [vmem:[%s1 + $0x180] sm:$0xff]
        %v331 = vld [vmem:[%s1 + $0x188] sm:$0xff]
        %v332 = vld [vmem:[%s1 + $0x190] sm:$0xff]
        %v333 = vld [vmem:[%s1 + $0x198] sm:$0xff]
        %v334 = vld [vmem:[%s1 + $0x1a0] sm:$0xff]
        %v335 = vld [vmem:[%s1 + $0x1a8] sm:$0xff]
        %v336 = vld [vmem:[%s1 + $0x1b0] sm:$0xff]
        %v337 = vld [vmem:[%s1 + $0x1b8] sm:$0xff]
        %v338 = vld [vmem:[%s1 + $0x1c0] sm:$0xff]
        %v339 = vld [vmem:[%s1 + $0x1c8] sm:$0xff]
        %v340 = vld [vmem:[%s1 + $0x1d0] sm:$0xff]
        %v341 = vld [vmem:[%s1 + $0x1d8] sm:$0xff]
        %v342 = vld [vmem:[%s1 + $0x1e0] sm:$0xff]
        %v343 = vld [vmem:[%s1 + $0x1e8] sm:$0xff]
        %v344 = vld [vmem:[%s1 + $0x1f0] sm:$0xff]
        %v345 = vld [vmem:[%s1 + $0x1f8] sm:$0xff]
        %v346 = vld [vmem:[%s2] sm:$0xff]
        %v347 = vld [vmem:[%s2 + $0x8] sm:$0xff]
        %v348 = vld [vmem:[%s2 + $0x10] sm:$0xff]
        %v349 = vld [vmem:[%s2 + $0x18] sm:$0xff]
        %v350 = vld [vmem:[%s2 + $0x20] sm:$0xff]
        %v351 = vld [vmem:[%s2 + $0x28] sm:$0xff]
        %v352 = vld [vmem:[%s2 + $0x30] sm:$0xff]
        %v353 = vld [vmem:[%s2 + $0x38] sm:$0xff]
        %v354 = vld [vmem:[%s2 + $0x40] sm:$0xff]
        %v355 = vld [vmem:[%s2 + $0x48] sm:$0xff]
        %v356 = vld [vmem:[%s2 + $0x50] sm:$0xff]
        %v357 = vld [vmem:[%s2 + $0x58] sm:$0xff]
        %v358 = vld [vmem:[%s2 + $0x60] sm:$0xff]
        %v359 = vld [vmem:[%s2 + $0x68] sm:$0xff]
        %v360 = vld [vmem:[%s2 + $0x70] sm:$0xff]
        %v361 = vld [vmem:[%s2 + $0x78] sm:$0xff]
        %v362 = vld [vmem:[%s2 + $0x80] sm:$0xff]
        %v363 = vld [vmem:[%s2 + $0x88] sm:$0xff]
        %v364 = vld [vmem:[%s2 + $0x90] sm:$0xff]
        %v365 = vld [vmem:[%s2 + $0x98] sm:$0xff]
        %v366 = vld [vmem:[%s2 + $0xa0] sm:$0xff]
        %v367 = vld [vmem:[%s2 + $0xa8] sm:$0xff]
        %v368 = vld [vmem:[%s2 + $0xb0] sm:$0xff]
        %v369 = vld [vmem:[%s2 + $0xb8] sm:$0xff]
        %v370 = vld [vmem:[%s2 + $0xc0] sm:$0xff]
        %v371 = vld [vmem:[%s2 + $0xc8] sm:$0xff]
        %v372 = vld [vmem:[%s2 + $0xd0] sm:$0xff]
        %v373 = vld [vmem:[%s2 + $0xd8] sm:$0xff]
        %v374 = vld [vmem:[%s2 + $0xe0] sm:$0xff]
        %v375 = vld [vmem:[%s2 + $0xe8] sm:$0xff]
        %v376 = vld [vmem:[%s2 + $0xf0] sm:$0xff]
        %v377 = vld [vmem:[%s2 + $0xf8] sm:$0xff]
        %v378 = vld [vmem:[%s2 + $0x100] sm:$0xff]
        %v379 = vld [vmem:[%s2 + $0x108] sm:$0xff]
        %v380 = vld [vmem:[%s2 + $0x110] sm:$0xff]
        %v381 = vld [vmem:[%s2 + $0x118] sm:$0xff]
        %v382 = vld [vmem:[%s2 + $0x120] sm:$0xff]
        %v383 = vld [vmem:[%s2 + $0x128] sm:$0xff]
        %v384 = vld [vmem:[%s2 + $0x130] sm:$0xff]
        %v385 = vld [vmem:[%s2 + $0x138] sm:$0xff]
        %v386 = vld [vmem:[%s2 + $0x140] sm:$0xff]
        %v387 = vld [vmem:[%s2 + $0x148] sm:$0xff]
        %v388 = vld [vmem:[%s2 + $0x150] sm:$0xff]
        %v389 = vld [vmem:[%s2 + $0x158] sm:$0xff]
        %v390 = vld [vmem:[%s2 + $0x160] sm:$0xff]
        %v391 = vld [vmem:[%s2 + $0x168] sm:$0xff]
        %v392 = vld [vmem:[%s2 + $0x170] sm:$0xff]
        %v393 = vld [vmem:[%s2 + $0x178] sm:$0xff]
        %v394 = vld [vmem:[%s2 + $0x180] sm:$0xff]
        %v395 = vld [vmem:[%s2 + $0x188] sm:$0xff]
        %v396 = vld [vmem:[%s2 + $0x190] sm:$0xff]
        %v397 = vld [vmem:[%s2 + $0x198] sm:$0xff]
        %v398 = vld [vmem:[%s2 + $0x1a0] sm:$0xff]
        %v399 = vld [vmem:[%s2 + $0x1a8] sm:$0xff]
        %v400 = vld [vmem:[%s2 + $0x1b0] sm:$0xff]
        %v401 = vld [vmem:[%s2 + $0x1b8] sm:$0xff]
        %v402 = vld [vmem:[%s2 + $0x1c0] sm:$0xff]
        %v403 = vld [vmem:[%s2 + $0x1c8] sm:$0xff]
        %v404 = vld [vmem:[%s2 + $0x1d0] sm:$0xff]
        %v405 = vld [vmem:[%s2 + $0x1d8] sm:$0xff]
        %v406 = vld [vmem:[%s2 + $0x1e0] sm:$0xff]
        %v407 = vld [vmem:[%s2 + $0x1e8] sm:$0xff]
        %v408 = vld [vmem:[%s2 + $0x1f0] sm:$0xff]
        %v409 = vld [vmem:[%s2 + $0x1f8] sm:$0xff]
        %411 = vset.pattern.permute.xlu0 0
        %412 = vperm.xlu0 %411, %v346
        %v413 = vpop.permute.xlu0 %412
        %416 = vset.pattern.permute.xlu0 0
        %417 = vperm.xlu0 %416, %v347
        %v418 = vpop.permute.xlu0 %417
        %421 = vset.pattern.permute.xlu0 0
        %422 = vperm.xlu0 %421, %v348
        %v423 = vpop.permute.xlu0 %422
        %426 = vset.pattern.permute.xlu0 0
        %427 = vperm.xlu0 %426, %v349
        %v428 = vpop.permute.xlu0 %427
        %431 = vset.pattern.permute.xlu0 0
        %432 = vperm.xlu0 %431, %v350
        %v433 = vpop.permute.xlu0 %432
        %436 = vset.pattern.permute.xlu0 0
        %437 = vperm.xlu0 %436, %v351
        %v438 = vpop.permute.xlu0 %437
        %441 = vset.pattern.permute.xlu0 0
        %442 = vperm.xlu0 %441, %v352
        %v443 = vpop.permute.xlu0 %442
        %446 = vset.pattern.permute.xlu0 0
        %447 = vperm.xlu0 %446, %v353
        %v448 = vpop.permute.xlu0 %447
        %451 = vset.pattern.permute.xlu0 0
        %452 = vperm.xlu0 %451, %v354
        %v453 = vpop.permute.xlu0 %452
        %456 = vset.pattern.permute.xlu0 0
        %457 = vperm.xlu0 %456, %v355
        %v458 = vpop.permute.xlu0 %457
        %461 = vset.pattern.permute.xlu0 0
        %462 = vperm.xlu0 %461, %v356
        %v463 = vpop.permute.xlu0 %462
        %466 = vset.pattern.permute.xlu0 0
        %467 = vperm.xlu0 %466, %v357
        %v468 = vpop.permute.xlu0 %467
        %471 = vset.pattern.permute.xlu0 0
        %472 = vperm.xlu0 %471, %v358
        %v473 = vpop.permute.xlu0 %472
        %476 = vset.pattern.permute.xlu0 0
        %477 = vperm.xlu0 %476, %v359
        %v478 = vpop.permute.xlu0 %477
        %481 = vset.pattern.permute.xlu0 0
        %482 = vperm.xlu0 %481, %v360
        %v483 = vpop.permute.xlu0 %482
        %486 = vset.pattern.permute.xlu0 0
        %487 = vperm.xlu0 %486, %v361
        %v488 = vpop.permute.xlu0 %487
        %491 = vset.pattern.permute.xlu0 0
        %492 = vperm.xlu0 %491, %v362
        %v493 = vpop.permute.xlu0 %492
        %496 = vset.pattern.permute.xlu0 0
        %497 = vperm.xlu0 %496, %v363
        %v498 = vpop.permute.xlu0 %497
        %501 = vset.pattern.permute.xlu0 0
        %502 = vperm.xlu0 %501, %v364
        %v503 = vpop.permute.xlu0 %502
        %506 = vset.pattern.permute.xlu0 0
        %507 = vperm.xlu0 %506, %v365
        %v508 = vpop.permute.xlu0 %507
        %511 = vset.pattern.permute.xlu0 0
        %512 = vperm.xlu0 %511, %v366
        %v513 = vpop.permute.xlu0 %512
        %516 = vset.pattern.permute.xlu0 0
        %517 = vperm.xlu0 %516, %v367
        %v518 = vpop.permute.xlu0 %517
        %521 = vset.pattern.permute.xlu0 0
        %522 = vperm.xlu0 %521, %v368
        %v523 = vpop.permute.xlu0 %522
        %526 = vset.pattern.permute.xlu0 0
        %527 = vperm.xlu0 %526, %v369
        %v528 = vpop.permute.xlu0 %527
        %531 = vset.pattern.permute.xlu0 0
        %532 = vperm.xlu0 %531, %v370
        %v533 = vpop.permute.xlu0 %532
        %536 = vset.pattern.permute.xlu0 0
        %537 = vperm.xlu0 %536, %v371
        %v538 = vpop.permute.xlu0 %537
        %541 = vset.pattern.permute.xlu0 0
        %542 = vperm.xlu0 %541, %v372
        %v543 = vpop.permute.xlu0 %542
        %546 = vset.pattern.permute.xlu0 0
        %547 = vperm.xlu0 %546, %v373
        %v548 = vpop.permute.xlu0 %547
        %551 = vset.pattern.permute.xlu0 0
        %552 = vperm.xlu0 %551, %v374
        %v553 = vpop.permute.xlu0 %552
        %556 = vset.pattern.permute.xlu0 0
        %557 = vperm.xlu0 %556, %v375
        %v558 = vpop.permute.xlu0 %557
        %561 = vset.pattern.permute.xlu0 0
        %562 = vperm.xlu0 %561, %v376
        %v563 = vpop.permute.xlu0 %562
        %566 = vset.pattern.permute.xlu0 0
        %567 = vperm.xlu0 %566, %v377
        %v568 = vpop.permute.xlu0 %567
        %571 = vset.pattern.permute.xlu0 0
        %572 = vperm.xlu0 %571, %v378
        %v573 = vpop.permute.xlu0 %572
        %576 = vset.pattern.permute.xlu0 0
        %577 = vperm.xlu0 %576, %v379
        %v578 = vpop.permute.xlu0 %577
        %581 = vset.pattern.permute.xlu0 0
        %582 = vperm.xlu0 %581, %v380
        %v583 = vpop.permute.xlu0 %582
        %586 = vset.pattern.permute.xlu0 0
        %587 = vperm.xlu0 %586, %v381
        %v588 = vpop.permute.xlu0 %587
        %591 = vset.pattern.permute.xlu0 0
        %592 = vperm.xlu0 %591, %v382
        %v593 = vpop.permute.xlu0 %592
        %596 = vset.pattern.permute.xlu0 0
        %597 = vperm.xlu0 %596, %v383
        %v598 = vpop.permute.xlu0 %597
        %601 = vset.pattern.permute.xlu0 0
        %602 = vperm.xlu0 %601, %v384
        %v603 = vpop.permute.xlu0 %602
        %606 = vset.pattern.permute.xlu0 0
        %607 = vperm.xlu0 %606, %v385
        %v608 = vpop.permute.xlu0 %607
        %611 = vset.pattern.permute.xlu0 0
        %612 = vperm.xlu0 %611, %v386
        %v613 = vpop.permute.xlu0 %612
        %616 = vset.pattern.permute.xlu0 0
        %617 = vperm.xlu0 %616, %v387
        %v618 = vpop.permute.xlu0 %617
        %621 = vset.pattern.permute.xlu0 0
        %622 = vperm.xlu0 %621, %v388
        %v623 = vpop.permute.xlu0 %622
        %626 = vset.pattern.permute.xlu0 0
        %627 = vperm.xlu0 %626, %v389
        %v628 = vpop.permute.xlu0 %627
        %631 = vset.pattern.permute.xlu0 0
        %632 = vperm.xlu0 %631, %v390
        %v633 = vpop.permute.xlu0 %632
        %636 = vset.pattern.permute.xlu0 0
        %637 = vperm.xlu0 %636, %v391
        %v638 = vpop.permute.xlu0 %637
        %641 = vset.pattern.permute.xlu0 0
        %642 = vperm.xlu0 %641, %v392
        %v643 = vpop.permute.xlu0 %642
        %646 = vset.pattern.permute.xlu0 0
        %647 = vperm.xlu0 %646, %v393
        %v648 = vpop.permute.xlu0 %647
        %651 = vset.pattern.permute.xlu0 0
        %652 = vperm.xlu0 %651, %v394
        %v653 = vpop.permute.xlu0 %652
        %656 = vset.pattern.permute.xlu0 0
        %657 = vperm.xlu0 %656, %v395
        %v658 = vpop.permute.xlu0 %657
        %661 = vset.pattern.permute.xlu0 0
        %662 = vperm.xlu0 %661, %v396
        %v663 = vpop.permute.xlu0 %662
        %666 = vset.pattern.permute.xlu0 0
        %667 = vperm.xlu0 %666, %v397
        %v668 = vpop.permute.xlu0 %667
        %671 = vset.pattern.permute.xlu0 0
        %672 = vperm.xlu0 %671, %v398
        %v673 = vpop.permute.xlu0 %672
        %676 = vset.pattern.permute.xlu0 0
        %677 = vperm.xlu0 %676, %v399
        %v678 = vpop.permute.xlu0 %677
        %681 = vset.pattern.permute.xlu0 0
        %682 = vperm.xlu0 %681, %v400
        %v683 = vpop.permute.xlu0 %682
        %686 = vset.pattern.permute.xlu0 0
        %687 = vperm.xlu0 %686, %v401
        %v688 = vpop.permute.xlu0 %687
        %691 = vset.pattern.permute.xlu0 0
        %692 = vperm.xlu0 %691, %v402
        %v693 = vpop.permute.xlu0 %692
        %696 = vset.pattern.permute.xlu0 0
        %697 = vperm.xlu0 %696, %v403
        %v698 = vpop.permute.xlu0 %697
        %701 = vset.pattern.permute.xlu0 0
        %702 = vperm.xlu0 %701, %v404
        %v703 = vpop.permute.xlu0 %702
        %706 = vset.pattern.permute.xlu0 0
        %707 = vperm.xlu0 %706, %v405
        %v708 = vpop.permute.xlu0 %707
        %711 = vset.pattern.permute.xlu0 0
        %712 = vperm.xlu0 %711, %v406
        %v713 = vpop.permute.xlu0 %712
        %716 = vset.pattern.permute.xlu0 0
        %717 = vperm.xlu0 %716, %v407
        %v718 = vpop.permute.xlu0 %717
        %721 = vset.pattern.permute.xlu0 0
        %722 = vperm.xlu0 %721, %v408
        %v723 = vpop.permute.xlu0 %722
        %726 = vset.pattern.permute.xlu0 0
        %727 = vperm.xlu0 %726, %v409
        %v728 = vpop.permute.xlu0 %727
        %vm730 = vcmask 261120
        %v732 = vsel %vm730, %v282, 0
        %v735 = vsel %vm730, %v283, 0
        %v738 = vsel %vm730, %v284, 0
        %v741 = vsel %vm730, %v285, 0
        %v744 = vsel %vm730, %v286, 0
        %v747 = vsel %vm730, %v287, 0
        %v750 = vsel %vm730, %v288, 0
        %v753 = vsel %vm730, %v289, 0
        %v756 = vsel %vm730, %v290, 0
        %v759 = vsel %vm730, %v291, 0
        %v762 = vsel %vm730, %v292, 0
        %v765 = vsel %vm730, %v293, 0
        %v768 = vsel %vm730, %v294, 0
        %v771 = vsel %vm730, %v295, 0
        %v774 = vsel %vm730, %v296, 0
        %v777 = vsel %vm730, %v297, 0
        %v780 = vsel %vm730, %v298, 0
        %v783 = vsel %vm730, %v299, 0
        %v786 = vsel %vm730, %v300, 0
        %v789 = vsel %vm730, %v301, 0
        %v792 = vsel %vm730, %v302, 0
        %v795 = vsel %vm730, %v303, 0
        %v798 = vsel %vm730, %v304, 0
        %v801 = vsel %vm730, %v305, 0
        %v804 = vsel %vm730, %v306, 0
        %v807 = vsel %vm730, %v307, 0
        %v810 = vsel %vm730, %v308, 0
        %v813 = vsel %vm730, %v309, 0
        %v816 = vsel %vm730, %v310, 0
        %v819 = vsel %vm730, %v311, 0
        %v822 = vsel %vm730, %v312, 0
        %v825 = vsel %vm730, %v313, 0
        %v828 = vsel %vm730, %v314, 0
        %v831 = vsel %vm730, %v315, 0
        %v834 = vsel %vm730, %v316, 0
        %v837 = vsel %vm730, %v317, 0
        %v840 = vsel %vm730, %v318, 0
        %v843 = vsel %vm730, %v319, 0
        %v846 = vsel %vm730, %v320, 0
        %v849 = vsel %vm730, %v321, 0
        %v852 = vsel %vm730, %v322, 0
        %v855 = vsel %vm730, %v323, 0
        %v858 = vsel %vm730, %v324, 0
        %v861 = vsel %vm730, %v325, 0
        %v864 = vsel %vm730, %v326, 0
        %v867 = vsel %vm730, %v327, 0
        %v870 = vsel %vm730, %v328, 0
        %v873 = vsel %vm730, %v329, 0
        %v876 = vsel %vm730, %v330, 0
        %v879 = vsel %vm730, %v331, 0
        %v882 = vsel %vm730, %v332, 0
        %v885 = vsel %vm730, %v333, 0
        %v888 = vsel %vm730, %v334, 0
        %v891 = vsel %vm730, %v335, 0
        %v894 = vsel %vm730, %v336, 0
        %v897 = vsel %vm730, %v337, 0
        %v900 = vsel %vm730, %v338, 0
        %v903 = vsel %vm730, %v339, 0
        %v906 = vsel %vm730, %v340, 0
        %v909 = vsel %vm730, %v341, 0
        %v912 = vsel %vm730, %v342, 0
        %v915 = vsel %vm730, %v343, 0
        %v918 = vsel %vm730, %v344, 0
        %v921 = vsel %vm730, %v345, 0
        %923 = vmatprep.subr.mxu0 %v275
        %924 = vmatpush1.msra.mxu0 %v274
        %925 = vmatprep.subr.mxu0 %v277
        %926 = vmatpush1.msra.mxu0 %v276
        %927 = vmatprep.subr.mxu0 %v279
        %928 = vmatpush1.msra.mxu0 %v278
        %929 = vmatprep.subr.mxu0 %v281
        %930 = vmatpush1.msra.mxu0 %v280
        %931 = vmatprep.subr.mxu0 0.0
        %932 = vmatpush1.msra.mxu0 0.0
        %933 = vmatprep.subr.mxu0 0.0
        %934 = vmatpush1.msra.mxu0 0.0
        %935 = vmatprep.subr.mxu0 0.0
        %936 = vmatpush1.msra.mxu0 0.0
        %937 = vmatprep.subr.mxu0 0.0
        %938 = vmatpush1.msra.mxu0 0.0
        %939 = vmatprep.subr.mxu0 0.0
        %940 = vmatpush1.msra.mxu0 0.0
        %941 = vmatprep.subr.mxu0 0.0
        %942 = vmatpush1.msra.mxu0 0.0
        %943 = vmatprep.subr.mxu0 0.0
        %944 = vmatpush1.msra.mxu0 0.0
        %945 = vmatprep.subr.mxu0 0.0
        %946 = vmatpush1.msra.mxu0 0.0
        %947 = vmatprep.subr.mxu0 0.0
        %948 = vmatpush1.msra.mxu0 0.0
        %949 = vmatprep.subr.mxu0 0.0
        %950 = vmatpush1.msra.mxu0 0.0
        %951 = vmatprep.subr.mxu0 0.0
        %952 = vmatpush1.msra.mxu0 0.0
        %953 = vmatprep.subr.mxu0 0.0
        %954 = vmatpush1.msra.mxu0 0.0
        %955 = vmatprep.subr.mxu0 0.0
        %956 = vmatpush1.msra.mxu0 0.0
        %957 = vmatprep.subr.mxu0 0.0
        %958 = vmatpush1.msra.mxu0 0.0
        %959 = vmatprep.subr.mxu0 0.0
        %960 = vmatpush1.msra.mxu0 0.0
        %961 = vmatprep.subr.mxu0 0.0
        %962 = vmatpush1.msra.mxu0 0.0
        %963 = vmatprep.subr.mxu0 0.0
        %964 = vmatpush1.msra.mxu0 0.0
        %965 = vmatprep.subr.mxu0 0.0
        %966 = vmatpush1.msra.mxu0 0.0
        %967 = vmatprep.subr.mxu0 0.0
        %968 = vmatpush1.msra.mxu0 0.0
        %969 = vmatprep.subr.mxu0 0.0
        %970 = vmatpush1.msra.mxu0 0.0
        %971 = vmatprep.subr.mxu0 0.0
        %972 = vmatpush1.msra.mxu0 0.0
        %973 = vmatprep.subr.mxu0 0.0
        %974 = vmatpush1.msra.mxu0 0.0
        %975 = vmatprep.subr.mxu0 0.0
        %976 = vmatpush1.msra.mxu0 0.0
        %977 = vmatprep.subr.mxu0 0.0
        %978 = vmatpush1.msra.mxu0 0.0
        %979 = vmatprep.subr.mxu0 0.0
        %980 = vmatpush1.msra.mxu0 0.0
        %981 = vmatprep.subr.mxu0 0.0
        %982 = vmatpush1.msra.mxu0 0.0
        %983 = vmatprep.subr.mxu0 0.0
        %984 = vmatpush1.msra.mxu0 0.0
        %985 = vmatprep.subr.mxu0 0.0
        %986 = vmatpush1.msra.mxu0 0.0
        %987 = vmatprep.mubr.f32.mxu0 0.0
        %988 = vmatmul.mubr.f32.gmra.mrb[0].mxu0 %v732
        %v989 = vpop.f32.mrb[0].mxu0
        %v990 = vadd.f32 %v413, %v989
        %v991 = vpop.f32.mrb[0].mxu0
        %v992 = vadd.f32 %v413, %v991
        %993 = vmatprep.mubr.f32.mxu0 0.0
        %994 = vmatmul.mubr.f32.gmra.mrb[0].mxu0 %v735
        %v995 = vpop.f32.mrb[0].mxu0
        %v996 = vadd.f32 %v418, %v995
        %v997 = vpop.f32.mrb[0].mxu0
        %v998 = vadd.f32 %v418, %v997
        %999 = vmatprep.mubr.f32.mxu0 0.0
        %1000 = vmatmul.mubr.f32.gmra.mrb[0].mxu0 %v738
        %v1001 = vpop.f32.mrb[0].mxu0
        %v1002 = vadd.f32 %v423, %v1001
        %v1003 = vpop.f32.mrb[0].mxu0
        %v1004 = vadd.f32 %v423, %v1003
        %1005 = vmatprep.mubr.f32.mxu0 0.0
        %1006 = vmatmul.mubr.f32.gmra.mrb[0].mxu0 %v741
        %v1007 = vpop.f32.mrb[0].mxu0
        %v1008 = vadd.f32 %v428, %v1007
        %v1009 = vpop.f32.mrb[0].mxu0
        %v1010 = vadd.f32 %v428, %v1009
        %1011 = vmatprep.mubr.f32.mxu0 0.0
        %1012 = vmatmul.mubr.f32.gmra.mrb[0].mxu0 %v744
        %v1013 = vpop.f32.mrb[0].mxu0
        %v1014 = vadd.f32 %v433, %v1013
        %v1015 = vpop.f32.mrb[0].mxu0
        %v1016 = vadd.f32 %v433, %v1015
        %1017 = vmatprep.mubr.f32.mxu0 0.0
        %1018 = vmatmul.mubr.f32.gmra.mrb[0].mxu0 %v747
        %v1019 = vpop.f32.mrb[0].mxu0
        %v1020 = vadd.f32 %v438, %v1019
        %v1021 = vpop.f32.mrb[0].mxu0
        %v1022 = vadd.f32 %v438, %v1021
        %1023 = vmatprep.mubr.f32.mxu0 0.0
        %1024 = vmatmul.mubr.f32.gmra.mrb[0].mxu0 %v750
        %v1025 = vpop.f32.mrb[0].mxu0
        %v1026 = vadd.f32 %v443, %v1025
        %v1027 = vpop.f32.mrb[0].mxu0
        %v1028 = vadd.f32 %v443, %v1027
        %1029 = vmatprep.mubr.f32.mxu0 0.0
        %1030 = vmatmul.mubr.f32.gmra.mrb[0].mxu0 %v753
        %v1031 = vpop.f32.mrb[0].mxu0
        %v1032 = vadd.f32 %v448, %v1031
        %v1033 = vpop.f32.mrb[0].mxu0
        %v1034 = vadd.f32 %v448, %v1033
        %1035 = vmatprep.mubr.f32.mxu0 0.0
        %1036 = vmatmul.mubr.f32.gmra.mrb[0].mxu0 %v756
        %v1037 = vpop.f32.mrb[0].mxu0
        %v1038 = vadd.f32 %v453, %v1037
        %v1039 = vpop.f32.mrb[0].mxu0
        %v1040 = vadd.f32 %v453, %v1039
        %1041 = vmatprep.mubr.f32.mxu0 0.0
        %1042 = vmatmul.mubr.f32.gmra.mrb[0].mxu0 %v759
        %v1043 = vpop.f32.mrb[0].mxu0
        %v1044 = vadd.f32 %v458, %v1043
        %v1045 = vpop.f32.mrb[0].mxu0
        %v1046 = vadd.f32 %v458, %v1045
        %1047 = vmatprep.mubr.f32.mxu0 0.0
        %1048 = vmatmul.mubr.f32.gmra.mrb[0].mxu0 %v762
        %v1049 = vpop.f32.mrb[0].mxu0
        %v1050 = vadd.f32 %v463, %v1049
        %v1051 = vpop.f32.mrb[0].mxu0
        %v1052 = vadd.f32 %v463, %v1051
        %1053 = vmatprep.mubr.f32.mxu0 0.0
        %1054 = vmatmul.mubr.f32.gmra.mrb[0].mxu0 %v765
        %v1055 = vpop.f32.mrb[0].mxu0
        %v1056 = vadd.f32 %v468, %v1055
        %v1057 = vpop.f32.mrb[0].mxu0
        %v1058 = vadd.f32 %v468, %v1057
        %1059 = vmatprep.mubr.f32.mxu0 0.0
        %1060 = vmatmul.mubr.f32.gmra.mrb[0].mxu0 %v768
        %v1061 = vpop.f32.mrb[0].mxu0
        %v1062 = vadd.f32 %v473, %v1061
        %v1063 = vpop.f32.mrb[0].mxu0
        %v1064 = vadd.f32 %v473, %v1063
        %1065 = vmatprep.mubr.f32.mxu0 0.0
        %1066 = vmatmul.mubr.f32.gmra.mrb[0].mxu0 %v771
        %v1067 = vpop.f32.mrb[0].mxu0
        %v1068 = vadd.f32 %v478, %v1067
        %v1069 = vpop.f32.mrb[0].mxu0
        %v1070 = vadd.f32 %v478, %v1069
        %1071 = vmatprep.mubr.f32.mxu0 0.0
        %1072 = vmatmul.mubr.f32.gmra.mrb[0].mxu0 %v774
        %v1073 = vpop.f32.mrb[0].mxu0
        %v1074 = vadd.f32 %v483, %v1073
        %v1075 = vpop.f32.mrb[0].mxu0
        %v1076 = vadd.f32 %v483, %v1075
        %1077 = vmatprep.mubr.f32.mxu0 0.0
        %1078 = vmatmul.mubr.f32.gmra.mrb[0].mxu0 %v777
        %v1079 = vpop.f32.mrb[0].mxu0
        %v1080 = vadd.f32 %v488, %v1079
        %v1081 = vpop.f32.mrb[0].mxu0
        %v1082 = vadd.f32 %v488, %v1081
        %1083 = vmatprep.mubr.f32.mxu0 0.0
        %1084 = vmatmul.mubr.f32.gmra.mrb[0].mxu0 %v780
        %v1085 = vpop.f32.mrb[0].mxu0
        %v1086 = vadd.f32 %v493, %v1085
        %v1087 = vpop.f32.mrb[0].mxu0
        %v1088 = vadd.f32 %v493, %v1087
        %1089 = vmatprep.mubr.f32.mxu0 0.0
        %1090 = vmatmul.mubr.f32.gmra.mrb[0].mxu0 %v783
        %v1091 = vpop.f32.mrb[0].mxu0
        %v1092 = vadd.f32 %v498, %v1091
        %v1093 = vpop.f32.mrb[0].mxu0
        %v1094 = vadd.f32 %v498, %v1093
        %1095 = vmatprep.mubr.f32.mxu0 0.0
        %1096 = vmatmul.mubr.f32.gmra.mrb[0].mxu0 %v786
        %v1097 = vpop.f32.mrb[0].mxu0
        %v1098 = vadd.f32 %v503, %v1097
        %v1099 = vpop.f32.mrb[0].mxu0
        %v1100 = vadd.f32 %v503, %v1099
        %1101 = vmatprep.mubr.f32.mxu0 0.0
        %1102 = vmatmul.mubr.f32.gmra.mrb[0].mxu0 %v789
        %v1103 = vpop.f32.mrb[0].mxu0
        %v1104 = vadd.f32 %v508, %v1103
        %v1105 = vpop.f32.mrb[0].mxu0
        %v1106 = vadd.f32 %v508, %v1105
        %1107 = vmatprep.mubr.f32.mxu0 0.0
        %1108 = vmatmul.mubr.f32.gmra.mrb[0].mxu0 %v792
        %v1109 = vpop.f32.mrb[0].mxu0
        %v1110 = vadd.f32 %v513, %v1109
        %v1111 = vpop.f32.mrb[0].mxu0
        %v1112 = vadd.f32 %v513, %v1111
        %1113 = vmatprep.mubr.f32.mxu0 0.0
        %1114 = vmatmul.mubr.f32.gmra.mrb[0].mxu0 %v795
        %v1115 = vpop.f32.mrb[0].mxu0
        %v1116 = vadd.f32 %v518, %v1115
        %v1117 = vpop.f32.mrb[0].mxu0
        %v1118 = vadd.f32 %v518, %v1117
        %1119 = vmatprep.mubr.f32.mxu0 0.0
        %1120 = vmatmul.mubr.f32.gmra.mrb[0].mxu0 %v798
        %v1121 = vpop.f32.mrb[0].mxu0
        %v1122 = vadd.f32 %v523, %v1121
        %v1123 = vpop.f32.mrb[0].mxu0
        %v1124 = vadd.f32 %v523, %v1123
        %1125 = vmatprep.mubr.f32.mxu0 0.0
        %1126 = vmatmul.mubr.f32.gmra.mrb[0].mxu0 %v801
        %v1127 = vpop.f32.mrb[0].mxu0
        %v1128 = vadd.f32 %v528, %v1127
        %v1129 = vpop.f32.mrb[0].mxu0
        %v1130 = vadd.f32 %v528, %v1129
        %1131 = vmatprep.mubr.f32.mxu0 0.0
        %1132 = vmatmul.mubr.f32.gmra.mrb[0].mxu0 %v804
        %v1133 = vpop.f32.mrb[0].mxu0
        %v1134 = vadd.f32 %v533, %v1133
        %v1135 = vpop.f32.mrb[0].mxu0
        %v1136 = vadd.f32 %v533, %v1135
        %1137 = vmatprep.mubr.f32.mxu0 0.0
        %1138 = vmatmul.mubr.f32.gmra.mrb[0].mxu0 %v807
        %v1139 = vpop.f32.mrb[0].mxu0
        %v1140 = vadd.f32 %v538, %v1139
        %v1141 = vpop.f32.mrb[0].mxu0
        %v1142 = vadd.f32 %v538, %v1141
        %1143 = vmatprep.mubr.f32.mxu0 0.0
        %1144 = vmatmul.mubr.f32.gmra.mrb[0].mxu0 %v810
        %v1145 = vpop.f32.mrb[0].mxu0
        %v1146 = vadd.f32 %v543, %v1145
        %v1147 = vpop.f32.mrb[0].mxu0
        %v1148 = vadd.f32 %v543, %v1147
        %1149 = vmatprep.mubr.f32.mxu0 0.0
        %1150 = vmatmul.mubr.f32.gmra.mrb[0].mxu0 %v813
        %v1151 = vpop.f32.mrb[0].mxu0
        %v1152 = vadd.f32 %v548, %v1151
        %v1153 = vpop.f32.mrb[0].mxu0
        %v1154 = vadd.f32 %v548, %v1153
        %1155 = vmatprep.mubr.f32.mxu0 0.0
        %1156 = vmatmul.mubr.f32.gmra.mrb[0].mxu0 %v816
        %v1157 = vpop.f32.mrb[0].mxu0
        %v1158 = vadd.f32 %v553, %v1157
        %v1159 = vpop.f32.mrb[0].mxu0
        %v1160 = vadd.f32 %v553, %v1159
        %1161 = vmatprep.mubr.f32.mxu0 0.0
        %1162 = vmatmul.mubr.f32.gmra.mrb[0].mxu0 %v819
        %v1163 = vpop.f32.mrb[0].mxu0
        %v1164 = vadd.f32 %v558, %v1163
        %v1165 = vpop.f32.mrb[0].mxu0
        %v1166 = vadd.f32 %v558, %v1165
        %1167 = vmatprep.mubr.f32.mxu0 0.0
        %1168 = vmatmul.mubr.f32.gmra.mrb[0].mxu0 %v822
        %v1169 = vpop.f32.mrb[0].mxu0
        %v1170 = vadd.f32 %v563, %v1169
        %v1171 = vpop.f32.mrb[0].mxu0
        %v1172 = vadd.f32 %v563, %v1171
        %1173 = vmatprep.mubr.f32.mxu0 0.0
        %1174 = vmatmul.mubr.f32.gmra.mrb[0].mxu0 %v825
        %v1175 = vpop.f32.mrb[0].mxu0
        %v1176 = vadd.f32 %v568, %v1175
        %v1177 = vpop.f32.mrb[0].mxu0
        %v1178 = vadd.f32 %v568, %v1177
        %1179 = vmatprep.mubr.f32.mxu0 0.0
        %1180 = vmatmul.mubr.f32.gmra.mrb[0].mxu0 %v828
        %v1181 = vpop.f32.mrb[0].mxu0
        %v1182 = vadd.f32 %v573, %v1181
        %v1183 = vpop.f32.mrb[0].mxu0
        %v1184 = vadd.f32 %v573, %v1183
        %1185 = vmatprep.mubr.f32.mxu0 0.0
        %1186 = vmatmul.mubr.f32.gmra.mrb[0].mxu0 %v831
        %v1187 = vpop.f32.mrb[0].mxu0
        %v1188 = vadd.f32 %v578, %v1187
        %v1189 = vpop.f32.mrb[0].mxu0
        %v1190 = vadd.f32 %v578, %v1189
        %1191 = vmatprep.mubr.f32.mxu0 0.0
        %1192 = vmatmul.mubr.f32.gmra.mrb[0].mxu0 %v834
        %v1193 = vpop.f32.mrb[0].mxu0
        %v1194 = vadd.f32 %v583, %v1193
        %v1195 = vpop.f32.mrb[0].mxu0
        %v1196 = vadd.f32 %v583, %v1195
        %1197 = vmatprep.mubr.f32.mxu0 0.0
        %1198 = vmatmul.mubr.f32.gmra.mrb[0].mxu0 %v837
        %v1199 = vpop.f32.mrb[0].mxu0
        %v1200 = vadd.f32 %v588, %v1199
        %v1201 = vpop.f32.mrb[0].mxu0
        %v1202 = vadd.f32 %v588, %v1201
        %1203 = vmatprep.mubr.f32.mxu0 0.0
        %1204 = vmatmul.mubr.f32.gmra.mrb[0].mxu0 %v840
        %v1205 = vpop.f32.mrb[0].mxu0
        %v1206 = vadd.f32 %v593, %v1205
        %v1207 = vpop.f32.mrb[0].mxu0
        %v1208 = vadd.f32 %v593, %v1207
        %1209 = vmatprep.mubr.f32.mxu0 0.0
        %1210 = vmatmul.mubr.f32.gmra.mrb[0].mxu0 %v843
        %v1211 = vpop.f32.mrb[0].mxu0
        %v1212 = vadd.f32 %v598, %v1211
        %v1213 = vpop.f32.mrb[0].mxu0
        %v1214 = vadd.f32 %v598, %v1213
        %1215 = vmatprep.mubr.f32.mxu0 0.0
        %1216 = vmatmul.mubr.f32.gmra.mrb[0].mxu0 %v846
        %v1217 = vpop.f32.mrb[0].mxu0
        %v1218 = vadd.f32 %v603, %v1217
        %v1219 = vpop.f32.mrb[0].mxu0
        %v1220 = vadd.f32 %v603, %v1219
        %1221 = vmatprep.mubr.f32.mxu0 0.0
        %1222 = vmatmul.mubr.f32.gmra.mrb[0].mxu0 %v849
        %v1223 = vpop.f32.mrb[0].mxu0
        %v1224 = vadd.f32 %v608, %v1223
        %v1225 = vpop.f32.mrb[0].mxu0
        %v1226 = vadd.f32 %v608, %v1225
        %1227 = vmatprep.mubr.f32.mxu0 0.0
        %1228 = vmatmul.mubr.f32.gmra.mrb[0].mxu0 %v852
        %v1229 = vpop.f32.mrb[0].mxu0
        %v1230 = vadd.f32 %v613, %v1229
        %v1231 = vpop.f32.mrb[0].mxu0
        %v1232 = vadd.f32 %v613, %v1231
        %1233 = vmatprep.mubr.f32.mxu0 0.0
        %1234 = vmatmul.mubr.f32.gmra.mrb[0].mxu0 %v855
        %v1235 = vpop.f32.mrb[0].mxu0
        %v1236 = vadd.f32 %v618, %v1235
        %v1237 = vpop.f32.mrb[0].mxu0
        %v1238 = vadd.f32 %v618, %v1237
        %1239 = vmatprep.mubr.f32.mxu0 0.0
        %1240 = vmatmul.mubr.f32.gmra.mrb[0].mxu0 %v858
        %v1241 = vpop.f32.mrb[0].mxu0
        %v1242 = vadd.f32 %v623, %v1241
        %v1243 = vpop.f32.mrb[0].mxu0
        %v1244 = vadd.f32 %v623, %v1243
        %1245 = vmatprep.mubr.f32.mxu0 0.0
        %1246 = vmatmul.mubr.f32.gmra.mrb[0].mxu0 %v861
        %v1247 = vpop.f32.mrb[0].mxu0
        %v1248 = vadd.f32 %v628, %v1247
        %v1249 = vpop.f32.mrb[0].mxu0
        %v1250 = vadd.f32 %v628, %v1249
        %1251 = vmatprep.mubr.f32.mxu0 0.0
        %1252 = vmatmul.mubr.f32.gmra.mrb[0].mxu0 %v864
        %v1253 = vpop.f32.mrb[0].mxu0
        %v1254 = vadd.f32 %v633, %v1253
        %v1255 = vpop.f32.mrb[0].mxu0
        %v1256 = vadd.f32 %v633, %v1255
        %1257 = vmatprep.mubr.f32.mxu0 0.0
        %1258 = vmatmul.mubr.f32.gmra.mrb[0].mxu0 %v867
        %v1259 = vpop.f32.mrb[0].mxu0
        %v1260 = vadd.f32 %v638, %v1259
        %v1261 = vpop.f32.mrb[0].mxu0
        %v1262 = vadd.f32 %v638, %v1261
        %1263 = vmatprep.mubr.f32.mxu0 0.0
        %1264 = vmatmul.mubr.f32.gmra.mrb[0].mxu0 %v870
        %v1265 = vpop.f32.mrb[0].mxu0
        %v1266 = vadd.f32 %v643, %v1265
        %v1267 = vpop.f32.mrb[0].mxu0
        %v1268 = vadd.f32 %v643, %v1267
        %1269 = vmatprep.mubr.f32.mxu0 0.0
        %1270 = vmatmul.mubr.f32.gmra.mrb[0].mxu0 %v873
        %v1271 = vpop.f32.mrb[0].mxu0
        %v1272 = vadd.f32 %v648, %v1271
        %v1273 = vpop.f32.mrb[0].mxu0
        %v1274 = vadd.f32 %v648, %v1273
        %1275 = vmatprep.mubr.f32.mxu0 0.0
        %1276 = vmatmul.mubr.f32.gmra.mrb[0].mxu0 %v876
        %v1277 = vpop.f32.mrb[0].mxu0
        %v1278 = vadd.f32 %v653, %v1277
        %v1279 = vpop.f32.mrb[0].mxu0
        %v1280 = vadd.f32 %v653, %v1279
        %1281 = vmatprep.mubr.f32.mxu0 0.0
        %1282 = vmatmul.mubr.f32.gmra.mrb[0].mxu0 %v879
        %v1283 = vpop.f32.mrb[0].mxu0
        %v1284 = vadd.f32 %v658, %v1283
        %v1285 = vpop.f32.mrb[0].mxu0
        %v1286 = vadd.f32 %v658, %v1285
        %1287 = vmatprep.mubr.f32.mxu0 0.0
        %1288 = vmatmul.mubr.f32.gmra.mrb[0].mxu0 %v882
        %v1289 = vpop.f32.mrb[0].mxu0
        %v1290 = vadd.f32 %v663, %v1289
        %v1291 = vpop.f32.mrb[0].mxu0
        %v1292 = vadd.f32 %v663, %v1291
        %1293 = vmatprep.mubr.f32.mxu0 0.0
        %1294 = vmatmul.mubr.f32.gmra.mrb[0].mxu0 %v885
        %v1295 = vpop.f32.mrb[0].mxu0
        %v1296 = vadd.f32 %v668, %v1295
        %v1297 = vpop.f32.mrb[0].mxu0
        %v1298 = vadd.f32 %v668, %v1297
        %1299 = vmatprep.mubr.f32.mxu0 0.0
        %1300 = vmatmul.mubr.f32.gmra.mrb[0].mxu0 %v888
        %v1301 = vpop.f32.mrb[0].mxu0
        %v1302 = vadd.f32 %v673, %v1301
        %v1303 = vpop.f32.mrb[0].mxu0
        %v1304 = vadd.f32 %v673, %v1303
        %1305 = vmatprep.mubr.f32.mxu0 0.0
        %1306 = vmatmul.mubr.f32.gmra.mrb[0].mxu0 %v891
        %v1307 = vpop.f32.mrb[0].mxu0
        %v1308 = vadd.f32 %v678, %v1307
        %v1309 = vpop.f32.mrb[0].mxu0
        %v1310 = vadd.f32 %v678, %v1309
        %1311 = vmatprep.mubr.f32.mxu0 0.0
        %1312 = vmatmul.mubr.f32.gmra.mrb[0].mxu0 %v894
        %v1313 = vpop.f32.mrb[0].mxu0
        %v1314 = vadd.f32 %v683, %v1313
        %v1315 = vpop.f32.mrb[0].mxu0
        %v1316 = vadd.f32 %v683, %v1315
        %1317 = vmatprep.mubr.f32.mxu0 0.0
        %1318 = vmatmul.mubr.f32.gmra.mrb[0].mxu0 %v897
        %v1319 = vpop.f32.mrb[0].mxu0
        %v1320 = vadd.f32 %v688, %v1319
        %v1321 = vpop.f32.mrb[0].mxu0
        %v1322 = vadd.f32 %v688, %v1321
        %1323 = vmatprep.mubr.f32.mxu0 0.0
        %1324 = vmatmul.mubr.f32.gmra.mrb[0].mxu0 %v900
        %v1325 = vpop.f32.mrb[0].mxu0
        %v1326 = vadd.f32 %v693, %v1325
        %v1327 = vpop.f32.mrb[0].mxu0
        %v1328 = vadd.f32 %v693, %v1327
        %1329 = vmatprep.mubr.f32.mxu0 0.0
        %1330 = vmatmul.mubr.f32.gmra.mrb[0].mxu0 %v903
        %v1331 = vpop.f32.mrb[0].mxu0
        %v1332 = vadd.f32 %v698, %v1331
        %v1333 = vpop.f32.mrb[0].mxu0
        %v1334 = vadd.f32 %v698, %v1333
        %1335 = vmatprep.mubr.f32.mxu0 0.0
        %1336 = vmatmul.mubr.f32.gmra.mrb[0].mxu0 %v906
        %v1337 = vpop.f32.mrb[0].mxu0
        %v1338 = vadd.f32 %v703, %v1337
        %v1339 = vpop.f32.mrb[0].mxu0
        %v1340 = vadd.f32 %v703, %v1339
        %1341 = vmatprep.mubr.f32.mxu0 0.0
        %1342 = vmatmul.mubr.f32.gmra.mrb[0].mxu0 %v909
        %v1343 = vpop.f32.mrb[0].mxu0
        %v1344 = vadd.f32 %v708, %v1343
        %v1345 = vpop.f32.mrb[0].mxu0
        %v1346 = vadd.f32 %v708, %v1345
        %1347 = vmatprep.mubr.f32.mxu0 0.0
        %1348 = vmatmul.mubr.f32.gmra.mrb[0].mxu0 %v912
        %v1349 = vpop.f32.mrb[0].mxu0
        %v1350 = vadd.f32 %v713, %v1349
        %v1351 = vpop.f32.mrb[0].mxu0
        %v1352 = vadd.f32 %v713, %v1351
        %1353 = vmatprep.mubr.f32.mxu0 0.0
        %1354 = vmatmul.mubr.f32.gmra.mrb[0].mxu0 %v915
        %v1355 = vpop.f32.mrb[0].mxu0
        %v1356 = vadd.f32 %v718, %v1355
        %v1357 = vpop.f32.mrb[0].mxu0
        %v1358 = vadd.f32 %v718, %v1357
        %1359 = vmatprep.mubr.f32.mxu0 0.0
        %1360 = vmatmul.mubr.f32.gmra.mrb[0].mxu0 %v918
        %v1361 = vpop.f32.mrb[0].mxu0
        %v1362 = vadd.f32 %v723, %v1361
        %v1363 = vpop.f32.mrb[0].mxu0
        %v1364 = vadd.f32 %v723, %v1363
        %1365 = vmatprep.mubr.f32.mxu0 0.0
        %1366 = vmatmul.mubr.f32.gmra.mrb[0].mxu0 %v921
        %v1367 = vpop.f32.mrb[0].mxu0
        %v1368 = vadd.f32 %v728, %v1367
        %v1369 = vpop.f32.mrb[0].mxu0
        %v1370 = vadd.f32 %v728, %v1369
        %1371 = vdwg.mxu0
        %vm1372 = vcmp.ge.f32.partialorder %v990, 0.0
        %vm1373 = vcmp.ge.f32.partialorder %v992, 0.0
        %vm1374 = vcmp.ge.f32.partialorder %v996, 0.0
        %vm1375 = vcmp.ge.f32.partialorder %v998, 0.0
        %vm1376 = vcmp.ge.f32.partialorder %v1002, 0.0
        %vm1377 = vcmp.ge.f32.partialorder %v1004, 0.0
        %vm1378 = vcmp.ge.f32.partialorder %v1008, 0.0
        %vm1379 = vcmp.ge.f32.partialorder %v1010, 0.0
        %vm1380 = vcmp.ge.f32.partialorder %v1014, 0.0
        %vm1381 = vcmp.ge.f32.partialorder %v1016, 0.0
        %vm1382 = vcmp.ge.f32.partialorder %v1020, 0.0
        %vm1383 = vcmp.ge.f32.partialorder %v1022, 0.0
        %vm1384 = vcmp.ge.f32.partialorder %v1026, 0.0
        %vm1385 = vcmp.ge.f32.partialorder %v1028, 0.0
        %vm1386 = vcmp.ge.f32.partialorder %v1032, 0.0
        %vm1387 = vcmp.ge.f32.partialorder %v1034, 0.0
        %vm1388 = vcmp.ge.f32.partialorder %v1038, 0.0
        %vm1389 = vcmp.ge.f32.partialorder %v1040, 0.0
        %vm1390 = vcmp.ge.f32.partialorder %v1044, 0.0
        %vm1391 = vcmp.ge.f32.partialorder %v1046, 0.0
        %vm1392 = vcmp.ge.f32.partialorder %v1050, 0.0
        %vm1393 = vcmp.ge.f32.partialorder %v1052, 0.0
        %vm1394 = vcmp.ge.f32.partialorder %v1056, 0.0
        %vm1395 = vcmp.ge.f32.partialorder %v1058, 0.0
        %vm1396 = vcmp.ge.f32.partialorder %v1062, 0.0
        %vm1397 = vcmp.ge.f32.partialorder %v1064, 0.0
        %vm1398 = vcmp.ge.f32.partialorder %v1068, 0.0
        %vm1399 = vcmp.ge.f32.partialorder %v1070, 0.0
        %vm1400 = vcmp.ge.f32.partialorder %v1074, 0.0
        %vm1401 = vcmp.ge.f32.partialorder %v1076, 0.0
        %vm1402 = vcmp.ge.f32.partialorder %v1080, 0.0
        %vm1403 = vcmp.ge.f32.partialorder %v1082, 0.0
        %vm1404 = vcmp.ge.f32.partialorder %v1086, 0.0
        %vm1405 = vcmp.ge.f32.partialorder %v1088, 0.0
        %vm1406 = vcmp.ge.f32.partialorder %v1092, 0.0
        %vm1407 = vcmp.ge.f32.partialorder %v1094, 0.0
        %vm1408 = vcmp.ge.f32.partialorder %v1098, 0.0
        %vm1409 = vcmp.ge.f32.partialorder %v1100, 0.0
        %vm1410 = vcmp.ge.f32.partialorder %v1104, 0.0
        %vm1411 = vcmp.ge.f32.partialorder %v1106, 0.0
        %vm1412 = vcmp.ge.f32.partialorder %v1110, 0.0
        %vm1413 = vcmp.ge.f32.partialorder %v1112, 0.0
        %vm1414 = vcmp.ge.f32.partialorder %v1116, 0.0
        %vm1415 = vcmp.ge.f32.partialorder %v1118, 0.0
        %vm1416 = vcmp.ge.f32.partialorder %v1122, 0.0
        %vm1417 = vcmp.ge.f32.partialorder %v1124, 0.0
        %vm1418 = vcmp.ge.f32.partialorder %v1128, 0.0
        %vm1419 = vcmp.ge.f32.partialorder %v1130, 0.0
        %vm1420 = vcmp.ge.f32.partialorder %v1134, 0.0
        %vm1421 = vcmp.ge.f32.partialorder %v1136, 0.0
        %vm1422 = vcmp.ge.f32.partialorder %v1140, 0.0
        %vm1423 = vcmp.ge.f32.partialorder %v1142, 0.0
        %vm1424 = vcmp.ge.f32.partialorder %v1146, 0.0
        %vm1425 = vcmp.ge.f32.partialorder %v1148, 0.0
        %vm1426 = vcmp.ge.f32.partialorder %v1152, 0.0
        %vm1427 = vcmp.ge.f32.partialorder %v1154, 0.0
        %vm1428 = vcmp.ge.f32.partialorder %v1158, 0.0
        %vm1429 = vcmp.ge.f32.partialorder %v1160, 0.0
        %vm1430 = vcmp.ge.f32.partialorder %v1164, 0.0
        %vm1431 = vcmp.ge.f32.partialorder %v1166, 0.0
        %vm1432 = vcmp.ge.f32.partialorder %v1170, 0.0
        %vm1433 = vcmp.ge.f32.partialorder %v1172, 0.0
        %vm1434 = vcmp.ge.f32.partialorder %v1176, 0.0
        %vm1435 = vcmp.ge.f32.partialorder %v1178, 0.0
        %vm1436 = vcmp.ge.f32.partialorder %v1182, 0.0
        %vm1437 = vcmp.ge.f32.partialorder %v1184, 0.0
        %vm1438 = vcmp.ge.f32.partialorder %v1188, 0.0
        %vm1439 = vcmp.ge.f32.partialorder %v1190, 0.0
        %vm1440 = vcmp.ge.f32.partialorder %v1194, 0.0
        %vm1441 = vcmp.ge.f32.partialorder %v1196, 0.0
        %vm1442 = vcmp.ge.f32.partialorder %v1200, 0.0
        %vm1443 = vcmp.ge.f32.partialorder %v1202, 0.0
        %vm1444 = vcmp.ge.f32.partialorder %v1206, 0.0
        %vm1445 = vcmp.ge.f32.partialorder %v1208, 0.0
        %vm1446 = vcmp.ge.f32.partialorder %v1212, 0.0
        %vm1447 = vcmp.ge.f32.partialorder %v1214, 0.0
        %vm1448 = vcmp.ge.f32.partialorder %v1218, 0.0
        %vm1449 = vcmp.ge.f32.partialorder %v1220, 0.0
        %vm1450 = vcmp.ge.f32.partialorder %v1224, 0.0
        %vm1451 = vcmp.ge.f32.partialorder %v1226, 0.0
        %vm1452 = vcmp.ge.f32.partialorder %v1230, 0.0
        %vm1453 = vcmp.ge.f32.partialorder %v1232, 0.0
        %vm1454 = vcmp.ge.f32.partialorder %v1236, 0.0
        %vm1455 = vcmp.ge.f32.partialorder %v1238, 0.0
        %vm1456 = vcmp.ge.f32.partialorder %v1242, 0.0
        %vm1457 = vcmp.ge.f32.partialorder %v1244, 0.0
        %vm1458 = vcmp.ge.f32.partialorder %v1248, 0.0
        %vm1459 = vcmp.ge.f32.partialorder %v1250, 0.0
        %vm1460 = vcmp.ge.f32.partialorder %v1254, 0.0
        %vm1461 = vcmp.ge.f32.partialorder %v1256, 0.0
        %vm1462 = vcmp.ge.f32.partialorder %v1260, 0.0
        %vm1463 = vcmp.ge.f32.partialorder %v1262, 0.0
        %vm1464 = vcmp.ge.f32.partialorder %v1266, 0.0
        %vm1465 = vcmp.ge.f32.partialorder %v1268, 0.0
        %vm1466 = vcmp.ge.f32.partialorder %v1272, 0.0
        %vm1467 = vcmp.ge.f32.partialorder %v1274, 0.0
        %vm1468 = vcmp.ge.f32.partialorder %v1278, 0.0
        %vm1469 = vcmp.ge.f32.partialorder %v1280, 0.0
        %vm1470 = vcmp.ge.f32.partialorder %v1284, 0.0
        %vm1471 = vcmp.ge.f32.partialorder %v1286, 0.0
        %vm1472 = vcmp.ge.f32.partialorder %v1290, 0.0
        %vm1473 = vcmp.ge.f32.partialorder %v1292, 0.0
        %vm1474 = vcmp.ge.f32.partialorder %v1296, 0.0
        %vm1475 = vcmp.ge.f32.partialorder %v1298, 0.0
        %vm1476 = vcmp.ge.f32.partialorder %v1302, 0.0
        %vm1477 = vcmp.ge.f32.partialorder %v1304, 0.0
        %vm1478 = vcmp.ge.f32.partialorder %v1308, 0.0
        %vm1479 = vcmp.ge.f32.partialorder %v1310, 0.0
        %vm1480 = vcmp.ge.f32.partialorder %v1314, 0.0
        %vm1481 = vcmp.ge.f32.partialorder %v1316, 0.0
        %vm1482 = vcmp.ge.f32.partialorder %v1320, 0.0
        %vm1483 = vcmp.ge.f32.partialorder %v1322, 0.0
        %vm1484 = vcmp.ge.f32.partialorder %v1326, 0.0
        %vm1485 = vcmp.ge.f32.partialorder %v1328, 0.0
        %vm1486 = vcmp.ge.f32.partialorder %v1332, 0.0
        %vm1487 = vcmp.ge.f32.partialorder %v1334, 0.0
        %vm1488 = vcmp.ge.f32.partialorder %v1338, 0.0
        %vm1489 = vcmp.ge.f32.partialorder %v1340, 0.0
        %vm1490 = vcmp.ge.f32.partialorder %v1344, 0.0
        %vm1491 = vcmp.ge.f32.partialorder %v1346, 0.0
        %vm1492 = vcmp.ge.f32.partialorder %v1350, 0.0
        %vm1493 = vcmp.ge.f32.partialorder %v1352, 0.0
        %vm1494 = vcmp.ge.f32.partialorder %v1356, 0.0
        %vm1495 = vcmp.ge.f32.partialorder %v1358, 0.0
        %vm1496 = vcmp.ge.f32.partialorder %v1362, 0.0
        %vm1497 = vcmp.ge.f32.partialorder %v1364, 0.0
        %vm1498 = vcmp.ge.f32.partialorder %v1368, 0.0
        %vm1499 = vcmp.ge.f32.partialorder %v1370, 0.0
        %v1500 = vsub.f32 0.0, %v990
        %v1501 = vsub.f32 0.0, %v992
        %v1502 = vsub.f32 0.0, %v996
        %v1503 = vsub.f32 0.0, %v998
        %v1504 = vsub.f32 0.0, %v1002
        %v1505 = vsub.f32 0.0, %v1004
        %v1506 = vsub.f32 0.0, %v1008
        %v1507 = vsub.f32 0.0, %v1010
        %v1508 = vsub.f32 0.0, %v1014
        %v1509 = vsub.f32 0.0, %v1016
        %v1510 = vsub.f32 0.0, %v1020
        %v1511 = vsub.f32 0.0, %v1022
        %v1512 = vsub.f32 0.0, %v1026
        %v1513 = vsub.f32 0.0, %v1028
        %v1514 = vsub.f32 0.0, %v1032
        %v1515 = vsub.f32 0.0, %v1034
        %v1516 = vsub.f32 0.0, %v1038
        %v1517 = vsub.f32 0.0, %v1040
        %v1518 = vsub.f32 0.0, %v1044
        %v1519 = vsub.f32 0.0, %v1046
        %v1520 = vsub.f32 0.0, %v1050
        %v1521 = vsub.f32 0.0, %v1052
        %v1522 = vsub.f32 0.0, %v1056
        %v1523 = vsub.f32 0.0, %v1058
        %v1524 = vsub.f32 0.0, %v1062
        %v1525 = vsub.f32 0.0, %v1064
        %v1526 = vsub.f32 0.0, %v1068
        %v1527 = vsub.f32 0.0, %v1070
        %v1528 = vsub.f32 0.0, %v1074
        %v1529 = vsub.f32 0.0, %v1076
        %v1530 = vsub.f32 0.0, %v1080
        %v1531 = vsub.f32 0.0, %v1082
        %v1532 = vsub.f32 0.0, %v1086
        %v1533 = vsub.f32 0.0, %v1088
        %v1534 = vsub.f32 0.0, %v1092
        %v1535 = vsub.f32 0.0, %v1094
        %v1536 = vsub.f32 0.0, %v1098
        %v1537 = vsub.f32 0.0, %v1100
        %v1538 = vsub.f32 0.0, %v1104
        %v1539 = vsub.f32 0.0, %v1106
        %v1540 = vsub.f32 0.0, %v1110
        %v1541 = vsub.f32 0.0, %v1112
        %v1542 = vsub.f32 0.0, %v1116
        %v1543 = vsub.f32 0.0, %v1118
        %v1544 = vsub.f32 0.0, %v1122
        %v1545 = vsub.f32 0.0, %v1124
        %v1546 = vsub.f32 0.0, %v1128
        %v1547 = vsub.f32 0.0, %v1130
        %v1548 = vsub.f32 0.0, %v1134
        %v1549 = vsub.f32 0.0, %v1136
        %v1550 = vsub.f32 0.0, %v1140
        %v1551 = vsub.f32 0.0, %v1142
        %v1552 = vsub.f32 0.0, %v1146
        %v1553 = vsub.f32 0.0, %v1148
        %v1554 = vsub.f32 0.0, %v1152
        %v1555 = vsub.f32 0.0, %v1154
        %v1556 = vsub.f32 0.0, %v1158
        %v1557 = vsub.f32 0.0, %v1160
        %v1558 = vsub.f32 0.0, %v1164
        %v1559 = vsub.f32 0.0, %v1166
        %v1560 = vsub.f32 0.0, %v1170
        %v1561 = vsub.f32 0.0, %v1172
        %v1562 = vsub.f32 0.0, %v1176
        %v1563 = vsub.f32 0.0, %v1178
        %v1564 = vsub.f32 0.0, %v1182
        %v1565 = vsub.f32 0.0, %v1184
        %v1566 = vsub.f32 0.0, %v1188
        %v1567 = vsub.f32 0.0, %v1190
        %v1568 = vsub.f32 0.0, %v1194
        %v1569 = vsub.f32 0.0, %v1196
        %v1570 = vsub.f32 0.0, %v1200
        %v1571 = vsub.f32 0.0, %v1202
        %v1572 = vsub.f32 0.0, %v1206
        %v1573 = vsub.f32 0.0, %v1208
        %v1574 = vsub.f32 0.0, %v1212
        %v1575 = vsub.f32 0.0, %v1214
        %v1576 = vsub.f32 0.0, %v1218
        %v1577 = vsub.f32 0.0, %v1220
        %v1578 = vsub.f32 0.0, %v1224
        %v1579 = vsub.f32 0.0, %v1226
        %v1580 = vsub.f32 0.0, %v1230
        %v1581 = vsub.f32 0.0, %v1232
        %v1582 = vsub.f32 0.0, %v1236
        %v1583 = vsub.f32 0.0, %v1238
        %v1584 = vsub.f32 0.0, %v1242
        %v1585 = vsub.f32 0.0, %v1244
        %v1586 = vsub.f32 0.0, %v1248
        %v1587 = vsub.f32 0.0, %v1250
        %v1588 = vsub.f32 0.0, %v1254
        %v1589 = vsub.f32 0.0, %v1256
        %v1590 = vsub.f32 0.0, %v1260
        %v1591 = vsub.f32 0.0, %v1262
        %v1592 = vsub.f32 0.0, %v1266
        %v1593 = vsub.f32 0.0, %v1268
        %v1594 = vsub.f32 0.0, %v1272
        %v1595 = vsub.f32 0.0, %v1274
        %v1596 = vsub.f32 0.0, %v1278
        %v1597 = vsub.f32 0.0, %v1280
        %v1598 = vsub.f32 0.0, %v1284
        %v1599 = vsub.f32 0.0, %v1286
        %v1600 = vsub.f32 0.0, %v1290
        %v1601 = vsub.f32 0.0, %v1292
        %v1602 = vsub.f32 0.0, %v1296
        %v1603 = vsub.f32 0.0, %v1298
        %v1604 = vsub.f32 0.0, %v1302
        %v1605 = vsub.f32 0.0, %v1304
        %v1606 = vsub.f32 0.0, %v1308
        %v1607 = vsub.f32 0.0, %v1310
        %v1608 = vsub.f32 0.0, %v1314
        %v1609 = vsub.f32 0.0, %v1316
        %v1610 = vsub.f32 0.0, %v1320
        %v1611 = vsub.f32 0.0, %v1322
        %v1612 = vsub.f32 0.0, %v1326
        %v1613 = vsub.f32 0.0, %v1328
        %v1614 = vsub.f32 0.0, %v1332
        %v1615 = vsub.f32 0.0, %v1334
        %v1616 = vsub.f32 0.0, %v1338
        %v1617 = vsub.f32 0.0, %v1340
        %v1618 = vsub.f32 0.0, %v1344
        %v1619 = vsub.f32 0.0, %v1346
        %v1620 = vsub.f32 0.0, %v1350
        %v1621 = vsub.f32 0.0, %v1352
        %v1622 = vsub.f32 0.0, %v1356
        %v1623 = vsub.f32 0.0, %v1358
        %v1624 = vsub.f32 0.0, %v1362
        %v1625 = vsub.f32 0.0, %v1364
        %v1626 = vsub.f32 0.0, %v1368
        %v1627 = vsub.f32 0.0, %v1370
        %v1628 = vsel %vm1372, %v1500, %v990
        %v1629 = vsel %vm1373, %v1501, %v992
        %v1630 = vsel %vm1374, %v1502, %v996
        %v1631 = vsel %vm1375, %v1503, %v998
        %v1632 = vsel %vm1376, %v1504, %v1002
        %v1633 = vsel %vm1377, %v1505, %v1004
        %v1634 = vsel %vm1378, %v1506, %v1008
        %v1635 = vsel %vm1379, %v1507, %v1010
        %v1636 = vsel %vm1380, %v1508, %v1014
        %v1637 = vsel %vm1381, %v1509, %v1016
        %v1638 = vsel %vm1382, %v1510, %v1020
        %v1639 = vsel %vm1383, %v1511, %v1022
        %v1640 = vsel %vm1384, %v1512, %v1026
        %v1641 = vsel %vm1385, %v1513, %v1028
        %v1642 = vsel %vm1386, %v1514, %v1032
        %v1643 = vsel %vm1387, %v1515, %v1034
        %v1644 = vsel %vm1388, %v1516, %v1038
        %v1645 = vsel %vm1389, %v1517, %v1040
        %v1646 = vsel %vm1390, %v1518, %v1044
        %v1647 = vsel %vm1391, %v1519, %v1046
        %v1648 = vsel %vm1392, %v1520, %v1050
        %v1649 = vsel %vm1393, %v1521, %v1052
        %v1650 = vsel %vm1394, %v1522, %v1056
        %v1651 = vsel %vm1395, %v1523, %v1058
        %v1652 = vsel %vm1396, %v1524, %v1062
        %v1653 = vsel %vm1397, %v1525, %v1064
        %v1654 = vsel %vm1398, %v1526, %v1068
        %v1655 = vsel %vm1399, %v1527, %v1070
        %v1656 = vsel %vm1400, %v1528, %v1074
        %v1657 = vsel %vm1401, %v1529, %v1076
        %v1658 = vsel %vm1402, %v1530, %v1080
        %v1659 = vsel %vm1403, %v1531, %v1082
        %v1660 = vsel %vm1404, %v1532, %v1086
        %v1661 = vsel %vm1405, %v1533, %v1088
        %v1662 = vsel %vm1406, %v1534, %v1092
        %v1663 = vsel %vm1407, %v1535, %v1094
        %v1664 = vsel %vm1408, %v1536, %v1098
        %v1665 = vsel %vm1409, %v1537, %v1100
        %v1666 = vsel %vm1410, %v1538, %v1104
        %v1667 = vsel %vm1411, %v1539, %v1106
        %v1668 = vsel %vm1412, %v1540, %v1110
        %v1669 = vsel %vm1413, %v1541, %v1112
        %v1670 = vsel %vm1414, %v1542, %v1116
        %v1671 = vsel %vm1415, %v1543, %v1118
        %v1672 = vsel %vm1416, %v1544, %v1122
        %v1673 = vsel %vm1417, %v1545, %v1124
        %v1674 = vsel %vm1418, %v1546, %v1128
        %v1675 = vsel %vm1419, %v1547, %v1130
        %v1676 = vsel %vm1420, %v1548, %v1134
        %v1677 = vsel %vm1421, %v1549, %v1136
        %v1678 = vsel %vm1422, %v1550, %v1140
        %v1679 = vsel %vm1423, %v1551, %v1142
        %v1680 = vsel %vm1424, %v1552, %v1146
        %v1681 = vsel %vm1425, %v1553, %v1148
        %v1682 = vsel %vm1426, %v1554, %v1152
        %v1683 = vsel %vm1427, %v1555, %v1154
        %v1684 = vsel %vm1428, %v1556, %v1158
        %v1685 = vsel %vm1429, %v1557, %v1160
        %v1686 = vsel %vm1430, %v1558, %v1164
        %v1687 = vsel %vm1431, %v1559, %v1166
        %v1688 = vsel %vm1432, %v1560, %v1170
        %v1689 = vsel %vm1433, %v1561, %v1172
        %v1690 = vsel %vm1434, %v1562, %v1176
        %v1691 = vsel %vm1435, %v1563, %v1178
        %v1692 = vsel %vm1436, %v1564, %v1182
        %v1693 = vsel %vm1437, %v1565, %v1184
        %v1694 = vsel %vm1438, %v1566, %v1188
        %v1695 = vsel %vm1439, %v1567, %v1190
        %v1696 = vsel %vm1440, %v1568, %v1194
        %v1697 = vsel %vm1441, %v1569, %v1196
        %v1698 = vsel %vm1442, %v1570, %v1200
        %v1699 = vsel %vm1443, %v1571, %v1202
        %v1700 = vsel %vm1444, %v1572, %v1206
        %v1701 = vsel %vm1445, %v1573, %v1208
        %v1702 = vsel %vm1446, %v1574, %v1212
        %v1703 = vsel %vm1447, %v1575, %v1214
        %v1704 = vsel %vm1448, %v1576, %v1218
        %v1705 = vsel %vm1449, %v1577, %v1220
        %v1706 = vsel %vm1450, %v1578, %v1224
        %v1707 = vsel %vm1451, %v1579, %v1226
        %v1708 = vsel %vm1452, %v1580, %v1230
        %v1709 = vsel %vm1453, %v1581, %v1232
        %v1710 = vsel %vm1454, %v1582, %v1236
        %v1711 = vsel %vm1455, %v1583, %v1238
        %v1712 = vsel %vm1456, %v1584, %v1242
        %v1713 = vsel %vm1457, %v1585, %v1244
        %v1714 = vsel %vm1458, %v1586, %v1248
        %v1715 = vsel %vm1459, %v1587, %v1250
        %v1716 = vsel %vm1460, %v1588, %v1254
        %v1717 = vsel %vm1461, %v1589, %v1256
        %v1718 = vsel %vm1462, %v1590, %v1260
        %v1719 = vsel %vm1463, %v1591, %v1262
        %v1720 = vsel %vm1464, %v1592, %v1266
        %v1721 = vsel %vm1465, %v1593, %v1268
        %v1722 = vsel %vm1466, %v1594, %v1272
        %v1723 = vsel %vm1467, %v1595, %v1274
        %v1724 = vsel %vm1468, %v1596, %v1278
        %v1725 = vsel %vm1469, %v1597, %v1280
        %v1726 = vsel %vm1470, %v1598, %v1284
        %v1727 = vsel %vm1471, %v1599, %v1286
        %v1728 = vsel %vm1472, %v1600, %v1290
        %v1729 = vsel %vm1473, %v1601, %v1292
        %v1730 = vsel %vm1474, %v1602, %v1296
        %v1731 = vsel %vm1475, %v1603, %v1298
        %v1732 = vsel %vm1476, %v1604, %v1302
        %v1733 = vsel %vm1477, %v1605, %v1304
        %v1734 = vsel %vm1478, %v1606, %v1308
        %v1735 = vsel %vm1479, %v1607, %v1310
        %v1736 = vsel %vm1480, %v1608, %v1314
        %v1737 = vsel %vm1481, %v1609, %v1316
        %v1738 = vsel %vm1482, %v1610, %v1320
        %v1739 = vsel %vm1483, %v1611, %v1322
        %v1740 = vsel %vm1484, %v1612, %v1326
        %v1741 = vsel %vm1485, %v1613, %v1328
        %v1742 = vsel %vm1486, %v1614, %v1332
        %v1743 = vsel %vm1487, %v1615, %v1334
        %v1744 = vsel %vm1488, %v1616, %v1338
        %v1745 = vsel %vm1489, %v1617, %v1340
        %v1746 = vsel %vm1490, %v1618, %v1344
        %v1747 = vsel %vm1491, %v1619, %v1346
        %v1748 = vsel %vm1492, %v1620, %v1350
        %v1749 = vsel %vm1493, %v1621, %v1352
        %v1750 = vsel %vm1494, %v1622, %v1356
        %v1751 = vsel %vm1495, %v1623, %v1358
        %v1752 = vsel %vm1496, %v1624, %v1362
        %v1753 = vsel %vm1497, %v1625, %v1364
        %v1754 = vsel %vm1498, %v1626, %v1368
        %v1755 = vsel %vm1499, %v1627, %v1370
        %v1756 = vmul.f32 %v1628, 1.442695
        %v1757 = vpow.pop %v1756
        %v1758 = vmul.f32 %v1629, 1.442695
        %v1759 = vpow.pop %v1758
        %v1760 = vmul.f32 %v1630, 1.442695
        %v1761 = vpow.pop %v1760
        %v1762 = vmul.f32 %v1631, 1.442695
        %v1763 = vpow.pop %v1762
        %v1764 = vmul.f32 %v1632, 1.442695
        %v1765 = vpow.pop %v1764
        %v1766 = vmul.f32 %v1633, 1.442695
        %v1767 = vpow.pop %v1766
        %v1768 = vmul.f32 %v1634, 1.442695
        %v1769 = vpow.pop %v1768
        %v1770 = vmul.f32 %v1635, 1.442695
        %v1771 = vpow.pop %v1770
        %v1772 = vmul.f32 %v1636, 1.442695
        %v1773 = vpow.pop %v1772
        %v1774 = vmul.f32 %v1637, 1.442695
        %v1775 = vpow.pop %v1774
        %v1776 = vmul.f32 %v1638, 1.442695
        %v1777 = vpow.pop %v1776
        %v1778 = vmul.f32 %v1639, 1.442695
        %v1779 = vpow.pop %v1778
        %v1780 = vmul.f32 %v1640, 1.442695
        %v1781 = vpow.pop %v1780
        %v1782 = vmul.f32 %v1641, 1.442695
        %v1783 = vpow.pop %v1782
        %v1784 = vmul.f32 %v1642, 1.442695
        %v1785 = vpow.pop %v1784
        %v1786 = vmul.f32 %v1643, 1.442695
        %v1787 = vpow.pop %v1786
        %v1788 = vmul.f32 %v1644, 1.442695
        %v1789 = vpow.pop %v1788
        %v1790 = vmul.f32 %v1645, 1.442695
        %v1791 = vpow.pop %v1790
        %v1792 = vmul.f32 %v1646, 1.442695
        %v1793 = vpow.pop %v1792
        %v1794 = vmul.f32 %v1647, 1.442695
        %v1795 = vpow.pop %v1794
        %v1796 = vmul.f32 %v1648, 1.442695
        %v1797 = vpow.pop %v1796
        %v1798 = vmul.f32 %v1649, 1.442695
        %v1799 = vpow.pop %v1798
        %v1800 = vmul.f32 %v1650, 1.442695
        %v1801 = vpow.pop %v1800
        %v1802 = vmul.f32 %v1651, 1.442695
        %v1803 = vpow.pop %v1802
        %v1804 = vmul.f32 %v1652, 1.442695
        %v1805 = vpow.pop %v1804
        %v1806 = vmul.f32 %v1653, 1.442695
        %v1807 = vpow.pop %v1806
        %v1808 = vmul.f32 %v1654, 1.442695
        %v1809 = vpow.pop %v1808
        %v1810 = vmul.f32 %v1655, 1.442695
        %v1811 = vpow.pop %v1810
        %v1812 = vmul.f32 %v1656, 1.442695
        %v1813 = vpow.pop %v1812
        %v1814 = vmul.f32 %v1657, 1.442695
        %v1815 = vpow.pop %v1814
        %v1816 = vmul.f32 %v1658, 1.442695
        %v1817 = vpow.pop %v1816
        %v1818 = vmul.f32 %v1659, 1.442695
        %v1819 = vpow.pop %v1818
        %v1820 = vmul.f32 %v1660, 1.442695
        %v1821 = vpow.pop %v1820
        %v1822 = vmul.f32 %v1661, 1.442695
        %v1823 = vpow.pop %v1822
        %v1824 = vmul.f32 %v1662, 1.442695
        %v1825 = vpow.pop %v1824
        %v1826 = vmul.f32 %v1663, 1.442695
        %v1827 = vpow.pop %v1826
        %v1828 = vmul.f32 %v1664, 1.442695
        %v1829 = vpow.pop %v1828
        %v1830 = vmul.f32 %v1665, 1.442695
        %v1831 = vpow.pop %v1830
        %v1832 = vmul.f32 %v1666, 1.442695
        %v1833 = vpow.pop %v1832
        %v1834 = vmul.f32 %v1667, 1.442695
        %v1835 = vpow.pop %v1834
        %v1836 = vmul.f32 %v1668, 1.442695
        %v1837 = vpow.pop %v1836
        %v1838 = vmul.f32 %v1669, 1.442695
        %v1839 = vpow.pop %v1838
        %v1840 = vmul.f32 %v1670, 1.442695
        %v1841 = vpow.pop %v1840
        %v1842 = vmul.f32 %v1671, 1.442695
        %v1843 = vpow.pop %v1842
        %v1844 = vmul.f32 %v1672, 1.442695
        %v1845 = vpow.pop %v1844
        %v1846 = vmul.f32 %v1673, 1.442695
        %v1847 = vpow.pop %v1846
        %v1848 = vmul.f32 %v1674, 1.442695
        %v1849 = vpow.pop %v1848
        %v1850 = vmul.f32 %v1675, 1.442695
        %v1851 = vpow.pop %v1850
        %v1852 = vmul.f32 %v1676, 1.442695
        %v1853 = vpow.pop %v1852
        %v1854 = vmul.f32 %v1677, 1.442695
        %v1855 = vpow.pop %v1854
        %v1856 = vmul.f32 %v1678, 1.442695
        %v1857 = vpow.pop %v1856
        %v1858 = vmul.f32 %v1679, 1.442695
        %v1859 = vpow.pop %v1858
        %v1860 = vmul.f32 %v1680, 1.442695
        %v1861 = vpow.pop %v1860
        %v1862 = vmul.f32 %v1681, 1.442695
        %v1863 = vpow.pop %v1862
        %v1864 = vmul.f32 %v1682, 1.442695
        %v1865 = vpow.pop %v1864
        %v1866 = vmul.f32 %v1683, 1.442695
        %v1867 = vpow.pop %v1866
        %v1868 = vmul.f32 %v1684, 1.442695
        %v1869 = vpow.pop %v1868
        %v1870 = vmul.f32 %v1685, 1.442695
        %v1871 = vpow.pop %v1870
        %v1872 = vmul.f32 %v1686, 1.442695
        %v1873 = vpow.pop %v1872
        %v1874 = vmul.f32 %v1687, 1.442695
        %v1875 = vpow.pop %v1874
        %v1876 = vmul.f32 %v1688, 1.442695
        %v1877 = vpow.pop %v1876
        %v1878 = vmul.f32 %v1689, 1.442695
        %v1879 = vpow.pop %v1878
        %v1880 = vmul.f32 %v1690, 1.442695
        %v1881 = vpow.pop %v1880
        %v1882 = vmul.f32 %v1691, 1.442695
        %v1883 = vpow.pop %v1882
        %v1884 = vmul.f32 %v1692, 1.442695
        %v1885 = vpow.pop %v1884
        %v1886 = vmul.f32 %v1693, 1.442695
        %v1887 = vpow.pop %v1886
        %v1888 = vmul.f32 %v1694, 1.442695
        %v1889 = vpow.pop %v1888
        %v1890 = vmul.f32 %v1695, 1.442695
        %v1891 = vpow.pop %v1890
        %v1892 = vmul.f32 %v1696, 1.442695
        %v1893 = vpow.pop %v1892
        %v1894 = vmul.f32 %v1697, 1.442695
        %v1895 = vpow.pop %v1894
        %v1896 = vmul.f32 %v1698, 1.442695
        %v1897 = vpow.pop %v1896
        %v1898 = vmul.f32 %v1699, 1.442695
        %v1899 = vpow.pop %v1898
        %v1900 = vmul.f32 %v1700, 1.442695
        %v1901 = vpow.pop %v1900
        %v1902 = vmul.f32 %v1701, 1.442695
        %v1903 = vpow.pop %v1902
        %v1904 = vmul.f32 %v1702, 1.442695
        %v1905 = vpow.pop %v1904
        %v1906 = vmul.f32 %v1703, 1.442695
        %v1907 = vpow.pop %v1906
        %v1908 = vmul.f32 %v1704, 1.442695
        %v1909 = vpow.pop %v1908
        %v1910 = vmul.f32 %v1705, 1.442695
        %v1911 = vpow.pop %v1910
        %v1912 = vmul.f32 %v1706, 1.442695
        %v1913 = vpow.pop %v1912
        %v1914 = vmul.f32 %v1707, 1.442695
        %v1915 = vpow.pop %v1914
        %v1916 = vmul.f32 %v1708, 1.442695
        %v1917 = vpow.pop %v1916
        %v1918 = vmul.f32 %v1709, 1.442695
        %v1919 = vpow.pop %v1918
        %v1920 = vmul.f32 %v1710, 1.442695
        %v1921 = vpow.pop %v1920
        %v1922 = vmul.f32 %v1711, 1.442695
        %v1923 = vpow.pop %v1922
        %v1924 = vmul.f32 %v1712, 1.442695
        %v1925 = vpow.pop %v1924
        %v1926 = vmul.f32 %v1713, 1.442695
        %v1927 = vpow.pop %v1926
        %v1928 = vmul.f32 %v1714, 1.442695
        %v1929 = vpow.pop %v1928
        %v1930 = vmul.f32 %v1715, 1.442695
        %v1931 = vpow.pop %v1930
        %v1932 = vmul.f32 %v1716, 1.442695
        %v1933 = vpow.pop %v1932
        %v1934 = vmul.f32 %v1717, 1.442695
        %v1935 = vpow.pop %v1934
        %v1936 = vmul.f32 %v1718, 1.442695
        %v1937 = vpow.pop %v1936
        %v1938 = vmul.f32 %v1719, 1.442695
        %v1939 = vpow.pop %v1938
        %v1940 = vmul.f32 %v1720, 1.442695
        %v1941 = vpow.pop %v1940
        %v1942 = vmul.f32 %v1721, 1.442695
        %v1943 = vpow.pop %v1942
        %v1944 = vmul.f32 %v1722, 1.442695
        %v1945 = vpow.pop %v1944
        %v1946 = vmul.f32 %v1723, 1.442695
        %v1947 = vpow.pop %v1946
        %v1948 = vmul.f32 %v1724, 1.442695
        %v1949 = vpow.pop %v1948
        %v1950 = vmul.f32 %v1725, 1.442695
        %v1951 = vpow.pop %v1950
        %v1952 = vmul.f32 %v1726, 1.442695
        %v1953 = vpow.pop %v1952
        %v1954 = vmul.f32 %v1727, 1.442695
        %v1955 = vpow.pop %v1954
        %v1956 = vmul.f32 %v1728, 1.442695
        %v1957 = vpow.pop %v1956
        %v1958 = vmul.f32 %v1729, 1.442695
        %v1959 = vpow.pop %v1958
        %v1960 = vmul.f32 %v1730, 1.442695
        %v1961 = vpow.pop %v1960
        %v1962 = vmul.f32 %v1731, 1.442695
        %v1963 = vpow.pop %v1962
        %v1964 = vmul.f32 %v1732, 1.442695
        %v1965 = vpow.pop %v1964
        %v1966 = vmul.f32 %v1733, 1.442695
        %v1967 = vpow.pop %v1966
        %v1968 = vmul.f32 %v1734, 1.442695
        %v1969 = vpow.pop %v1968
        %v1970 = vmul.f32 %v1735, 1.442695
        %v1971 = vpow.pop %v1970
        %v1972 = vmul.f32 %v1736, 1.442695
        %v1973 = vpow.pop %v1972
        %v1974 = vmul.f32 %v1737, 1.442695
        %v1975 = vpow.pop %v1974
        %v1976 = vmul.f32 %v1738, 1.442695
        %v1977 = vpow.pop %v1976
        %v1978 = vmul.f32 %v1739, 1.442695
        %v1979 = vpow.pop %v1978
        %v1980 = vmul.f32 %v1740, 1.442695
        %v1981 = vpow.pop %v1980
        %v1982 = vmul.f32 %v1741, 1.442695
        %v1983 = vpow.pop %v1982
        %v1984 = vmul.f32 %v1742, 1.442695
        %v1985 = vpow.pop %v1984
        %v1986 = vmul.f32 %v1743, 1.442695
        %v1987 = vpow.pop %v1986
        %v1988 = vmul.f32 %v1744, 1.442695
        %v1989 = vpow.pop %v1988
        %v1990 = vmul.f32 %v1745, 1.442695
        %v1991 = vpow.pop %v1990
        %v1992 = vmul.f32 %v1746, 1.442695
        %v1993 = vpow.pop %v1992
        %v1994 = vmul.f32 %v1747, 1.442695
        %v1995 = vpow.pop %v1994
        %v1996 = vmul.f32 %v1748, 1.442695
        %v1997 = vpow.pop %v1996
        %v1998 = vmul.f32 %v1749, 1.442695
        %v1999 = vpow.pop %v1998
        %v2000 = vmul.f32 %v1750, 1.442695
        %v2001 = vpow.pop %v2000
        %v2002 = vmul.f32 %v1751, 1.442695
        %v2003 = vpow.pop %v2002
        %v2004 = vmul.f32 %v1752, 1.442695
        %v2005 = vpow.pop %v2004
        %v2006 = vmul.f32 %v1753, 1.442695
        %v2007 = vpow.pop %v2006
        %v2008 = vmul.f32 %v1754, 1.442695
        %v2009 = vpow.pop %v2008
        %v2010 = vmul.f32 %v1755, 1.442695
        %v2011 = vpow.pop %v2010
        %v2012 = vsel %vm1372, 1.0, %v1757
        %v2013 = vsel %vm1373, 1.0, %v1759
        %v2014 = vsel %vm1374, 1.0, %v1761
        %v2015 = vsel %vm1375, 1.0, %v1763
        %v2016 = vsel %vm1376, 1.0, %v1765
        %v2017 = vsel %vm1377, 1.0, %v1767
        %v2018 = vsel %vm1378, 1.0, %v1769
        %v2019 = vsel %vm1379, 1.0, %v1771
        %v2020 = vsel %vm1380, 1.0, %v1773
        %v2021 = vsel %vm1381, 1.0, %v1775
        %v2022 = vsel %vm1382, 1.0, %v1777
        %v2023 = vsel %vm1383, 1.0, %v1779
        %v2024 = vsel %vm1384, 1.0, %v1781
        %v2025 = vsel %vm1385, 1.0, %v1783
        %v2026 = vsel %vm1386, 1.0, %v1785
        %v2027 = vsel %vm1387, 1.0, %v1787
        %v2028 = vsel %vm1388, 1.0, %v1789
        %v2029 = vsel %vm1389, 1.0, %v1791
        %v2030 = vsel %vm1390, 1.0, %v1793
        %v2031 = vsel %vm1391, 1.0, %v1795
        %v2032 = vsel %vm1392, 1.0, %v1797
        %v2033 = vsel %vm1393, 1.0, %v1799
        %v2034 = vsel %vm1394, 1.0, %v1801
        %v2035 = vsel %vm1395, 1.0, %v1803
        %v2036 = vsel %vm1396, 1.0, %v1805
        %v2037 = vsel %vm1397, 1.0, %v1807
        %v2038 = vsel %vm1398, 1.0, %v1809
        %v2039 = vsel %vm1399, 1.0, %v1811
        %v2040 = vsel %vm1400, 1.0, %v1813
        %v2041 = vsel %vm1401, 1.0, %v1815
        %v2042 = vsel %vm1402, 1.0, %v1817
        %v2043 = vsel %vm1403, 1.0, %v1819
        %v2044 = vsel %vm1404, 1.0, %v1821
        %v2045 = vsel %vm1405, 1.0, %v1823
        %v2046 = vsel %vm1406, 1.0, %v1825
        %v2047 = vsel %vm1407, 1.0, %v1827
        %v2048 = vsel %vm1408, 1.0, %v1829
        %v2049 = vsel %vm1409, 1.0, %v1831
        %v2050 = vsel %vm1410, 1.0, %v1833
        %v2051 = vsel %vm1411, 1.0, %v1835
        %v2052 = vsel %vm1412, 1.0, %v1837
        %v2053 = vsel %vm1413, 1.0, %v1839
        %v2054 = vsel %vm1414, 1.0, %v1841
        %v2055 = vsel %vm1415, 1.0, %v1843
        %v2056 = vsel %vm1416, 1.0, %v1845
        %v2057 = vsel %vm1417, 1.0, %v1847
        %v2058 = vsel %vm1418, 1.0, %v1849
        %v2059 = vsel %vm1419, 1.0, %v1851
        %v2060 = vsel %vm1420, 1.0, %v1853
        %v2061 = vsel %vm1421, 1.0, %v1855
        %v2062 = vsel %vm1422, 1.0, %v1857
        %v2063 = vsel %vm1423, 1.0, %v1859
        %v2064 = vsel %vm1424, 1.0, %v1861
        %v2065 = vsel %vm1425, 1.0, %v1863
        %v2066 = vsel %vm1426, 1.0, %v1865
        %v2067 = vsel %vm1427, 1.0, %v1867
        %v2068 = vsel %vm1428, 1.0, %v1869
        %v2069 = vsel %vm1429, 1.0, %v1871
        %v2070 = vsel %vm1430, 1.0, %v1873
        %v2071 = vsel %vm1431, 1.0, %v1875
        %v2072 = vsel %vm1432, 1.0, %v1877
        %v2073 = vsel %vm1433, 1.0, %v1879
        %v2074 = vsel %vm1434, 1.0, %v1881
        %v2075 = vsel %vm1435, 1.0, %v1883
        %v2076 = vsel %vm1436, 1.0, %v1885
        %v2077 = vsel %vm1437, 1.0, %v1887
        %v2078 = vsel %vm1438, 1.0, %v1889
        %v2079 = vsel %vm1439, 1.0, %v1891
        %v2080 = vsel %vm1440, 1.0, %v1893
        %v2081 = vsel %vm1441, 1.0, %v1895
        %v2082 = vsel %vm1442, 1.0, %v1897
        %v2083 = vsel %vm1443, 1.0, %v1899
        %v2084 = vsel %vm1444, 1.0, %v1901
        %v2085 = vsel %vm1445, 1.0, %v1903
        %v2086 = vsel %vm1446, 1.0, %v1905
        %v2087 = vsel %vm1447, 1.0, %v1907
        %v2088 = vsel %vm1448, 1.0, %v1909
        %v2089 = vsel %vm1449, 1.0, %v1911
        %v2090 = vsel %vm1450, 1.0, %v1913
        %v2091 = vsel %vm1451, 1.0, %v1915
        %v2092 = vsel %vm1452, 1.0, %v1917
        %v2093 = vsel %vm1453, 1.0, %v1919
        %v2094 = vsel %vm1454, 1.0, %v1921
        %v2095 = vsel %vm1455, 1.0, %v1923
        %v2096 = vsel %vm1456, 1.0, %v1925
        %v2097 = vsel %vm1457, 1.0, %v1927
        %v2098 = vsel %vm1458, 1.0, %v1929
        %v2099 = vsel %vm1459, 1.0, %v1931
        %v2100 = vsel %vm1460, 1.0, %v1933
        %v2101 = vsel %vm1461, 1.0, %v1935
        %v2102 = vsel %vm1462, 1.0, %v1937
        %v2103 = vsel %vm1463, 1.0, %v1939
        %v2104 = vsel %vm1464, 1.0, %v1941
        %v2105 = vsel %vm1465, 1.0, %v1943
        %v2106 = vsel %vm1466, 1.0, %v1945
        %v2107 = vsel %vm1467, 1.0, %v1947
        %v2108 = vsel %vm1468, 1.0, %v1949
        %v2109 = vsel %vm1469, 1.0, %v1951
        %v2110 = vsel %vm1470, 1.0, %v1953
        %v2111 = vsel %vm1471, 1.0, %v1955
        %v2112 = vsel %vm1472, 1.0, %v1957
        %v2113 = vsel %vm1473, 1.0, %v1959
        %v2114 = vsel %vm1474, 1.0, %v1961
        %v2115 = vsel %vm1475, 1.0, %v1963
        %v2116 = vsel %vm1476, 1.0, %v1965
        %v2117 = vsel %vm1477, 1.0, %v1967
        %v2118 = vsel %vm1478, 1.0, %v1969
        %v2119 = vsel %vm1479, 1.0, %v1971
        %v2120 = vsel %vm1480, 1.0, %v1973
        %v2121 = vsel %vm1481, 1.0, %v1975
        %v2122 = vsel %vm1482, 1.0, %v1977
        %v2123 = vsel %vm1483, 1.0, %v1979
        %v2124 = vsel %vm1484, 1.0, %v1981
        %v2125 = vsel %vm1485, 1.0, %v1983
        %v2126 = vsel %vm1486, 1.0, %v1985
        %v2127 = vsel %vm1487, 1.0, %v1987
        %v2128 = vsel %vm1488, 1.0, %v1989
        %v2129 = vsel %vm1489, 1.0, %v1991
        %v2130 = vsel %vm1490, 1.0, %v1993
        %v2131 = vsel %vm1491, 1.0, %v1995
        %v2132 = vsel %vm1492, 1.0, %v1997
        %v2133 = vsel %vm1493, 1.0, %v1999
        %v2134 = vsel %vm1494, 1.0, %v2001
        %v2135 = vsel %vm1495, 1.0, %v2003
        %v2136 = vsel %vm1496, 1.0, %v2005
        %v2137 = vsel %vm1497, 1.0, %v2007
        %v2138 = vsel %vm1498, 1.0, %v2009
        %v2139 = vsel %vm1499, 1.0, %v2011
        %v2140 = vadd.f32 %v1757, 1.0
        %v2141 = vadd.f32 %v1759, 1.0
        %v2142 = vadd.f32 %v1761, 1.0
        %v2143 = vadd.f32 %v1763, 1.0
        %v2144 = vadd.f32 %v1765, 1.0
        %v2145 = vadd.f32 %v1767, 1.0
        %v2146 = vadd.f32 %v1769, 1.0
        %v2147 = vadd.f32 %v1771, 1.0
        %v2148 = vadd.f32 %v1773, 1.0
        %v2149 = vadd.f32 %v1775, 1.0
        %v2150 = vadd.f32 %v1777, 1.0
        %v2151 = vadd.f32 %v1779, 1.0
        %v2152 = vadd.f32 %v1781, 1.0
        %v2153 = vadd.f32 %v1783, 1.0
        %v2154 = vadd.f32 %v1785, 1.0
        %v2155 = vadd.f32 %v1787, 1.0
        %v2156 = vadd.f32 %v1789, 1.0
        %v2157 = vadd.f32 %v1791, 1.0
        %v2158 = vadd.f32 %v1793, 1.0
        %v2159 = vadd.f32 %v1795, 1.0
        %v2160 = vadd.f32 %v1797, 1.0
        %v2161 = vadd.f32 %v1799, 1.0
        %v2162 = vadd.f32 %v1801, 1.0
        %v2163 = vadd.f32 %v1803, 1.0
        %v2164 = vadd.f32 %v1805, 1.0
        %v2165 = vadd.f32 %v1807, 1.0
        %v2166 = vadd.f32 %v1809, 1.0
        %v2167 = vadd.f32 %v1811, 1.0
        %v2168 = vadd.f32 %v1813, 1.0
        %v2169 = vadd.f32 %v1815, 1.0
        %v2170 = vadd.f32 %v1817, 1.0
        %v2171 = vadd.f32 %v1819, 1.0
        %v2172 = vadd.f32 %v1821, 1.0
        %v2173 = vadd.f32 %v1823, 1.0
        %v2174 = vadd.f32 %v1825, 1.0
        %v2175 = vadd.f32 %v1827, 1.0
        %v2176 = vadd.f32 %v1829, 1.0
        %v2177 = vadd.f32 %v1831, 1.0
        %v2178 = vadd.f32 %v1833, 1.0
        %v2179 = vadd.f32 %v1835, 1.0
        %v2180 = vadd.f32 %v1837, 1.0
        %v2181 = vadd.f32 %v1839, 1.0
        %v2182 = vadd.f32 %v1841, 1.0
        %v2183 = vadd.f32 %v1843, 1.0
        %v2184 = vadd.f32 %v1845, 1.0
        %v2185 = vadd.f32 %v1847, 1.0
        %v2186 = vadd.f32 %v1849, 1.0
        %v2187 = vadd.f32 %v1851, 1.0
        %v2188 = vadd.f32 %v1853, 1.0
        %v2189 = vadd.f32 %v1855, 1.0
        %v2190 = vadd.f32 %v1857, 1.0
        %v2191 = vadd.f32 %v1859, 1.0
        %v2192 = vadd.f32 %v1861, 1.0
        %v2193 = vadd.f32 %v1863, 1.0
        %v2194 = vadd.f32 %v1865, 1.0
        %v2195 = vadd.f32 %v1867, 1.0
        %v2196 = vadd.f32 %v1869, 1.0
        %v2197 = vadd.f32 %v1871, 1.0
        %v2198 = vadd.f32 %v1873, 1.0
        %v2199 = vadd.f32 %v1875, 1.0
        %v2200 = vadd.f32 %v1877, 1.0
        %v2201 = vadd.f32 %v1879, 1.0
        %v2202 = vadd.f32 %v1881, 1.0
        %v2203 = vadd.f32 %v1883, 1.0
        %v2204 = vadd.f32 %v1885, 1.0
        %v2205 = vadd.f32 %v1887, 1.0
        %v2206 = vadd.f32 %v1889, 1.0
        %v2207 = vadd.f32 %v1891, 1.0
        %v2208 = vadd.f32 %v1893, 1.0
        %v2209 = vadd.f32 %v1895, 1.0
        %v2210 = vadd.f32 %v1897, 1.0
        %v2211 = vadd.f32 %v1899, 1.0
        %v2212 = vadd.f32 %v1901, 1.0
        %v2213 = vadd.f32 %v1903, 1.0
        %v2214 = vadd.f32 %v1905, 1.0
        %v2215 = vadd.f32 %v1907, 1.0
        %v2216 = vadd.f32 %v1909, 1.0
        %v2217 = vadd.f32 %v1911, 1.0
        %v2218 = vadd.f32 %v1913, 1.0
        %v2219 = vadd.f32 %v1915, 1.0
        %v2220 = vadd.f32 %v1917, 1.0
        %v2221 = vadd.f32 %v1919, 1.0
        %v2222 = vadd.f32 %v1921, 1.0
        %v2223 = vadd.f32 %v1923, 1.0
        %v2224 = vadd.f32 %v1925, 1.0
        %v2225 = vadd.f32 %v1927, 1.0
        %v2226 = vadd.f32 %v1929, 1.0
        %v2227 = vadd.f32 %v1931, 1.0
        %v2228 = vadd.f32 %v1933, 1.0
        %v2229 = vadd.f32 %v1935, 1.0
        %v2230 = vadd.f32 %v1937, 1.0
        %v2231 = vadd.f32 %v1939, 1.0
        %v2232 = vadd.f32 %v1941, 1.0
        %v2233 = vadd.f32 %v1943, 1.0
        %v2234 = vadd.f32 %v1945, 1.0
        %v2235 = vadd.f32 %v1947, 1.0
        %v2236 = vadd.f32 %v1949, 1.0
        %v2237 = vadd.f32 %v1951, 1.0
        %v2238 = vadd.f32 %v1953, 1.0
        %v2239 = vadd.f32 %v1955, 1.0
        %v2240 = vadd.f32 %v1957, 1.0
        %v2241 = vadd.f32 %v1959, 1.0
        %v2242 = vadd.f32 %v1961, 1.0
        %v2243 = vadd.f32 %v1963, 1.0
        %v2244 = vadd.f32 %v1965, 1.0
        %v2245 = vadd.f32 %v1967, 1.0
        %v2246 = vadd.f32 %v1969, 1.0
        %v2247 = vadd.f32 %v1971, 1.0
        %v2248 = vadd.f32 %v1973, 1.0
        %v2249 = vadd.f32 %v1975, 1.0
        %v2250 = vadd.f32 %v1977, 1.0
        %v2251 = vadd.f32 %v1979, 1.0
        %v2252 = vadd.f32 %v1981, 1.0
        %v2253 = vadd.f32 %v1983, 1.0
        %v2254 = vadd.f32 %v1985, 1.0
        %v2255 = vadd.f32 %v1987, 1.0
        %v2256 = vadd.f32 %v1989, 1.0
        %v2257 = vadd.f32 %v1991, 1.0
        %v2258 = vadd.f32 %v1993, 1.0
        %v2259 = vadd.f32 %v1995, 1.0
        %v2260 = vadd.f32 %v1997, 1.0
        %v2261 = vadd.f32 %v1999, 1.0
        %v2262 = vadd.f32 %v2001, 1.0
        %v2263 = vadd.f32 %v2003, 1.0
        %v2264 = vadd.f32 %v2005, 1.0
        %v2265 = vadd.f32 %v2007, 1.0
        %v2266 = vadd.f32 %v2009, 1.0
        %v2267 = vadd.f32 %v2011, 1.0
        %v2268 = vrcp.pop %v2140
        %v2269 = vmul.f32 %v2012, %v2268
        %v2270 = vrcp.pop %v2141
        %v2271 = vmul.f32 %v2013, %v2270
        %v2272 = vrcp.pop %v2142
        %v2273 = vmul.f32 %v2014, %v2272
        %v2274 = vrcp.pop %v2143
        %v2275 = vmul.f32 %v2015, %v2274
        %v2276 = vrcp.pop %v2144
        %v2277 = vmul.f32 %v2016, %v2276
        %v2278 = vrcp.pop %v2145
        %v2279 = vmul.f32 %v2017, %v2278
        %v2280 = vrcp.pop %v2146
        %v2281 = vmul.f32 %v2018, %v2280
        %v2282 = vrcp.pop %v2147
        %v2283 = vmul.f32 %v2019, %v2282
        %v2284 = vrcp.pop %v2148
        %v2285 = vmul.f32 %v2020, %v2284
        %v2286 = vrcp.pop %v2149
        %v2287 = vmul.f32 %v2021, %v2286
        %v2288 = vrcp.pop %v2150
        %v2289 = vmul.f32 %v2022, %v2288
        %v2290 = vrcp.pop %v2151
        %v2291 = vmul.f32 %v2023, %v2290
        %v2292 = vrcp.pop %v2152
        %v2293 = vmul.f32 %v2024, %v2292
        %v2294 = vrcp.pop %v2153
        %v2295 = vmul.f32 %v2025, %v2294
        %v2296 = vrcp.pop %v2154
        %v2297 = vmul.f32 %v2026, %v2296
        %v2298 = vrcp.pop %v2155
        %v2299 = vmul.f32 %v2027, %v2298
        %v2300 = vrcp.pop %v2156
        %v2301 = vmul.f32 %v2028, %v2300
        %v2302 = vrcp.pop %v2157
        %v2303 = vmul.f32 %v2029, %v2302
        %v2304 = vrcp.pop %v2158
        %v2305 = vmul.f32 %v2030, %v2304
        %v2306 = vrcp.pop %v2159
        %v2307 = vmul.f32 %v2031, %v2306
        %v2308 = vrcp.pop %v2160
        %v2309 = vmul.f32 %v2032, %v2308
        %v2310 = vrcp.pop %v2161
        %v2311 = vmul.f32 %v2033, %v2310
        %v2312 = vrcp.pop %v2162
        %v2313 = vmul.f32 %v2034, %v2312
        %v2314 = vrcp.pop %v2163
        %v2315 = vmul.f32 %v2035, %v2314
        %v2316 = vrcp.pop %v2164
        %v2317 = vmul.f32 %v2036, %v2316
        %v2318 = vrcp.pop %v2165
        %v2319 = vmul.f32 %v2037, %v2318
        %v2320 = vrcp.pop %v2166
        %v2321 = vmul.f32 %v2038, %v2320
        %v2322 = vrcp.pop %v2167
        %v2323 = vmul.f32 %v2039, %v2322
        %v2324 = vrcp.pop %v2168
        %v2325 = vmul.f32 %v2040, %v2324
        %v2326 = vrcp.pop %v2169
        %v2327 = vmul.f32 %v2041, %v2326
        %v2328 = vrcp.pop %v2170
        %v2329 = vmul.f32 %v2042, %v2328
        %v2330 = vrcp.pop %v2171
        %v2331 = vmul.f32 %v2043, %v2330
        %v2332 = vrcp.pop %v2172
        %v2333 = vmul.f32 %v2044, %v2332
        %v2334 = vrcp.pop %v2173
        %v2335 = vmul.f32 %v2045, %v2334
        %v2336 = vrcp.pop %v2174
        %v2337 = vmul.f32 %v2046, %v2336
        %v2338 = vrcp.pop %v2175
        %v2339 = vmul.f32 %v2047, %v2338
        %v2340 = vrcp.pop %v2176
        %v2341 = vmul.f32 %v2048, %v2340
        %v2342 = vrcp.pop %v2177
        %v2343 = vmul.f32 %v2049, %v2342
        %v2344 = vrcp.pop %v2178
        %v2345 = vmul.f32 %v2050, %v2344
        %v2346 = vrcp.pop %v2179
        %v2347 = vmul.f32 %v2051, %v2346
        %v2348 = vrcp.pop %v2180
        %v2349 = vmul.f32 %v2052, %v2348
        %v2350 = vrcp.pop %v2181
        %v2351 = vmul.f32 %v2053, %v2350
        %v2352 = vrcp.pop %v2182
        %v2353 = vmul.f32 %v2054, %v2352
        %v2354 = vrcp.pop %v2183
        %v2355 = vmul.f32 %v2055, %v2354
        %v2356 = vrcp.pop %v2184
        %v2357 = vmul.f32 %v2056, %v2356
        %v2358 = vrcp.pop %v2185
        %v2359 = vmul.f32 %v2057, %v2358
        %v2360 = vrcp.pop %v2186
        %v2361 = vmul.f32 %v2058, %v2360
        %v2362 = vrcp.pop %v2187
        %v2363 = vmul.f32 %v2059, %v2362
        %v2364 = vrcp.pop %v2188
        %v2365 = vmul.f32 %v2060, %v2364
        %v2366 = vrcp.pop %v2189
        %v2367 = vmul.f32 %v2061, %v2366
        %v2368 = vrcp.pop %v2190
        %v2369 = vmul.f32 %v2062, %v2368
        %v2370 = vrcp.pop %v2191
        %v2371 = vmul.f32 %v2063, %v2370
        %v2372 = vrcp.pop %v2192
        %v2373 = vmul.f32 %v2064, %v2372
        %v2374 = vrcp.pop %v2193
        %v2375 = vmul.f32 %v2065, %v2374
        %v2376 = vrcp.pop %v2194
        %v2377 = vmul.f32 %v2066, %v2376
        %v2378 = vrcp.pop %v2195
        %v2379 = vmul.f32 %v2067, %v2378
        %v2380 = vrcp.pop %v2196
        %v2381 = vmul.f32 %v2068, %v2380
        %v2382 = vrcp.pop %v2197
        %v2383 = vmul.f32 %v2069, %v2382
        %v2384 = vrcp.pop %v2198
        %v2385 = vmul.f32 %v2070, %v2384
        %v2386 = vrcp.pop %v2199
        %v2387 = vmul.f32 %v2071, %v2386
        %v2388 = vrcp.pop %v2200
        %v2389 = vmul.f32 %v2072, %v2388
        %v2390 = vrcp.pop %v2201
        %v2391 = vmul.f32 %v2073, %v2390
        %v2392 = vrcp.pop %v2202
        %v2393 = vmul.f32 %v2074, %v2392
        %v2394 = vrcp.pop %v2203
        %v2395 = vmul.f32 %v2075, %v2394
        %v2396 = vrcp.pop %v2204
        %v2397 = vmul.f32 %v2076, %v2396
        %v2398 = vrcp.pop %v2205
        %v2399 = vmul.f32 %v2077, %v2398
        %v2400 = vrcp.pop %v2206
        %v2401 = vmul.f32 %v2078, %v2400
        %v2402 = vrcp.pop %v2207
        %v2403 = vmul.f32 %v2079, %v2402
        %v2404 = vrcp.pop %v2208
        %v2405 = vmul.f32 %v2080, %v2404
        %v2406 = vrcp.pop %v2209
        %v2407 = vmul.f32 %v2081, %v2406
        %v2408 = vrcp.pop %v2210
        %v2409 = vmul.f32 %v2082, %v2408
        %v2410 = vrcp.pop %v2211
        %v2411 = vmul.f32 %v2083, %v2410
        %v2412 = vrcp.pop %v2212
        %v2413 = vmul.f32 %v2084, %v2412
        %v2414 = vrcp.pop %v2213
        %v2415 = vmul.f32 %v2085, %v2414
        %v2416 = vrcp.pop %v2214
        %v2417 = vmul.f32 %v2086, %v2416
        %v2418 = vrcp.pop %v2215
        %v2419 = vmul.f32 %v2087, %v2418
        %v2420 = vrcp.pop %v2216
        %v2421 = vmul.f32 %v2088, %v2420
        %v2422 = vrcp.pop %v2217
        %v2423 = vmul.f32 %v2089, %v2422
        %v2424 = vrcp.pop %v2218
        %v2425 = vmul.f32 %v2090, %v2424
        %v2426 = vrcp.pop %v2219
        %v2427 = vmul.f32 %v2091, %v2426
        %v2428 = vrcp.pop %v2220
        %v2429 = vmul.f32 %v2092, %v2428
        %v2430 = vrcp.pop %v2221
        %v2431 = vmul.f32 %v2093, %v2430
        %v2432 = vrcp.pop %v2222
        %v2433 = vmul.f32 %v2094, %v2432
        %v2434 = vrcp.pop %v2223
        %v2435 = vmul.f32 %v2095, %v2434
        %v2436 = vrcp.pop %v2224
        %v2437 = vmul.f32 %v2096, %v2436
        %v2438 = vrcp.pop %v2225
        %v2439 = vmul.f32 %v2097, %v2438
        %v2440 = vrcp.pop %v2226
        %v2441 = vmul.f32 %v2098, %v2440
        %v2442 = vrcp.pop %v2227
        %v2443 = vmul.f32 %v2099, %v2442
        %v2444 = vrcp.pop %v2228
        %v2445 = vmul.f32 %v2100, %v2444
        %v2446 = vrcp.pop %v2229
        %v2447 = vmul.f32 %v2101, %v2446
        %v2448 = vrcp.pop %v2230
        %v2449 = vmul.f32 %v2102, %v2448
        %v2450 = vrcp.pop %v2231
        %v2451 = vmul.f32 %v2103, %v2450
        %v2452 = vrcp.pop %v2232
        %v2453 = vmul.f32 %v2104, %v2452
        %v2454 = vrcp.pop %v2233
        %v2455 = vmul.f32 %v2105, %v2454
        %v2456 = vrcp.pop %v2234
        %v2457 = vmul.f32 %v2106, %v2456
        %v2458 = vrcp.pop %v2235
        %v2459 = vmul.f32 %v2107, %v2458
        %v2460 = vrcp.pop %v2236
        %v2461 = vmul.f32 %v2108, %v2460
        %v2462 = vrcp.pop %v2237
        %v2463 = vmul.f32 %v2109, %v2462
        %v2464 = vrcp.pop %v2238
        %v2465 = vmul.f32 %v2110, %v2464
        %v2466 = vrcp.pop %v2239
        %v2467 = vmul.f32 %v2111, %v2466
        %v2468 = vrcp.pop %v2240
        %v2469 = vmul.f32 %v2112, %v2468
        %v2470 = vrcp.pop %v2241
        %v2471 = vmul.f32 %v2113, %v2470
        %v2472 = vrcp.pop %v2242
        %v2473 = vmul.f32 %v2114, %v2472
        %v2474 = vrcp.pop %v2243
        %v2475 = vmul.f32 %v2115, %v2474
        %v2476 = vrcp.pop %v2244
        %v2477 = vmul.f32 %v2116, %v2476
        %v2478 = vrcp.pop %v2245
        %v2479 = vmul.f32 %v2117, %v2478
        %v2480 = vrcp.pop %v2246
        %v2481 = vmul.f32 %v2118, %v2480
        %v2482 = vrcp.pop %v2247
        %v2483 = vmul.f32 %v2119, %v2482
        %v2484 = vrcp.pop %v2248
        %v2485 = vmul.f32 %v2120, %v2484
        %v2486 = vrcp.pop %v2249
        %v2487 = vmul.f32 %v2121, %v2486
        %v2488 = vrcp.pop %v2250
        %v2489 = vmul.f32 %v2122, %v2488
        %v2490 = vrcp.pop %v2251
        %v2491 = vmul.f32 %v2123, %v2490
        %v2492 = vrcp.pop %v2252
        %v2493 = vmul.f32 %v2124, %v2492
        %v2494 = vrcp.pop %v2253
        %v2495 = vmul.f32 %v2125, %v2494
        %v2496 = vrcp.pop %v2254
        %v2497 = vmul.f32 %v2126, %v2496
        %v2498 = vrcp.pop %v2255
        %v2499 = vmul.f32 %v2127, %v2498
        %v2500 = vrcp.pop %v2256
        %v2501 = vmul.f32 %v2128, %v2500
        %v2502 = vrcp.pop %v2257
        %v2503 = vmul.f32 %v2129, %v2502
        %v2504 = vrcp.pop %v2258
        %v2505 = vmul.f32 %v2130, %v2504
        %v2506 = vrcp.pop %v2259
        %v2507 = vmul.f32 %v2131, %v2506
        %v2508 = vrcp.pop %v2260
        %v2509 = vmul.f32 %v2132, %v2508
        %v2510 = vrcp.pop %v2261
        %v2511 = vmul.f32 %v2133, %v2510
        %v2512 = vrcp.pop %v2262
        %v2513 = vmul.f32 %v2134, %v2512
        %v2514 = vrcp.pop %v2263
        %v2515 = vmul.f32 %v2135, %v2514
        %v2516 = vrcp.pop %v2264
        %v2517 = vmul.f32 %v2136, %v2516
        %v2518 = vrcp.pop %v2265
        %v2519 = vmul.f32 %v2137, %v2518
        %v2520 = vrcp.pop %v2266
        %v2521 = vmul.f32 %v2138, %v2520
        %v2522 = vrcp.pop %v2267
        %v2523 = vmul.f32 %v2139, %v2522
        %2524 = vst [vmem:[%s188] sm:$0xff] %v2269
        %2525 = vst [vmem:[%s188 + $0x8] sm:$0xff] %v2271
        %2526 = vst [vmem:[%s188 + $0x10] sm:$0xff] %v2273
        %2527 = vst [vmem:[%s188 + $0x18] sm:$0xff] %v2275
        %2528 = vst [vmem:[%s188 + $0x20] sm:$0xff] %v2277
        %2529 = vst [vmem:[%s188 + $0x28] sm:$0xff] %v2279
        %2530 = vst [vmem:[%s188 + $0x30] sm:$0xff] %v2281
        %2531 = vst [vmem:[%s188 + $0x38] sm:$0xff] %v2283
        %2532 = vst [vmem:[%s188 + $0x40] sm:$0xff] %v2285
        %2533 = vst [vmem:[%s188 + $0x48] sm:$0xff] %v2287
        %2534 = vst [vmem:[%s188 + $0x50] sm:$0xff] %v2289
        %2535 = vst [vmem:[%s188 + $0x58] sm:$0xff] %v2291
        %2536 = vst [vmem:[%s188 + $0x60] sm:$0xff] %v2293
        %2537 = vst [vmem:[%s188 + $0x68] sm:$0xff] %v2295
        %2538 = vst [vmem:[%s188 + $0x70] sm:$0xff] %v2297
        %2539 = vst [vmem:[%s188 + $0x78] sm:$0xff] %v2299
        %2540 = vst [vmem:[%s188 + $0x80] sm:$0xff] %v2301
        %2541 = vst [vmem:[%s188 + $0x88] sm:$0xff] %v2303
        %2542 = vst [vmem:[%s188 + $0x90] sm:$0xff] %v2305
        %2543 = vst [vmem:[%s188 + $0x98] sm:$0xff] %v2307
        %2544 = vst [vmem:[%s188 + $0xa0] sm:$0xff] %v2309
        %2545 = vst [vmem:[%s188 + $0xa8] sm:$0xff] %v2311
        %2546 = vst [vmem:[%s188 + $0xb0] sm:$0xff] %v2313
        %2547 = vst [vmem:[%s188 + $0xb8] sm:$0xff] %v2315
        %2548 = vst [vmem:[%s188 + $0xc0] sm:$0xff] %v2317
        %2549 = vst [vmem:[%s188 + $0xc8] sm:$0xff] %v2319
        %2550 = vst [vmem:[%s188 + $0xd0] sm:$0xff] %v2321
        %2551 = vst [vmem:[%s188 + $0xd8] sm:$0xff] %v2323
        %2552 = vst [vmem:[%s188 + $0xe0] sm:$0xff] %v2325
        %2553 = vst [vmem:[%s188 + $0xe8] sm:$0xff] %v2327
        %2554 = vst [vmem:[%s188 + $0xf0] sm:$0xff] %v2329
        %2555 = vst [vmem:[%s188 + $0xf8] sm:$0xff] %v2331
        %2556 = vst [vmem:[%s188 + $0x100] sm:$0xff] %v2333
        %2557 = vst [vmem:[%s188 + $0x108] sm:$0xff] %v2335
        %2558 = vst [vmem:[%s188 + $0x110] sm:$0xff] %v2337
        %2559 = vst [vmem:[%s188 + $0x118] sm:$0xff] %v2339
        %2560 = vst [vmem:[%s188 + $0x120] sm:$0xff] %v2341
        %2561 = vst [vmem:[%s188 + $0x128] sm:$0xff] %v2343
        %2562 = vst [vmem:[%s188 + $0x130] sm:$0xff] %v2345
        %2563 = vst [vmem:[%s188 + $0x138] sm:$0xff] %v2347
        %2564 = vst [vmem:[%s188 + $0x140] sm:$0xff] %v2349
        %2565 = vst [vmem:[%s188 + $0x148] sm:$0xff] %v2351
        %2566 = vst [vmem:[%s188 + $0x150] sm:$0xff] %v2353
        %2567 = vst [vmem:[%s188 + $0x158] sm:$0xff] %v2355
        %2568 = vst [vmem:[%s188 + $0x160] sm:$0xff] %v2357
        %2569 = vst [vmem:[%s188 + $0x168] sm:$0xff] %v2359
        %2570 = vst [vmem:[%s188 + $0x170] sm:$0xff] %v2361
        %2571 = vst [vmem:[%s188 + $0x178] sm:$0xff] %v2363
        %2572 = vst [vmem:[%s188 + $0x180] sm:$0xff] %v2365
        %2573 = vst [vmem:[%s188 + $0x188] sm:$0xff] %v2367
        %2574 = vst [vmem:[%s188 + $0x190] sm:$0xff] %v2369
        %2575 = vst [vmem:[%s188 + $0x198] sm:$0xff] %v2371
        %2576 = vst [vmem:[%s188 + $0x1a0] sm:$0xff] %v2373
        %2577 = vst [vmem:[%s188 + $0x1a8] sm:$0xff] %v2375
        %2578 = vst [vmem:[%s188 + $0x1b0] sm:$0xff] %v2377
        %2579 = vst [vmem:[%s188 + $0x1b8] sm:$0xff] %v2379
        %2580 = vst [vmem:[%s188 + $0x1c0] sm:$0xff] %v2381
        %2581 = vst [vmem:[%s188 + $0x1c8] sm:$0xff] %v2383
        %2582 = vst [vmem:[%s188 + $0x1d0] sm:$0xff] %v2385
        %2583 = vst [vmem:[%s188 + $0x1d8] sm:$0xff] %v2387
        %2584 = vst [vmem:[%s188 + $0x1e0] sm:$0xff] %v2389
        %2585 = vst [vmem:[%s188 + $0x1e8] sm:$0xff] %v2391
        %2586 = vst [vmem:[%s188 + $0x1f0] sm:$0xff] %v2393
        %2587 = vst [vmem:[%s188 + $0x1f8] sm:$0xff] %v2395
        %2588 = vst [vmem:[%s188 + $0x200] sm:$0xff] %v2397
        %2589 = vst [vmem:[%s188 + $0x208] sm:$0xff] %v2399
        %2590 = vst [vmem:[%s188 + $0x210] sm:$0xff] %v2401
        %2591 = vst [vmem:[%s188 + $0x218] sm:$0xff] %v2403
        %2592 = vst [vmem:[%s188 + $0x220] sm:$0xff] %v2405
        %2593 = vst [vmem:[%s188 + $0x228] sm:$0xff] %v2407
        %2594 = vst [vmem:[%s188 + $0x230] sm:$0xff] %v2409
        %2595 = vst [vmem:[%s188 + $0x238] sm:$0xff] %v2411
        %2596 = vst [vmem:[%s188 + $0x240] sm:$0xff] %v2413
        %2597 = vst [vmem:[%s188 + $0x248] sm:$0xff] %v2415
        %2598 = vst [vmem:[%s188 + $0x250] sm:$0xff] %v2417
        %2599 = vst [vmem:[%s188 + $0x258] sm:$0xff] %v2419
        %2600 = vst [vmem:[%s188 + $0x260] sm:$0xff] %v2421
        %2601 = vst [vmem:[%s188 + $0x268] sm:$0xff] %v2423
        %2602 = vst [vmem:[%s188 + $0x270] sm:$0xff] %v2425
        %2603 = vst [vmem:[%s188 + $0x278] sm:$0xff] %v2427
        %2604 = vst [vmem:[%s188 + $0x280] sm:$0xff] %v2429
        %2605 = vst [vmem:[%s188 + $0x288] sm:$0xff] %v2431
        %2606 = vst [vmem:[%s188 + $0x290] sm:$0xff] %v2433
        %2607 = vst [vmem:[%s188 + $0x298] sm:$0xff] %v2435
        %2608 = vst [vmem:[%s188 + $0x2a0] sm:$0xff] %v2437
        %2609 = vst [vmem:[%s188 + $0x2a8] sm:$0xff] %v2439
        %2610 = vst [vmem:[%s188 + $0x2b0] sm:$0xff] %v2441
        %2611 = vst [vmem:[%s188 + $0x2b8] sm:$0xff] %v2443
        %2612 = vst [vmem:[%s188 + $0x2c0] sm:$0xff] %v2445
        %2613 = vst [vmem:[%s188 + $0x2c8] sm:$0xff] %v2447
        %2614 = vst [vmem:[%s188 + $0x2d0] sm:$0xff] %v2449
        %2615 = vst [vmem:[%s188 + $0x2d8] sm:$0xff] %v2451
        %2616 = vst [vmem:[%s188 + $0x2e0] sm:$0xff] %v2453
        %2617 = vst [vmem:[%s188 + $0x2e8] sm:$0xff] %v2455
        %2618 = vst [vmem:[%s188 + $0x2f0] sm:$0xff] %v2457
        %2619 = vst [vmem:[%s188 + $0x2f8] sm:$0xff] %v2459
        %2620 = vst [vmem:[%s188 + $0x300] sm:$0xff] %v2461
        %2621 = vst [vmem:[%s188 + $0x308] sm:$0xff] %v2463
        %2622 = vst [vmem:[%s188 + $0x310] sm:$0xff] %v2465
        %2623 = vst [vmem:[%s188 + $0x318] sm:$0xff] %v2467
        %2624 = vst [vmem:[%s188 + $0x320] sm:$0xff] %v2469
        %2625 = vst [vmem:[%s188 + $0x328] sm:$0xff] %v2471
        %2626 = vst [vmem:[%s188 + $0x330] sm:$0xff] %v2473
        %2627 = vst [vmem:[%s188 + $0x338] sm:$0xff] %v2475
        %2628 = vst [vmem:[%s188 + $0x340] sm:$0xff] %v2477
        %2629 = vst [vmem:[%s188 + $0x348] sm:$0xff] %v2479
        %2630 = vst [vmem:[%s188 + $0x350] sm:$0xff] %v2481
        %2631 = vst [vmem:[%s188 + $0x358] sm:$0xff] %v2483
        %2632 = vst [vmem:[%s188 + $0x360] sm:$0xff] %v2485
        %2633 = vst [vmem:[%s188 + $0x368] sm:$0xff] %v2487
        %2634 = vst [vmem:[%s188 + $0x370] sm:$0xff] %v2489
        %2635 = vst [vmem:[%s188 + $0x378] sm:$0xff] %v2491
        %2636 = vst [vmem:[%s188 + $0x380] sm:$0xff] %v2493
        %2637 = vst [vmem:[%s188 + $0x388] sm:$0xff] %v2495
        %2638 = vst [vmem:[%s188 + $0x390] sm:$0xff] %v2497
        %2639 = vst [vmem:[%s188 + $0x398] sm:$0xff] %v2499
        %2640 = vst [vmem:[%s188 + $0x3a0] sm:$0xff] %v2501
        %2641 = vst [vmem:[%s188 + $0x3a8] sm:$0xff] %v2503
        %2642 = vst [vmem:[%s188 + $0x3b0] sm:$0xff] %v2505
        %2643 = vst [vmem:[%s188 + $0x3b8] sm:$0xff] %v2507
        %2644 = vst [vmem:[%s188 + $0x3c0] sm:$0xff] %v2509
        %2645 = vst [vmem:[%s188 + $0x3c8] sm:$0xff] %v2511
        %2646 = vst [vmem:[%s188 + $0x3d0] sm:$0xff] %v2513
        %2647 = vst [vmem:[%s188 + $0x3d8] sm:$0xff] %v2515
        %2648 = vst [vmem:[%s188 + $0x3e0] sm:$0xff] %v2517
        %2649 = vst [vmem:[%s188 + $0x3e8] sm:$0xff] %v2519
        %2650 = vst [vmem:[%s188 + $0x3f0] sm:$0xff] %v2521
        %2651 = vst [vmem:[%s188 + $0x3f8] sm:$0xff] %v2523
        %s2652 = sand.u32 %s109, 1
        %s2653 = scalar_lea.sflag [#allocation3], %s2652
        %s2654 = sand.u32 %s109, 1
        %s2655 = smul.addr %s2654, 1024
        %s2656 = scalar_lea.vmem [#allocation2], %s2655
        // Predicated region
        $region33: #{tpu_custom_call.1} parent=31 // pred_check
          %p2657 = pneg %p119
        $region34: #{tpu_custom_call.1} parent=31 // pred_check_branch
          %2659 = sbr.rel (%p2657) target = $region36
        $region35: #{tpu_custom_call.1} parent=31 // pred_region
          %s2660 = smul.u32 2, %s22
          %s2662 = ssub.s32 16384, 16384
          %2663 = vsyncadd %s2653, %s2662
          %s2664 = smul.addr %s21, 128
          %s2665 = sadd.s32 %s2660, %s2664
          %s2666 = smul.addr %s2665, 128
          %s2667 = scalar_lea.hbm %s3, %s2666
          %s2668 = sshll.u32 %s2656, 4
          %s2669 = int_to_ptr.vmem [resolvable:$true] %s2668
          %2674 = dma.vmem_to_hbm [thread:$0]  %s2669, 16384, %s2667, %s2653, 256, 256, 16
        $region36: #{tpu_custom_call.1} parent=31 // pred_fallthru
          _
      $region32: #{tpu_custom_call.1} parent=5 // pred_fallthru
        _
      %p2675 = scmp.le.s32.totalorder 2, %s12
      // Predicated region
      $region37: #{tpu_custom_call.1} parent=5 // pred_check
        %p2676 = pneg %p2675
      $region38: #{tpu_custom_call.1} parent=5 // pred_check_branch
        %2678 = sbr.rel (%p2676) target = $region40
      $region39: #{tpu_custom_call.1} parent=5 // pred_region
        %s2679 = ssub.s32 %s12, 2
        // Predicated region
        $region41: #{tpu_custom_call.1} parent=39 // pred_check
          %p2680 = pneg %p125
        $region42: #{tpu_custom_call.1} parent=39 // pred_check_branch
          %2682 = sbr.rel (%p2680) target = $region44
        $region43: #{tpu_custom_call.1} parent=39 // pred_region
          %s2683 = sand.u32 %s110, 1
          %s2684 = scalar_lea.sflag [#allocation3], %s2683
          %s2685 = sand.u32 %s110, 1
          %s2686 = smul.addr %s2685, 1024
          %s2687 = scalar_lea.vmem [#allocation2], %s2686
          %2688 = dma.done %s2684, 16384
        $region44: #{tpu_custom_call.1} parent=39 // pred_fallthru
          _
      $region40: #{tpu_custom_call.1} parent=5 // pred_fallthru
        _
    $region6: #{tpu_custom_call.1} parent=1 // loop_footer
      %s16 = sadd.s32 1, %s12
    $region7: #{tpu_custom_call.1} parent=1 // loop_footer_branch
      %11 = sbr.rel target = $region3
    $region8: #{tpu_custom_call.1} parent=1 // loop_exit
      _
    %2689 = vsyncpa [#allocation3], 1
    %s2690 = scalar_lea.sflag [#allocation3], 1
    %2691 = vsyncpa %s2690, 1

</llo_original>
